<compile_context>
chip_gen: v7x
topology: tpu7x:2x2x1
jax: 0.10.0
libtpu: 0.0.40
codegen_flags: <defaults>
</compile_context>

<pallas_src>
import functools

import jax
import jax.numpy as jnp
from jax.experimental import pallas as pl
from jax.experimental.pallas import tpu as pltpu


# ------------------------------ small helpers --------------------------------

def _choose_tile(m, tmax=512):
    """Largest row-tile <= tmax that divides m (multiple of 8 when tiling)."""
    if m <= tmax:
        return m
    for t in range(tmax, 7, -8):
        if m % t == 0:
            return t
    return m


def _erf_approx(x):
    # Abramowitz & Stegun 7.1.26, |error| < 1.5e-7; elementwise ops only
    # (guaranteed to lower in Mosaic; exp hits the EUP slot).
    a1, a2, a3, a4, a5 = 0.254829592, -0.284496736, 1.421413741, -1.453152027, 1.061405429
    p = 0.3275911
    s = jnp.where(x >= 0.0, 1.0, -1.0)
    ax = jnp.abs(x)
    t = 1.0 / (1.0 + p * ax)
    poly = ((((a5 * t + a4) * t + a3) * t + a2) * t + a1) * t
    return s * (1.0 - poly * jnp.exp(-ax * ax))


def _gelu_exact(x):
    # erf-based ("exact") GELU, matching HF Swin's hidden_act="gelu".
    return 0.5 * x * (1.0 + _erf_approx(x * 0.7071067811865476))


# ----------------------------- Pallas kernels --------------------------------

def _make_linear_kernel(*, ln, bias, activation, eps):
    """Fused [optional LayerNorm] -> matmul -> [optional bias] -> [optional GELU]."""

    def kernel(*refs):
        i = 0
        x_ref = refs[i]; i += 1
        if ln:
            g_ref, be_ref = refs[i], refs[i + 1]; i += 2
        w_ref = refs[i]; i += 1
        if bias:
            b_ref = refs[i]; i += 1
        o_ref = refs[i]

        x = x_ref[...].astype(jnp.float32)
        if ln:
            mu = jnp.mean(x, axis=-1, keepdims=True)
            var = jnp.mean(jnp.square(x - mu), axis=-1, keepdims=True)
            x = (x - mu) * jax.lax.rsqrt(var + eps)
            x = x * g_ref[...] + be_ref[...]
        # bf16 operands on the MXU, f32 accumulation.
        y = jnp.dot(x.astype(jnp.bfloat16), w_ref[...],
                    preferred_element_type=jnp.float32)
        if bias:
            y = y + b_ref[...]
        if activation == "gelu":
            y = _gelu_exact(y)
        o_ref[...] = y.astype(o_ref.dtype)

    return kernel


def pallas_linear(x, w, b=None, *, ln=None, activation=None, eps=1e-5, tm_max=512):
    """y = act( LN(x) @ w + b ).  LN (gamma, beta tuple), bias and act optional.

    x: [..., K], w: [K, N].  Tiled over M rows with a 'parallel' grid axis.
    """
    orig_shape = x.shape
    K = orig_shape[-1]
    N = w.shape[1]
    x2 = x.reshape(-1, K)
    M = x2.shape[0]
    tm = _choose_tile(M, tm_max)
    grid = (M // tm,)

    use_ln = ln is not None
    use_bias = b is not None

    in_arrays = [x2]
    in_specs = [pl.BlockSpec((tm, K), lambda i: (i, 0))]
    if use_ln:
        g, be = ln
        in_arrays += [g.reshape(1, K).astype(jnp.float32),
                      be.reshape(1, K).astype(jnp.float32)]
        in_specs += [pl.BlockSpec((1, K), lambda i: (0, 0)),
                     pl.BlockSpec((1, K), lambda i: (0, 0))]
    in_arrays.append(w.astype(jnp.bfloat16))          # half the weight DMA bytes
    in_specs.append(pl.BlockSpec((K, N), lambda i: (0, 0)))
    if use_bias:
        in_arrays.append(b.reshape(1, N).astype(jnp.float32))
        in_specs.append(pl.BlockSpec((1, N), lambda i: (0, 0)))

    out = pl.pallas_call(
        _make_linear_kernel(ln=use_ln, bias=use_bias, activation=activation, eps=eps),
        grid=grid,
        in_specs=in_specs,
        out_specs=pl.BlockSpec((tm, N), lambda i: (i, 0)),
        out_shape=jax.ShapeDtypeStruct((M, N), x.dtype),
        compiler_params=pltpu.CompilerParams(dimension_semantics=("parallel",)),
    )(*in_arrays)
    return out.reshape(orig_shape[:-1] + (N,))


def _layernorm_kernel(x_ref, g_ref, b_ref, o_ref, *, eps):
    x = x_ref[...].astype(jnp.float32)
    mu = jnp.mean(x, axis=-1, keepdims=True)
    var = jnp.mean(jnp.square(x - mu), axis=-1, keepdims=True)
    y = (x - mu) * jax.lax.rsqrt(var + eps)
    o_ref[...] = (y * g_ref[...] + b_ref[...]).astype(o_ref.dtype)


def pallas_layernorm(x, gamma, beta, eps=1e-5, tm_max=512):
    orig_shape = x.shape
    C = orig_shape[-1]
    x2 = x.reshape(-1, C)
    M = x2.shape[0]
    tm = _choose_tile(M, tm_max)
    out = pl.pallas_call(
        functools.partial(_layernorm_kernel, eps=eps),
        grid=(M // tm,),
        in_specs=[pl.BlockSpec((tm, C), lambda i: (i, 0)),
                  pl.BlockSpec((1, C), lambda i: (0, 0)),
                  pl.BlockSpec((1, C), lambda i: (0, 0))],
        out_specs=pl.BlockSpec((tm, C), lambda i: (i, 0)),
        out_shape=jax.ShapeDtypeStruct((M, C), x.dtype),
        compiler_params=pltpu.CompilerParams(dimension_semantics=("parallel",)),
    )(x2, gamma.reshape(1, C).astype(jnp.float32), beta.reshape(1, C).astype(jnp.float32))
    return out.reshape(orig_shape)


def _window_attn_kernel(qkv_ref, bias_ref, o_ref, *, num_heads, head_dim, scale):
    # One image per grid step.
    #   qkv_ref : [nW, L2, 3C]   fused LN1+QKV output for this image's windows
    #   bias_ref: [nW, nH, L2, L2]  rel-pos bias (+ shift mask), batch-shared
    #   o_ref   : [nW, L2, C]    heads merged in-kernel
    C = num_heads * head_dim
    qkv = qkv_ref[...].astype(jnp.float32)
    bias = bias_ref[...]
    for h in range(num_heads):
        d0, d1 = h * head_dim, (h + 1) * head_dim
        q = qkv[:, :, d0:d1] * scale
        k = qkv[:, :, C + d0:C + d1]
        v = qkv[:, :, 2 * C + d0:2 * C + d1]
        s = jnp.einsum("wqd,wkd->wqk",
                       q.astype(jnp.bfloat16), k.astype(jnp.bfloat16),
                       preferred_element_type=jnp.float32)
        s = s + bias[:, h, :, :]
        s = s - jnp.max(s, axis=-1, keepdims=True)
        p = jnp.exp(s)
        p = p * pl.reciprocal(jnp.sum(p, axis=-1, keepdims=True), approx=True)
        o_h = jnp.einsum("wqk,wkd->wqd",
                         p.astype(jnp.bfloat16), v.astype(jnp.bfloat16),
                         preferred_element_type=jnp.float32)
        o_ref[:, :, d0:d1] = o_h.astype(o_ref.dtype)


def pallas_window_attention(qkv, bias, num_heads, head_dim, scale):
    """qkv: [B*nW, L2, 3C] (batch-major windows); bias: [nW, nH, L2, L2] (f32)."""
    BW, L2, threeC = qkv.shape
    C = num_heads * head_dim
    nW = bias.shape[0]
    B = BW // nW
    return pl.pallas_call(
        functools.partial(_window_attn_kernel,
                          num_heads=num_heads, head_dim=head_dim, scale=scale),
        grid=(B,),
        in_specs=[
            pl.BlockSpec((nW, L2, threeC), lambda i: (i, 0, 0)),
            pl.BlockSpec((nW, num_heads, L2, L2), lambda i: (0, 0, 0, 0)),
        ],
        out_specs=pl.BlockSpec((nW, L2, C), lambda i: (i, 0, 0)),
        out_shape=jax.ShapeDtypeStruct((BW, L2, C), qkv.dtype),
        compiler_params=pltpu.CompilerParams(dimension_semantics=("parallel",)),
    )(qkv, bias)


# --------------------------- Swin building blocks -----------------------------

def window_partition(x, ws):
    B, H, W, C = x.shape
    x = x.reshape(B, H // ws, ws, W // ws, ws, C)
    return x.transpose(0, 1, 3, 2, 4, 5).reshape(-1, ws * ws, C)   # batch-major windows


def window_reverse(windows, ws, H, W, B):
    x = windows.reshape(B, H // ws, W // ws, ws, ws, -1)
    return x.transpose(0, 1, 3, 2, 4, 5).reshape(B, H, W, -1)


def relative_position_index(ws):
    coords = jnp.stack(jnp.meshgrid(jnp.arange(ws), jnp.arange(ws), indexing="ij"))
    coords_flat = coords.reshape(2, -1)
    rel = coords_flat[:, :, None] - coords_flat[:, None, :]          # [2, L, L]
    rel = rel.transpose(1, 2, 0) + jnp.array([ws - 1, ws - 1])
    return rel[..., 0] * (2 * ws - 1) + rel[..., 1]                  # [L, L]


def shifted_window_mask(H, W, ws, shift):
    img_mask = jnp.zeros((1, H, W, 1), jnp.float32)
    cnt = 0.0
    h_slices = (slice(0, H - ws), slice(H - ws, H - shift), slice(H - shift, H))
    w_slices = (slice(0, W - ws), slice(W - ws, W - shift), slice(W - shift, W))
    for hs in h_slices:
        for wsl in w_slices:
            img_mask = img_mask.at[:, hs, wsl, :].set(cnt)
            cnt += 1.0
    mask_windows = window_partition(img_mask, ws).reshape(-1, ws * ws)
    attn_mask = mask_windows[:, None, :] - mask_windows[:, :, None]
    return jnp.where(attn_mask != 0, -100.0, 0.0)                    # [nW, L2, L2]


def swin_block(x, blk, H, W, num_heads, ws, shift, rel_idx, shift_mask):
    B, L, C = x.shape
    head_dim = C // num_heads
    scale = head_dim ** -0.5
    L2 = ws * ws
    nW = (H // ws) * (W // ws)

    shortcut = x
    # LN is per-token so it commutes with the cyclic shift / window partition;
    # it is applied as a prologue of the fused QKV matmul below.
    h = x.reshape(B, H, W, C)
    if shift > 0:
        h = jnp.roll(h, shift=(-shift, -shift), axis=(1, 2))
    win = window_partition(h, ws)                                    # [B*nW, L2, C]

    # Fused LN1 + QKV projection: single [C, 3C] matmul.
    qkv = pallas_linear(win, blk["qkv"]["w"], blk["qkv"]["b"],
                        ln=(blk["ln1"]["g"], blk["ln1"]["b"]))       # [B*nW, L2, 3C]

    # Batch-shared relative-position bias (+ shift mask): [nW, nH, L2, L2].
    rel_bias = blk["rel_table"][rel_idx.reshape(-1)].reshape(L2, L2, num_heads)
    rel_bias = rel_bias.transpose(2, 0, 1)                           # [nH, L2, L2]
    if shift > 0:
        bias = rel_bias[None, :, :, :] + shift_mask[:, None, :, :]
    else:
        bias = jnp.broadcast_to(rel_bias[None, :, :, :], (nW, num_heads, L2, L2))
    bias = bias.astype(jnp.float32)

    attn = pallas_window_attention(qkv, bias, num_heads, head_dim, scale)  # [B*nW, L2, C]
    attn = pallas_linear(attn, blk["proj"]["w"], blk["proj"]["b"])

    h = window_reverse(attn, ws, H, W, B)
    if shift > 0:
        h = jnp.roll(h, shift=(shift, shift), axis=(1, 2))
    x = shortcut + h.reshape(B, L, C)

    # MLP: fused LN2 + fc1 + exact GELU, then fc2.
    y = pallas_linear(x, blk["fc1"]["w"], blk["fc1"]["b"],
                      ln=(blk["ln2"]["g"], blk["ln2"]["b"]), activation="gelu")
    y = pallas_linear(y, blk["fc2"]["w"], blk["fc2"]["b"])
    return x + y


def patch_merging(x, ds, H, W):
    B, L, C = x.shape
    x = x.reshape(B, H, W, C)
    x0 = x[:, 0::2, 0::2, :]
    x1 = x[:, 1::2, 0::2, :]
    x2 = x[:, 0::2, 1::2, :]
    x3 = x[:, 1::2, 1::2, :]
    x = jnp.concatenate([x0, x1, x2, x3], axis=-1).reshape(B, (H // 2) * (W // 2), 4 * C)
    # Fused LayerNorm + bias-free reduction (no zero-bias DMA).
    return pallas_linear(x, ds["reduction"]["w"], None,
                         ln=(ds["norm"]["g"], ds["norm"]["b"]))


def swin_forward(img, cfg, params):
    B, C, H, W = img.shape
    P = cfg["patch_size"]

    # Patch embedding: Conv2d(kernel=stride=P) as a per-patch matmul, then LN.
    x = img.reshape(B, C, H // P, P, W // P, P)
    x = x.transpose(0, 2, 4, 1, 3, 5).reshape(B, (H // P) * (W // P), C * P * P)
    x = pallas_linear(x, params["patch_embed"]["w"], params["patch_embed"]["b"])
    x = pallas_layernorm(x, params["embed_norm"]["g"], params["embed_norm"]["b"])

    res = H // P
    for si, stage in enumerate(params["stages"]):
        nH = cfg["num_heads"][si]
        ws = min(cfg["window_size"], res)
        # Per-stage constants (constant-folded at compile time, reused by all blocks).
        rel_idx = relative_position_index(ws)
        use_shift = res > cfg["window_size"]
        shift_mask = shifted_window_mask(res, res, ws, ws // 2) if use_shift else None
        for bi, blk in enumerate(stage["blocks"]):
            shift = ws // 2 if (bi % 2 == 1 and use_shift) else 0
            x = swin_block(x, blk, res, res, nH, ws, shift, rel_idx, shift_mask)
        if "downsample" in stage:
            x = patch_merging(x, stage["downsample"], res, res)
            res //= 2

    x = pallas_layernorm(x, params["final_norm"]["g"], params["final_norm"]["b"])
    x = jnp.mean(x, axis=1)                                          # avg-pool over tokens
    return pallas_linear(x, params["head"]["w"], params["head"]["b"])


# ------------------------------ Parameter init --------------------------------

def make_params(key):
    cfg = dict(
        img_size=16, patch_size=4, in_chans=3,
        embed_dim=32, depths=(2, 2), num_heads=(2, 4),
        window_size=2, mlp_ratio=4, num_classes=10,
    )
    counter = [0]

    def nxt():
        counter[0] += 1
        return jax.random.fold_in(key, counter[0])

    def dense(k_in, k_out, bias=True):
        p = {"w": 0.02 * jax.random.normal(nxt(), (k_in, k_out), jnp.float32)}
        p["b"] = jnp.zeros((k_out,), jnp.float32) if bias else None
        return p

    def layer_norm(dim):
        return {"g": jnp.ones((dim,), jnp.float32), "b": jnp.zeros((dim,), jnp.float32)}

    params = {}
    P, Cin = cfg["patch_size"], cfg["in_chans"]
    params["patch_embed"] = dense(Cin * P * P, cfg["embed_dim"])
    params["embed_norm"] = layer_norm(cfg["embed_dim"])

    stages = []
    dim = cfg["embed_dim"]
    res = cfg["img_size"] // P
    for si, depth in enumerate(cfg["depths"]):
        nH = cfg["num_heads"][si]
        ws = min(cfg["window_size"], res)
        blocks = []
        for _ in range(depth):
            blocks.append({
                "ln1": layer_norm(dim),
                "qkv": dense(dim, 3 * dim),          # fused Q/K/V projection
                "proj": dense(dim, dim),
                "rel_table": 0.02 * jax.random.normal(
                    nxt(), ((2 * ws - 1) ** 2, nH), jnp.float32),
                "ln2": layer_norm(dim),
                "fc1": dense(dim, cfg["mlp_ratio"] * dim),
                "fc2": dense(cfg["mlp_ratio"] * dim, dim),
            })
        stage = {"blocks": blocks}
        if si < len(cfg["depths"]) - 1:
            stage["downsample"] = {
                "norm": layer_norm(4 * dim),
                "reduction": dense(4 * dim, 2 * dim, bias=False),
            }
            dim *= 2
            res //= 2
        stages.append(stage)
    params["stages"] = stages
    params["final_norm"] = layer_norm(dim)
    params["head"] = dense(dim, cfg["num_classes"])
    return cfg, params


# ----------------------------------- Main --------------------------------------

if __name__ == "__main__":
    root = jax.random.PRNGKey(0)
    cfg, params = make_params(jax.random.fold_in(root, 1))
    img = jax.random.normal(jax.random.fold_in(root, 2), (2, 3, 16, 16), jnp.float32)

    fwd = jax.jit(lambda im: swin_forward(im, cfg, params))
    logits = fwd(img)
    jax.block_until_ready(logits)

    assert logits.shape == (2, cfg["num_classes"])
    assert bool(jnp.all(jnp.isfinite(logits)))
    print("KERNEL_OK")
</pallas_src>

<mosaic_0001>
module attributes {stable_mosaic.version = 11 : i64} {
  func.func @kernel(%arg0: i32, %arg1: memref<32x32xf32, #tpu.memory_space<vmem>>, %arg2: memref<1x32xf32, #tpu.memory_space<vmem>>, %arg3: memref<1x32xf32, #tpu.memory_space<vmem>>, %arg4: memref<32x96xbf16, #tpu.memory_space<vmem>>, %arg5: memref<1x96xf32, #tpu.memory_space<vmem>>, %arg6: memref<32x96xf32, #tpu.memory_space<vmem>>) attributes {dimension_semantics = [#tpu.dimension_semantics<parallel>], iteration_bounds = array<i64: 1>, scalar_prefetch = 0 : i64, scratch_operands = 0 : i64, tpu.core_type = #tpu.core_type<tc>, window_params = [{transform_indices = @transform_0, window_bounds = array<i64: 32, 32>}, {pipeline_mode = #tpu.pipeline_mode<synchronous>, transform_indices = @transform_1, window_bounds = array<i64: 1, 32>}, {pipeline_mode = #tpu.pipeline_mode<synchronous>, transform_indices = @transform_2, window_bounds = array<i64: 1, 32>}, {pipeline_mode = #tpu.pipeline_mode<synchronous>, transform_indices = @transform_3, window_bounds = array<i64: 32, 96>}, {pipeline_mode = #tpu.pipeline_mode<synchronous>, transform_indices = @transform_4, window_bounds = array<i64: 1, 96>}, {transform_indices = @transform_5, window_bounds = array<i64: 32, 96>}]} {
    %c0 = arith.constant 0 : index
    %c0_0 = arith.constant 0 : index
    %0 = vector.load %arg1[%c0, %c0_0] : memref<32x32xf32, #tpu.memory_space<vmem>>, vector<32x32xf32>
    %cst = arith.constant dense<0.000000e+00> : vector<32xf32>
    %1 = vector.multi_reduction <add>, %0, %cst [1] : vector<32x32xf32> to vector<32xf32>
    %2 = vector.shape_cast %1 : vector<32xf32> to vector<32x1xf32>
    %cst_1 = arith.constant 3.200000e+01 : f32
    %3 = vector.broadcast %cst_1 : f32 to vector<32x1xf32>
    %4 = arith.divf %2, %3 : vector<32x1xf32>
    %5 = vector.broadcast %4 : vector<32x1xf32> to vector<32x32xf32>
    %6 = arith.subf %0, %5 : vector<32x32xf32>
    %7 = arith.mulf %6, %6 : vector<32x32xf32>
    %cst_2 = arith.constant dense<0.000000e+00> : vector<32xf32>
    %8 = vector.multi_reduction <add>, %7, %cst_2 [1] : vector<32x32xf32> to vector<32xf32>
    %9 = vector.shape_cast %8 : vector<32xf32> to vector<32x1xf32>
    %cst_3 = arith.constant 3.200000e+01 : f32
    %10 = vector.broadcast %cst_3 : f32 to vector<32x1xf32>
    %11 = arith.divf %9, %10 : vector<32x1xf32>
    %12 = vector.broadcast %4 : vector<32x1xf32> to vector<32x32xf32>
    %13 = arith.subf %0, %12 : vector<32x32xf32>
    %cst_4 = arith.constant 9.99999974E-6 : f32
    %14 = vector.broadcast %cst_4 : f32 to vector<32x1xf32>
    %15 = arith.addf %11, %14 : vector<32x1xf32>
    %16 = math.rsqrt %15 : vector<32x1xf32>
    %17 = vector.broadcast %16 : vector<32x1xf32> to vector<32x32xf32>
    %18 = arith.mulf %13, %17 : vector<32x32xf32>
    %c0_5 = arith.constant 0 : index
    %c0_6 = arith.constant 0 : index
    %19 = vector.load %arg2[%c0_5, %c0_6] : memref<1x32xf32, #tpu.memory_space<vmem>>, vector<1x32xf32>
    %20 = vector.broadcast %19 : vector<1x32xf32> to vector<32x32xf32>
    %21 = arith.mulf %18, %20 : vector<32x32xf32>
    %c0_7 = arith.constant 0 : index
    %c0_8 = arith.constant 0 : index
    %22 = vector.load %arg3[%c0_7, %c0_8] : memref<1x32xf32, #tpu.memory_space<vmem>>, vector<1x32xf32>
    %23 = vector.broadcast %22 : vector<1x32xf32> to vector<32x32xf32>
    %24 = arith.addf %21, %23 : vector<32x32xf32>
    %25 = arith.truncf %24 : vector<32x32xf32> to vector<32x32xbf16>
    %c0_9 = arith.constant 0 : index
    %c0_10 = arith.constant 0 : index
    %26 = vector.load %arg4[%c0_9, %c0_10] : memref<32x96xbf16, #tpu.memory_space<vmem>>, vector<32x96xbf16>
    %cst_11 = arith.constant dense<0.000000e+00> : vector<32x96xf32>
    %27 = tpu.matmul %25, %26, %cst_11 {dimension_numbers = #tpu.dot_dimension_numbers<[1], [0], [0], [1], [0, 0, 1, 1], [], []>} : vector<32x32xbf16>, vector<32x96xbf16>, vector<32x96xf32> -> vector<32x96xf32>
    %c0_12 = arith.constant 0 : index
    %c0_13 = arith.constant 0 : index
    %28 = vector.load %arg5[%c0_12, %c0_13] : memref<1x96xf32, #tpu.memory_space<vmem>>, vector<1x96xf32>
    %29 = vector.broadcast %28 : vector<1x96xf32> to vector<32x96xf32>
    %30 = arith.addf %27, %29 : vector<32x96xf32>
    %c0_14 = arith.constant 0 : index
    %c0_15 = arith.constant 0 : index
    %31 = vector.load %arg6[%c0_14, %c0_15] : memref<32x96xf32, #tpu.memory_space<vmem>>, vector<32x96xf32>
    tpu.vector_store %arg6[%c0_14, %c0_15], %30 {strides = array<i32>} : memref<32x96xf32, #tpu.memory_space<vmem>>, vector<32x96xf32>,
    return
  }
  func.func @transform_0(%arg0: i32) -> (i32, i32) {
    %c0_i32 = arith.constant 0 : i32
    %c0_i32_0 = arith.constant 0 : i32
    return %arg0, %c0_i32 : i32, i32
  }
  func.func @transform_1(%arg0: i32) -> (i32, i32) {
    %c0_i32 = arith.constant 0 : i32
    %c0_i32_0 = arith.constant 0 : i32
    %c0_i32_1 = arith.constant 0 : i32
    return %c0_i32, %c0_i32_0 : i32, i32
  }
  func.func @transform_2(%arg0: i32) -> (i32, i32) {
    %c0_i32 = arith.constant 0 : i32
    %c0_i32_0 = arith.constant 0 : i32
    %c0_i32_1 = arith.constant 0 : i32
    return %c0_i32, %c0_i32_0 : i32, i32
  }
  func.func @transform_3(%arg0: i32) -> (i32, i32) {
    %c0_i32 = arith.constant 0 : i32
    %c0_i32_0 = arith.constant 0 : i32
    %c0_i32_1 = arith.constant 0 : i32
    return %c0_i32, %c0_i32_0 : i32, i32
  }
  func.func @transform_4(%arg0: i32) -> (i32, i32) {
    %c0_i32 = arith.constant 0 : i32
    %c0_i32_0 = arith.constant 0 : i32
    %c0_i32_1 = arith.constant 0 : i32
    return %c0_i32, %c0_i32_0 : i32, i32
  }
  func.func @transform_5(%arg0: i32) -> (i32, i32) {
    %c0_i32 = arith.constant 0 : i32
    %c0_i32_0 = arith.constant 0 : i32
    return %arg0, %c0_i32 : i32, i32
  }
}

module attributes {stable_mosaic.version = 11 : i64} {
  func.func @kernel(%arg0: i32, %arg1: memref<32x48xf32, #tpu.memory_space<vmem>>, %arg2: memref<48x32xbf16, #tpu.memory_space<vmem>>, %arg3: memref<1x32xf32, #tpu.memory_space<vmem>>, %arg4: memref<32x32xf32, #tpu.memory_space<vmem>>) attributes {dimension_semantics = [#tpu.dimension_semantics<parallel>], iteration_bounds = array<i64: 1>, scalar_prefetch = 0 : i64, scratch_operands = 0 : i64, tpu.core_type = #tpu.core_type<tc>, window_params = [{transform_indices = @transform_0, window_bounds = array<i64: 32, 48>}, {pipeline_mode = #tpu.pipeline_mode<synchronous>, transform_indices = @transform_1, window_bounds = array<i64: 48, 32>}, {pipeline_mode = #tpu.pipeline_mode<synchronous>, transform_indices = @transform_2, window_bounds = array<i64: 1, 32>}, {transform_indices = @transform_3, window_bounds = array<i64: 32, 32>}]} {
    %c0 = arith.constant 0 : index
    %c0_0 = arith.constant 0 : index
    %0 = vector.load %arg1[%c0, %c0_0] : memref<32x48xf32, #tpu.memory_space<vmem>>, vector<32x48xf32>
    %1 = arith.truncf %0 : vector<32x48xf32> to vector<32x48xbf16>
    %c0_1 = arith.constant 0 : index
    %c0_2 = arith.constant 0 : index
    %2 = vector.load %arg2[%c0_1, %c0_2] : memref<48x32xbf16, #tpu.memory_space<vmem>>, vector<48x32xbf16>
    %cst = arith.constant dense<0.000000e+00> : vector<32x32xf32>
    %3 = tpu.matmul %1, %2, %cst {dimension_numbers = #tpu.dot_dimension_numbers<[1], [0], [0], [1], [0, 0, 1, 1], [], []>} : vector<32x48xbf16>, vector<48x32xbf16>, vector<32x32xf32> -> vector<32x32xf32>
    %c0_3 = arith.constant 0 : index
    %c0_4 = arith.constant 0 : index
    %4 = vector.load %arg3[%c0_3, %c0_4] : memref<1x32xf32, #tpu.memory_space<vmem>>, vector<1x32xf32>
    %5 = vector.broadcast %4 : vector<1x32xf32> to vector<32x32xf32>
    %6 = arith.addf %3, %5 : vector<32x32xf32>
    %c0_5 = arith.constant 0 : index
    %c0_6 = arith.constant 0 : index
    %7 = vector.load %arg4[%c0_5, %c0_6] : memref<32x32xf32, #tpu.memory_space<vmem>>, vector<32x32xf32>
    tpu.vector_store %arg4[%c0_5, %c0_6], %6 {strides = array<i32>} : memref<32x32xf32, #tpu.memory_space<vmem>>, vector<32x32xf32>,
    return
  }
  func.func @transform_0(%arg0: i32) -> (i32, i32) {
    %c0_i32 = arith.constant 0 : i32
    %c0_i32_0 = arith.constant 0 : i32
    return %arg0, %c0_i32 : i32, i32
  }
  func.func @transform_1(%arg0: i32) -> (i32, i32) {
    %c0_i32 = arith.constant 0 : i32
    %c0_i32_0 = arith.constant 0 : i32
    %c0_i32_1 = arith.constant 0 : i32
    return %c0_i32, %c0_i32_0 : i32, i32
  }
  func.func @transform_2(%arg0: i32) -> (i32, i32) {
    %c0_i32 = arith.constant 0 : i32
    %c0_i32_0 = arith.constant 0 : i32
    %c0_i32_1 = arith.constant 0 : i32
    return %c0_i32, %c0_i32_0 : i32, i32
  }
  func.func @transform_3(%arg0: i32) -> (i32, i32) {
    %c0_i32 = arith.constant 0 : i32
    %c0_i32_0 = arith.constant 0 : i32
    return %arg0, %c0_i32 : i32, i32
  }
}

module attributes {stable_mosaic.version = 11 : i64} {
  func.func @_layernorm_kernel(%arg0: i32, %arg1: memref<32x32xf32, #tpu.memory_space<vmem>>, %arg2: memref<1x32xf32, #tpu.memory_space<vmem>>, %arg3: memref<1x32xf32, #tpu.memory_space<vmem>>, %arg4: memref<32x32xf32, #tpu.memory_space<vmem>>) attributes {dimension_semantics = [#tpu.dimension_semantics<parallel>], iteration_bounds = array<i64: 1>, scalar_prefetch = 0 : i64, scratch_operands = 0 : i64, tpu.core_type = #tpu.core_type<tc>, window_params = [{transform_indices = @transform_0, window_bounds = array<i64: 32, 32>}, {pipeline_mode = #tpu.pipeline_mode<synchronous>, transform_indices = @transform_1, window_bounds = array<i64: 1, 32>}, {pipeline_mode = #tpu.pipeline_mode<synchronous>, transform_indices = @transform_2, window_bounds = array<i64: 1, 32>}, {transform_indices = @transform_3, window_bounds = array<i64: 32, 32>}]} {
    %c0 = arith.constant 0 : index
    %c0_0 = arith.constant 0 : index
    %0 = vector.load %arg1[%c0, %c0_0] : memref<32x32xf32, #tpu.memory_space<vmem>>, vector<32x32xf32>
    %cst = arith.constant dense<0.000000e+00> : vector<32xf32>
    %1 = vector.multi_reduction <add>, %0, %cst [1] : vector<32x32xf32> to vector<32xf32>
    %2 = vector.shape_cast %1 : vector<32xf32> to vector<32x1xf32>
    %cst_1 = arith.constant 3.200000e+01 : f32
    %3 = vector.broadcast %cst_1 : f32 to vector<32x1xf32>
    %4 = arith.divf %2, %3 : vector<32x1xf32>
    %5 = vector.broadcast %4 : vector<32x1xf32> to vector<32x32xf32>
    %6 = arith.subf %0, %5 : vector<32x32xf32>
    %7 = arith.mulf %6, %6 : vector<32x32xf32>
    %cst_2 = arith.constant dense<0.000000e+00> : vector<32xf32>
    %8 = vector.multi_reduction <add>, %7, %cst_2 [1] : vector<32x32xf32> to vector<32xf32>
    %9 = vector.shape_cast %8 : vector<32xf32> to vector<32x1xf32>
    %cst_3 = arith.constant 3.200000e+01 : f32
    %10 = vector.broadcast %cst_3 : f32 to vector<32x1xf32>
    %11 = arith.divf %9, %10 : vector<32x1xf32>
    %12 = vector.broadcast %4 : vector<32x1xf32> to vector<32x32xf32>
    %13 = arith.subf %0, %12 : vector<32x32xf32>
    %cst_4 = arith.constant 9.99999974E-6 : f32
    %14 = vector.broadcast %cst_4 : f32 to vector<32x1xf32>
    %15 = arith.addf %11, %14 : vector<32x1xf32>
    %16 = math.rsqrt %15 : vector<32x1xf32>
    %17 = vector.broadcast %16 : vector<32x1xf32> to vector<32x32xf32>
    %18 = arith.mulf %13, %17 : vector<32x32xf32>
    %c0_5 = arith.constant 0 : index
    %c0_6 = arith.constant 0 : index
    %19 = vector.load %arg2[%c0_5, %c0_6] : memref<1x32xf32, #tpu.memory_space<vmem>>, vector<1x32xf32>
    %20 = vector.broadcast %19 : vector<1x32xf32> to vector<32x32xf32>
    %21 = arith.mulf %18, %20 : vector<32x32xf32>
    %c0_7 = arith.constant 0 : index
    %c0_8 = arith.constant 0 : index
    %22 = vector.load %arg3[%c0_7, %c0_8] : memref<1x32xf32, #tpu.memory_space<vmem>>, vector<1x32xf32>
    %23 = vector.broadcast %22 : vector<1x32xf32> to vector<32x32xf32>
    %24 = arith.addf %21, %23 : vector<32x32xf32>
    %c0_9 = arith.constant 0 : index
    %c0_10 = arith.constant 0 : index
    %25 = vector.load %arg4[%c0_9, %c0_10] : memref<32x32xf32, #tpu.memory_space<vmem>>, vector<32x32xf32>
    tpu.vector_store %arg4[%c0_9, %c0_10], %24 {strides = array<i32>} : memref<32x32xf32, #tpu.memory_space<vmem>>, vector<32x32xf32>,
    return
  }
  func.func @transform_0(%arg0: i32) -> (i32, i32) {
    %c0_i32 = arith.constant 0 : i32
    %c0_i32_0 = arith.constant 0 : i32
    return %arg0, %c0_i32 : i32, i32
  }
  func.func @transform_1(%arg0: i32) -> (i32, i32) {
    %c0_i32 = arith.constant 0 : i32
    %c0_i32_0 = arith.constant 0 : i32
    %c0_i32_1 = arith.constant 0 : i32
    return %c0_i32, %c0_i32_0 : i32, i32
  }
  func.func @transform_2(%arg0: i32) -> (i32, i32) {
    %c0_i32 = arith.constant 0 : i32
    %c0_i32_0 = arith.constant 0 : i32
    %c0_i32_1 = arith.constant 0 : i32
    return %c0_i32, %c0_i32_0 : i32, i32
  }
  func.func @transform_3(%arg0: i32) -> (i32, i32) {
    %c0_i32 = arith.constant 0 : i32
    %c0_i32_0 = arith.constant 0 : i32
    return %arg0, %c0_i32 : i32, i32
  }
}

module attributes {stable_mosaic.version = 11 : i64} {
  func.func @kernel(%arg0: i32, %arg1: memref<32x32xf32, #tpu.memory_space<vmem>>, %arg2: memref<1x32xf32, #tpu.memory_space<vmem>>, %arg3: memref<1x32xf32, #tpu.memory_space<vmem>>, %arg4: memref<32x128xbf16, #tpu.memory_space<vmem>>, %arg5: memref<1x128xf32, #tpu.memory_space<vmem>>, %arg6: memref<32x128xf32, #tpu.memory_space<vmem>>) attributes {dimension_semantics = [#tpu.dimension_semantics<parallel>], iteration_bounds = array<i64: 1>, scalar_prefetch = 0 : i64, scratch_operands = 0 : i64, tpu.core_type = #tpu.core_type<tc>, window_params = [{transform_indices = @transform_0, window_bounds = array<i64: 32, 32>}, {pipeline_mode = #tpu.pipeline_mode<synchronous>, transform_indices = @transform_1, window_bounds = array<i64: 1, 32>}, {pipeline_mode = #tpu.pipeline_mode<synchronous>, transform_indices = @transform_2, window_bounds = array<i64: 1, 32>}, {pipeline_mode = #tpu.pipeline_mode<synchronous>, transform_indices = @transform_3, window_bounds = array<i64: 32, 128>}, {pipeline_mode = #tpu.pipeline_mode<synchronous>, transform_indices = @transform_4, window_bounds = array<i64: 1, 128>}, {transform_indices = @transform_5, window_bounds = array<i64: 32, 128>}]} {
    %c0 = arith.constant 0 : index
    %c0_0 = arith.constant 0 : index
    %0 = vector.load %arg1[%c0, %c0_0] : memref<32x32xf32, #tpu.memory_space<vmem>>, vector<32x32xf32>
    %cst = arith.constant dense<0.000000e+00> : vector<32xf32>
    %1 = vector.multi_reduction <add>, %0, %cst [1] : vector<32x32xf32> to vector<32xf32>
    %2 = vector.shape_cast %1 : vector<32xf32> to vector<32x1xf32>
    %cst_1 = arith.constant 3.200000e+01 : f32
    %3 = vector.broadcast %cst_1 : f32 to vector<32x1xf32>
    %4 = arith.divf %2, %3 : vector<32x1xf32>
    %5 = vector.broadcast %4 : vector<32x1xf32> to vector<32x32xf32>
    %6 = arith.subf %0, %5 : vector<32x32xf32>
    %7 = arith.mulf %6, %6 : vector<32x32xf32>
    %cst_2 = arith.constant dense<0.000000e+00> : vector<32xf32>
    %8 = vector.multi_reduction <add>, %7, %cst_2 [1] : vector<32x32xf32> to vector<32xf32>
    %9 = vector.shape_cast %8 : vector<32xf32> to vector<32x1xf32>
    %cst_3 = arith.constant 3.200000e+01 : f32
    %10 = vector.broadcast %cst_3 : f32 to vector<32x1xf32>
    %11 = arith.divf %9, %10 : vector<32x1xf32>
    %12 = vector.broadcast %4 : vector<32x1xf32> to vector<32x32xf32>
    %13 = arith.subf %0, %12 : vector<32x32xf32>
    %cst_4 = arith.constant 9.99999974E-6 : f32
    %14 = vector.broadcast %cst_4 : f32 to vector<32x1xf32>
    %15 = arith.addf %11, %14 : vector<32x1xf32>
    %16 = math.rsqrt %15 : vector<32x1xf32>
    %17 = vector.broadcast %16 : vector<32x1xf32> to vector<32x32xf32>
    %18 = arith.mulf %13, %17 : vector<32x32xf32>
    %c0_5 = arith.constant 0 : index
    %c0_6 = arith.constant 0 : index
    %19 = vector.load %arg2[%c0_5, %c0_6] : memref<1x32xf32, #tpu.memory_space<vmem>>, vector<1x32xf32>
    %20 = vector.broadcast %19 : vector<1x32xf32> to vector<32x32xf32>
    %21 = arith.mulf %18, %20 : vector<32x32xf32>
    %c0_7 = arith.constant 0 : index
    %c0_8 = arith.constant 0 : index
    %22 = vector.load %arg3[%c0_7, %c0_8] : memref<1x32xf32, #tpu.memory_space<vmem>>, vector<1x32xf32>
    %23 = vector.broadcast %22 : vector<1x32xf32> to vector<32x32xf32>
    %24 = arith.addf %21, %23 : vector<32x32xf32>
    %25 = arith.truncf %24 : vector<32x32xf32> to vector<32x32xbf16>
    %c0_9 = arith.constant 0 : index
    %c0_10 = arith.constant 0 : index
    %26 = vector.load %arg4[%c0_9, %c0_10] : memref<32x128xbf16, #tpu.memory_space<vmem>>, vector<32x128xbf16>
    %cst_11 = arith.constant dense<0.000000e+00> : vector<32x128xf32>
    %27 = tpu.matmul %25, %26, %cst_11 {dimension_numbers = #tpu.dot_dimension_numbers<[1], [0], [0], [1], [0, 0, 1, 1], [], []>} : vector<32x32xbf16>, vector<32x128xbf16>, vector<32x128xf32> -> vector<32x128xf32>
    %c0_12 = arith.constant 0 : index
    %c0_13 = arith.constant 0 : index
    %28 = vector.load %arg5[%c0_12, %c0_13] : memref<1x128xf32, #tpu.memory_space<vmem>>, vector<1x128xf32>
    %29 = vector.broadcast %28 : vector<1x128xf32> to vector<32x128xf32>
    %30 = arith.addf %27, %29 : vector<32x128xf32>
    %cst_14 = arith.constant 5.000000e-01 : f32
    %31 = vector.broadcast %cst_14 : f32 to vector<32x128xf32>
    %32 = arith.mulf %31, %30 : vector<32x128xf32>
    %cst_15 = arith.constant 0.707106769 : f32
    %33 = vector.broadcast %cst_15 : f32 to vector<32x128xf32>
    %34 = arith.mulf %30, %33 : vector<32x128xf32>
    %cst_16 = arith.constant 0.000000e+00 : f32
    %35 = vector.broadcast %cst_16 : f32 to vector<32x128xf32>
    %36 = arith.cmpf oge, %34, %35 : vector<32x128xf32>
    %cst_17 = arith.constant 1.000000e+00 : f32
    %cst_18 = arith.constant -1.000000e+00 : f32
    %37 = vector.broadcast %cst_17 : f32 to vector<32x128xf32>
    %38 = vector.broadcast %cst_18 : f32 to vector<32x128xf32>
    %39 = arith.select %36, %37, %38 : vector<32x128xi1>, vector<32x128xf32>
    %40 = math.absf %34 : vector<32x128xf32>
    %cst_19 = arith.constant 0.327591091 : f32
    %41 = vector.broadcast %cst_19 : f32 to vector<32x128xf32>
    %42 = arith.mulf %41, %40 : vector<32x128xf32>
    %cst_20 = arith.constant 1.000000e+00 : f32
    %43 = vector.broadcast %cst_20 : f32 to vector<32x128xf32>
    %44 = arith.addf %43, %42 : vector<32x128xf32>
    %cst_21 = arith.constant 1.000000e+00 : f32
    %45 = vector.broadcast %cst_21 : f32 to vector<32x128xf32>
    %46 = arith.divf %45, %44 : vector<32x128xf32>
    %cst_22 = arith.constant 1.06140542 : f32
    %47 = vector.broadcast %cst_22 : f32 to vector<32x128xf32>
    %48 = arith.mulf %47, %46 : vector<32x128xf32>
    %cst_23 = arith.constant -1.45315206 : f32
    %49 = vector.broadcast %cst_23 : f32 to vector<32x128xf32>
    %50 = arith.addf %48, %49 : vector<32x128xf32>
    %51 = arith.mulf %50, %46 : vector<32x128xf32>
    %cst_24 = arith.constant 1.42141378 : f32
    %52 = vector.broadcast %cst_24 : f32 to vector<32x128xf32>
    %53 = arith.addf %51, %52 : vector<32x128xf32>
    %54 = arith.mulf %53, %46 : vector<32x128xf32>
    %cst_25 = arith.constant -0.284496725 : f32
    %55 = vector.broadcast %cst_25 : f32 to vector<32x128xf32>
    %56 = arith.addf %54, %55 : vector<32x128xf32>
    %57 = arith.mulf %56, %46 : vector<32x128xf32>
    %cst_26 = arith.constant 0.254829586 : f32
    %58 = vector.broadcast %cst_26 : f32 to vector<32x128xf32>
    %59 = arith.addf %57, %58 : vector<32x128xf32>
    %60 = arith.mulf %59, %46 : vector<32x128xf32>
    %cst_27 = arith.constant 0.000000e+00 : f32
    %61 = vector.broadcast %cst_27 : f32 to vector<32x128xf32>
    %62 = arith.subf %61, %40 : vector<32x128xf32>
    %63 = arith.mulf %62, %40 : vector<32x128xf32>
    %64 = math.exp %63 : vector<32x128xf32>
    %65 = arith.mulf %60, %64 : vector<32x128xf32>
    %cst_28 = arith.constant 1.000000e+00 : f32
    %66 = vector.broadcast %cst_28 : f32 to vector<32x128xf32>
    %67 = arith.subf %66, %65 : vector<32x128xf32>
    %68 = arith.mulf %39, %67 : vector<32x128xf32>
    %cst_29 = arith.constant 1.000000e+00 : f32
    %69 = vector.broadcast %cst_29 : f32 to vector<32x128xf32>
    %70 = arith.addf %69, %68 : vector<32x128xf32>
    %71 = arith.mulf %32, %70 : vector<32x128xf32>
    %c0_30 = arith.constant 0 : index
    %c0_31 = arith.constant 0 : index
    %72 = vector.load %arg6[%c0_30, %c0_31] : memref<32x128xf32, #tpu.memory_space<vmem>>, vector<32x128xf32>
    tpu.vector_store %arg6[%c0_30, %c0_31], %71 {strides = array<i32>} : memref<32x128xf32, #tpu.memory_space<vmem>>, vector<32x128xf32>,
    return
  }
  func.func @transform_0(%arg0: i32) -> (i32, i32) {
    %c0_i32 = arith.constant 0 : i32
    %c0_i32_0 = arith.constant 0 : i32
    return %arg0, %c0_i32 : i32, i32
  }
  func.func @transform_1(%arg0: i32) -> (i32, i32) {
    %c0_i32 = arith.constant 0 : i32
    %c0_i32_0 = arith.constant 0 : i32
    %c0_i32_1 = arith.constant 0 : i32
    return %c0_i32, %c0_i32_0 : i32, i32
  }
  func.func @transform_2(%arg0: i32) -> (i32, i32) {
    %c0_i32 = arith.constant 0 : i32
    %c0_i32_0 = arith.constant 0 : i32
    %c0_i32_1 = arith.constant 0 : i32
    return %c0_i32, %c0_i32_0 : i32, i32
  }
  func.func @transform_3(%arg0: i32) -> (i32, i32) {
    %c0_i32 = arith.constant 0 : i32
    %c0_i32_0 = arith.constant 0 : i32
    %c0_i32_1 = arith.constant 0 : i32
    return %c0_i32, %c0_i32_0 : i32, i32
  }
  func.func @transform_4(%arg0: i32) -> (i32, i32) {
    %c0_i32 = arith.constant 0 : i32
    %c0_i32_0 = arith.constant 0 : i32
    %c0_i32_1 = arith.constant 0 : i32
    return %c0_i32, %c0_i32_0 : i32, i32
  }
  func.func @transform_5(%arg0: i32) -> (i32, i32) {
    %c0_i32 = arith.constant 0 : i32
    %c0_i32_0 = arith.constant 0 : i32
    return %arg0, %c0_i32 : i32, i32
  }
}

module attributes {stable_mosaic.version = 11 : i64} {
  func.func @kernel(%arg0: i32, %arg1: memref<32x32xf32, #tpu.memory_space<vmem>>, %arg2: memref<32x32xbf16, #tpu.memory_space<vmem>>, %arg3: memref<1x32xf32, #tpu.memory_space<vmem>>, %arg4: memref<32x32xf32, #tpu.memory_space<vmem>>) attributes {dimension_semantics = [#tpu.dimension_semantics<parallel>], iteration_bounds = array<i64: 1>, scalar_prefetch = 0 : i64, scratch_operands = 0 : i64, tpu.core_type = #tpu.core_type<tc>, window_params = [{transform_indices = @transform_0, window_bounds = array<i64: 32, 32>}, {pipeline_mode = #tpu.pipeline_mode<synchronous>, transform_indices = @transform_1, window_bounds = array<i64: 32, 32>}, {pipeline_mode = #tpu.pipeline_mode<synchronous>, transform_indices = @transform_2, window_bounds = array<i64: 1, 32>}, {transform_indices = @transform_3, window_bounds = array<i64: 32, 32>}]} {
    %c0 = arith.constant 0 : index
    %c0_0 = arith.constant 0 : index
    %0 = vector.load %arg1[%c0, %c0_0] : memref<32x32xf32, #tpu.memory_space<vmem>>, vector<32x32xf32>
    %1 = arith.truncf %0 : vector<32x32xf32> to vector<32x32xbf16>
    %c0_1 = arith.constant 0 : index
    %c0_2 = arith.constant 0 : index
    %2 = vector.load %arg2[%c0_1, %c0_2] : memref<32x32xbf16, #tpu.memory_space<vmem>>, vector<32x32xbf16>
    %cst = arith.constant dense<0.000000e+00> : vector<32x32xf32>
    %3 = tpu.matmul %1, %2, %cst {dimension_numbers = #tpu.dot_dimension_numbers<[1], [0], [0], [1], [0, 0, 1, 1], [], []>} : vector<32x32xbf16>, vector<32x32xbf16>, vector<32x32xf32> -> vector<32x32xf32>
    %c0_3 = arith.constant 0 : index
    %c0_4 = arith.constant 0 : index
    %4 = vector.load %arg3[%c0_3, %c0_4] : memref<1x32xf32, #tpu.memory_space<vmem>>, vector<1x32xf32>
    %5 = vector.broadcast %4 : vector<1x32xf32> to vector<32x32xf32>
    %6 = arith.addf %3, %5 : vector<32x32xf32>
    %c0_5 = arith.constant 0 : index
    %c0_6 = arith.constant 0 : index
    %7 = vector.load %arg4[%c0_5, %c0_6] : memref<32x32xf32, #tpu.memory_space<vmem>>, vector<32x32xf32>
    tpu.vector_store %arg4[%c0_5, %c0_6], %6 {strides = array<i32>} : memref<32x32xf32, #tpu.memory_space<vmem>>, vector<32x32xf32>,
    return
  }
  func.func @transform_0(%arg0: i32) -> (i32, i32) {
    %c0_i32 = arith.constant 0 : i32
    %c0_i32_0 = arith.constant 0 : i32
    return %arg0, %c0_i32 : i32, i32
  }
  func.func @transform_1(%arg0: i32) -> (i32, i32) {
    %c0_i32 = arith.constant 0 : i32
    %c0_i32_0 = arith.constant 0 : i32
    %c0_i32_1 = arith.constant 0 : i32
    return %c0_i32, %c0_i32_0 : i32, i32
  }
  func.func @transform_2(%arg0: i32) -> (i32, i32) {
    %c0_i32 = arith.constant 0 : i32
    %c0_i32_0 = arith.constant 0 : i32
    %c0_i32_1 = arith.constant 0 : i32
    return %c0_i32, %c0_i32_0 : i32, i32
  }
  func.func @transform_3(%arg0: i32) -> (i32, i32) {
    %c0_i32 = arith.constant 0 : i32
    %c0_i32_0 = arith.constant 0 : i32
    return %arg0, %c0_i32 : i32, i32
  }
}

module attributes {stable_mosaic.version = 11 : i64} {
  func.func @_window_attn_kernel(%arg0: i32, %arg1: memref<4x4x96xf32, #tpu.memory_space<vmem>>, %arg2: memref<4x2x4x4xf32, #tpu.memory_space<vmem>>, %arg3: memref<4x4x32xf32, #tpu.memory_space<vmem>>) attributes {dimension_semantics = [#tpu.dimension_semantics<parallel>], iteration_bounds = array<i64: 2>, scalar_prefetch = 0 : i64, scratch_operands = 0 : i64, tpu.core_type = #tpu.core_type<tc>, window_params = [{transform_indices = @transform_0, window_bounds = array<i64: 4, 4, 96>}, {pipeline_mode = #tpu.pipeline_mode<synchronous>, transform_indices = @transform_1, window_bounds = array<i64: 4, 2, 4, 4>}, {transform_indices = @transform_2, window_bounds = array<i64: 4, 4, 32>}]} {
    %c0 = arith.constant 0 : index
    %c0_0 = arith.constant 0 : index
    %c0_1 = arith.constant 0 : index
    %0 = vector.load %arg1[%c0, %c0_0, %c0_1] : memref<4x4x96xf32, #tpu.memory_space<vmem>>, vector<4x4x96xf32>
    %c0_2 = arith.constant 0 : index
    %c0_3 = arith.constant 0 : index
    %c0_4 = arith.constant 0 : index
    %c0_5 = arith.constant 0 : index
    %1 = vector.load %arg2[%c0_2, %c0_3, %c0_4, %c0_5] : memref<4x2x4x4xf32, #tpu.memory_space<vmem>>, vector<4x2x4x4xf32>
    %2 = vector.extract_strided_slice %0 {offsets = [0, 0, 0], sizes = [4, 4, 16], strides = [1, 1, 1]} : vector<4x4x96xf32> to vector<4x4x16xf32>
    %cst = arith.constant 2.500000e-01 : f32
    %3 = vector.broadcast %cst : f32 to vector<4x4x16xf32>
    %4 = arith.mulf %2, %3 : vector<4x4x16xf32>
    %5 = vector.extract_strided_slice %0 {offsets = [0, 0, 32], sizes = [4, 4, 16], strides = [1, 1, 1]} : vector<4x4x96xf32> to vector<4x4x16xf32>
    %6 = vector.extract_strided_slice %0 {offsets = [0, 0, 64], sizes = [4, 4, 16], strides = [1, 1, 1]} : vector<4x4x96xf32> to vector<4x4x16xf32>
    %7 = arith.truncf %4 : vector<4x4x16xf32> to vector<4x4x16xbf16>
    %8 = arith.truncf %5 : vector<4x4x16xf32> to vector<4x4x16xbf16>
    "tpu.trace_start"() <{level = 10 : i32, message = "wqd,wkd->wqk"}> : () -> ()
    %cst_6 = arith.constant dense<0.000000e+00> : vector<4x4x4xf32>
    %9 = tpu.matmul %7, %8, %cst_6 {dimension_numbers = #tpu.dot_dimension_numbers<[2], [2], [1], [1], [0, 0, 0, 1, 1, 1], [0], [0]>} : vector<4x4x16xbf16>, vector<4x4x16xbf16>, vector<4x4x4xf32> -> vector<4x4x4xf32>
    "tpu.trace_stop"() : () -> ()
    %10 = vector.extract_strided_slice %1 {offsets = [0, 0, 0, 0], sizes = [4, 1, 4, 4], strides = [1, 1, 1, 1]} : vector<4x2x4x4xf32> to vector<4x1x4x4xf32>
    %11 = vector.shape_cast %10 : vector<4x1x4x4xf32> to vector<4x4x4xf32>
    %12 = arith.addf %9, %11 : vector<4x4x4xf32>
    %cst_7 = arith.constant dense<0xFF800000> : vector<4x4xf32>
    %13 = vector.multi_reduction <maximumf>, %12, %cst_7 [2] : vector<4x4x4xf32> to vector<4x4xf32>
    %14 = vector.shape_cast %13 : vector<4x4xf32> to vector<4x4x1xf32>
    %15 = vector.broadcast %14 : vector<4x4x1xf32> to vector<4x4x4xf32>
    %16 = arith.subf %12, %15 : vector<4x4x4xf32>
    %17 = math.exp %16 : vector<4x4x4xf32>
    %cst_8 = arith.constant dense<0.000000e+00> : vector<4x4xf32>
    %18 = vector.multi_reduction <add>, %17, %cst_8 [2] : vector<4x4x4xf32> to vector<4x4xf32>
    %19 = vector.shape_cast %18 : vector<4x4xf32> to vector<4x4x1xf32>
    %20 = tpu.reciprocal %19 {approx = true} : vector<4x4x1xf32> -> vector<4x4x1xf32>
    %21 = vector.broadcast %20 : vector<4x4x1xf32> to vector<4x4x4xf32>
    %22 = arith.mulf %17, %21 : vector<4x4x4xf32>
    %23 = arith.truncf %22 : vector<4x4x4xf32> to vector<4x4x4xbf16>
    %24 = arith.truncf %6 : vector<4x4x16xf32> to vector<4x4x16xbf16>
    "tpu.trace_start"() <{level = 10 : i32, message = "wqk,wkd->wqd"}> : () -> ()
    %cst_9 = arith.constant dense<0.000000e+00> : vector<4x4x16xf32>
    %25 = tpu.matmul %23, %24, %cst_9 {dimension_numbers = #tpu.dot_dimension_numbers<[2], [1], [1], [2], [0, 0, 0, 1, 1, 2], [0], [0]>} : vector<4x4x4xbf16>, vector<4x4x16xbf16>, vector<4x4x16xf32> -> vector<4x4x16xf32>
    "tpu.trace_stop"() : () -> ()
    %c0_10 = arith.constant 0 : index
    %c0_11 = arith.constant 0 : index
    %c0_12 = arith.constant 0 : index
    %26 = vector.load %arg3[%c0_10, %c0_11, %c0_12] : memref<4x4x32xf32, #tpu.memory_space<vmem>>, vector<4x4x16xf32>
    tpu.vector_store %arg3[%c0_10, %c0_11, %c0_12], %25 {strides = array<i32>} : memref<4x4x32xf32, #tpu.memory_space<vmem>>, vector<4x4x16xf32>,
    %27 = vector.extract_strided_slice %0 {offsets = [0, 0, 16], sizes = [4, 4, 16], strides = [1, 1, 1]} : vector<4x4x96xf32> to vector<4x4x16xf32>
    %cst_13 = arith.constant 2.500000e-01 : f32
    %28 = vector.broadcast %cst_13 : f32 to vector<4x4x16xf32>
    %29 = arith.mulf %27, %28 : vector<4x4x16xf32>
    %30 = vector.extract_strided_slice %0 {offsets = [0, 0, 48], sizes = [4, 4, 16], strides = [1, 1, 1]} : vector<4x4x96xf32> to vector<4x4x16xf32>
    %31 = vector.extract_strided_slice %0 {offsets = [0, 0, 80], sizes = [4, 4, 16], strides = [1, 1, 1]} : vector<4x4x96xf32> to vector<4x4x16xf32>
    %32 = arith.truncf %29 : vector<4x4x16xf32> to vector<4x4x16xbf16>
    %33 = arith.truncf %30 : vector<4x4x16xf32> to vector<4x4x16xbf16>
    "tpu.trace_start"() <{level = 10 : i32, message = "wqd,wkd->wqk"}> : () -> ()
    %cst_14 = arith.constant dense<0.000000e+00> : vector<4x4x4xf32>
    %34 = tpu.matmul %32, %33, %cst_14 {dimension_numbers = #tpu.dot_dimension_numbers<[2], [2], [1], [1], [0, 0, 0, 1, 1, 1], [0], [0]>} : vector<4x4x16xbf16>, vector<4x4x16xbf16>, vector<4x4x4xf32> -> vector<4x4x4xf32>
    "tpu.trace_stop"() : () -> ()
    %35 = vector.extract_strided_slice %1 {offsets = [0, 1, 0, 0], sizes = [4, 1, 4, 4], strides = [1, 1, 1, 1]} : vector<4x2x4x4xf32> to vector<4x1x4x4xf32>
    %36 = vector.shape_cast %35 : vector<4x1x4x4xf32> to vector<4x4x4xf32>
    %37 = arith.addf %34, %36 : vector<4x4x4xf32>
    %cst_15 = arith.constant dense<0xFF800000> : vector<4x4xf32>
    %38 = vector.multi_reduction <maximumf>, %37, %cst_15 [2] : vector<4x4x4xf32> to vector<4x4xf32>
    %39 = vector.shape_cast %38 : vector<4x4xf32> to vector<4x4x1xf32>
    %40 = vector.broadcast %39 : vector<4x4x1xf32> to vector<4x4x4xf32>
    %41 = arith.subf %37, %40 : vector<4x4x4xf32>
    %42 = math.exp %41 : vector<4x4x4xf32>
    %cst_16 = arith.constant dense<0.000000e+00> : vector<4x4xf32>
    %43 = vector.multi_reduction <add>, %42, %cst_16 [2] : vector<4x4x4xf32> to vector<4x4xf32>
    %44 = vector.shape_cast %43 : vector<4x4xf32> to vector<4x4x1xf32>
    %45 = tpu.reciprocal %44 {approx = true} : vector<4x4x1xf32> -> vector<4x4x1xf32>
    %46 = vector.broadcast %45 : vector<4x4x1xf32> to vector<4x4x4xf32>
    %47 = arith.mulf %42, %46 : vector<4x4x4xf32>
    %48 = arith.truncf %47 : vector<4x4x4xf32> to vector<4x4x4xbf16>
    %49 = arith.truncf %31 : vector<4x4x16xf32> to vector<4x4x16xbf16>
    "tpu.trace_start"() <{level = 10 : i32, message = "wqk,wkd->wqd"}> : () -> ()
    %cst_17 = arith.constant dense<0.000000e+00> : vector<4x4x16xf32>
    %50 = tpu.matmul %48, %49, %cst_17 {dimension_numbers = #tpu.dot_dimension_numbers<[2], [1], [1], [2], [0, 0, 0, 1, 1, 2], [0], [0]>} : vector<4x4x4xbf16>, vector<4x4x16xbf16>, vector<4x4x16xf32> -> vector<4x4x16xf32>
    "tpu.trace_stop"() : () -> ()
    %c0_18 = arith.constant 0 : index
    %c0_19 = arith.constant 0 : index
    %c16 = arith.constant 16 : index
    %51 = vector.load %arg3[%c0_18, %c0_19, %c16] : memref<4x4x32xf32, #tpu.memory_space<vmem>>, vector<4x4x16xf32>
    tpu.vector_store %arg3[%c0_18, %c0_19, %c16], %50 {strides = array<i32>} : memref<4x4x32xf32, #tpu.memory_space<vmem>>, vector<4x4x16xf32>,
    return
  }
  func.func @transform_0(%arg0: i32) -> (i32, i32, i32) {
    %c0_i32 = arith.constant 0 : i32
    %c0_i32_0 = arith.constant 0 : i32
    %c0_i32_1 = arith.constant 0 : i32
    return %arg0, %c0_i32, %c0_i32_0 : i32, i32, i32
  }
  func.func @transform_1(%arg0: i32) -> (i32, i32, i32, i32) {
    %c0_i32 = arith.constant 0 : i32
    %c0_i32_0 = arith.constant 0 : i32
    %c0_i32_1 = arith.constant 0 : i32
    %c0_i32_2 = arith.constant 0 : i32
    %c0_i32_3 = arith.constant 0 : i32
    return %c0_i32, %c0_i32_0, %c0_i32_1, %c0_i32_2 : i32, i32, i32, i32
  }
  func.func @transform_2(%arg0: i32) -> (i32, i32, i32) {
    %c0_i32 = arith.constant 0 : i32
    %c0_i32_0 = arith.constant 0 : i32
    %c0_i32_1 = arith.constant 0 : i32
    return %arg0, %c0_i32, %c0_i32_0 : i32, i32, i32
  }
}

module attributes {stable_mosaic.version = 11 : i64} {
  func.func @kernel(%arg0: i32, %arg1: memref<32x128xf32, #tpu.memory_space<vmem>>, %arg2: memref<128x32xbf16, #tpu.memory_space<vmem>>, %arg3: memref<1x32xf32, #tpu.memory_space<vmem>>, %arg4: memref<32x32xf32, #tpu.memory_space<vmem>>) attributes {dimension_semantics = [#tpu.dimension_semantics<parallel>], iteration_bounds = array<i64: 1>, scalar_prefetch = 0 : i64, scratch_operands = 0 : i64, tpu.core_type = #tpu.core_type<tc>, window_params = [{transform_indices = @transform_0, window_bounds = array<i64: 32, 128>}, {pipeline_mode = #tpu.pipeline_mode<synchronous>, transform_indices = @transform_1, window_bounds = array<i64: 128, 32>}, {pipeline_mode = #tpu.pipeline_mode<synchronous>, transform_indices = @transform_2, window_bounds = array<i64: 1, 32>}, {transform_indices = @transform_3, window_bounds = array<i64: 32, 32>}]} {
    %c0 = arith.constant 0 : index
    %c0_0 = arith.constant 0 : index
    %0 = vector.load %arg1[%c0, %c0_0] : memref<32x128xf32, #tpu.memory_space<vmem>>, vector<32x128xf32>
    %1 = arith.truncf %0 : vector<32x128xf32> to vector<32x128xbf16>
    %c0_1 = arith.constant 0 : index
    %c0_2 = arith.constant 0 : index
    %2 = vector.load %arg2[%c0_1, %c0_2] : memref<128x32xbf16, #tpu.memory_space<vmem>>, vector<128x32xbf16>
    %cst = arith.constant dense<0.000000e+00> : vector<32x32xf32>
    %3 = tpu.matmul %1, %2, %cst {dimension_numbers = #tpu.dot_dimension_numbers<[1], [0], [0], [1], [0, 0, 1, 1], [], []>} : vector<32x128xbf16>, vector<128x32xbf16>, vector<32x32xf32> -> vector<32x32xf32>
    %c0_3 = arith.constant 0 : index
    %c0_4 = arith.constant 0 : index
    %4 = vector.load %arg3[%c0_3, %c0_4] : memref<1x32xf32, #tpu.memory_space<vmem>>, vector<1x32xf32>
    %5 = vector.broadcast %4 : vector<1x32xf32> to vector<32x32xf32>
    %6 = arith.addf %3, %5 : vector<32x32xf32>
    %c0_5 = arith.constant 0 : index
    %c0_6 = arith.constant 0 : index
    %7 = vector.load %arg4[%c0_5, %c0_6] : memref<32x32xf32, #tpu.memory_space<vmem>>, vector<32x32xf32>
    tpu.vector_store %arg4[%c0_5, %c0_6], %6 {strides = array<i32>} : memref<32x32xf32, #tpu.memory_space<vmem>>, vector<32x32xf32>,
    return
  }
  func.func @transform_0(%arg0: i32) -> (i32, i32) {
    %c0_i32 = arith.constant 0 : i32
    %c0_i32_0 = arith.constant 0 : i32
    return %arg0, %c0_i32 : i32, i32
  }
  func.func @transform_1(%arg0: i32) -> (i32, i32) {
    %c0_i32 = arith.constant 0 : i32
    %c0_i32_0 = arith.constant 0 : i32
    %c0_i32_1 = arith.constant 0 : i32
    return %c0_i32, %c0_i32_0 : i32, i32
  }
  func.func @transform_2(%arg0: i32) -> (i32, i32) {
    %c0_i32 = arith.constant 0 : i32
    %c0_i32_0 = arith.constant 0 : i32
    %c0_i32_1 = arith.constant 0 : i32
    return %c0_i32, %c0_i32_0 : i32, i32
  }
  func.func @transform_3(%arg0: i32) -> (i32, i32) {
    %c0_i32 = arith.constant 0 : i32
    %c0_i32_0 = arith.constant 0 : i32
    return %arg0, %c0_i32 : i32, i32
  }
}

module attributes {stable_mosaic.version = 11 : i64} {
  func.func @kernel(%arg0: i32, %arg1: memref<8x128xf32, #tpu.memory_space<vmem>>, %arg2: memref<1x128xf32, #tpu.memory_space<vmem>>, %arg3: memref<1x128xf32, #tpu.memory_space<vmem>>, %arg4: memref<128x64xbf16, #tpu.memory_space<vmem>>, %arg5: memref<8x64xf32, #tpu.memory_space<vmem>>) attributes {dimension_semantics = [#tpu.dimension_semantics<parallel>], iteration_bounds = array<i64: 1>, scalar_prefetch = 0 : i64, scratch_operands = 0 : i64, tpu.core_type = #tpu.core_type<tc>, window_params = [{transform_indices = @transform_0, window_bounds = array<i64: 8, 128>}, {pipeline_mode = #tpu.pipeline_mode<synchronous>, transform_indices = @transform_1, window_bounds = array<i64: 1, 128>}, {pipeline_mode = #tpu.pipeline_mode<synchronous>, transform_indices = @transform_2, window_bounds = array<i64: 1, 128>}, {pipeline_mode = #tpu.pipeline_mode<synchronous>, transform_indices = @transform_3, window_bounds = array<i64: 128, 64>}, {transform_indices = @transform_4, window_bounds = array<i64: 8, 64>}]} {
    %c0 = arith.constant 0 : index
    %c0_0 = arith.constant 0 : index
    %0 = vector.load %arg1[%c0, %c0_0] : memref<8x128xf32, #tpu.memory_space<vmem>>, vector<8x128xf32>
    %cst = arith.constant dense<0.000000e+00> : vector<8xf32>
    %1 = vector.multi_reduction <add>, %0, %cst [1] : vector<8x128xf32> to vector<8xf32>
    %2 = vector.shape_cast %1 : vector<8xf32> to vector<8x1xf32>
    %cst_1 = arith.constant 1.280000e+02 : f32
    %3 = vector.broadcast %cst_1 : f32 to vector<8x1xf32>
    %4 = arith.divf %2, %3 : vector<8x1xf32>
    %5 = vector.broadcast %4 : vector<8x1xf32> to vector<8x128xf32>
    %6 = arith.subf %0, %5 : vector<8x128xf32>
    %7 = arith.mulf %6, %6 : vector<8x128xf32>
    %cst_2 = arith.constant dense<0.000000e+00> : vector<8xf32>
    %8 = vector.multi_reduction <add>, %7, %cst_2 [1] : vector<8x128xf32> to vector<8xf32>
    %9 = vector.shape_cast %8 : vector<8xf32> to vector<8x1xf32>
    %cst_3 = arith.constant 1.280000e+02 : f32
    %10 = vector.broadcast %cst_3 : f32 to vector<8x1xf32>
    %11 = arith.divf %9, %10 : vector<8x1xf32>
    %12 = vector.broadcast %4 : vector<8x1xf32> to vector<8x128xf32>
    %13 = arith.subf %0, %12 : vector<8x128xf32>
    %cst_4 = arith.constant 9.99999974E-6 : f32
    %14 = vector.broadcast %cst_4 : f32 to vector<8x1xf32>
    %15 = arith.addf %11, %14 : vector<8x1xf32>
    %16 = math.rsqrt %15 : vector<8x1xf32>
    %17 = vector.broadcast %16 : vector<8x1xf32> to vector<8x128xf32>
    %18 = arith.mulf %13, %17 : vector<8x128xf32>
    %c0_5 = arith.constant 0 : index
    %c0_6 = arith.constant 0 : index
    %19 = vector.load %arg2[%c0_5, %c0_6] : memref<1x128xf32, #tpu.memory_space<vmem>>, vector<1x128xf32>
    %20 = vector.broadcast %19 : vector<1x128xf32> to vector<8x128xf32>
    %21 = arith.mulf %18, %20 : vector<8x128xf32>
    %c0_7 = arith.constant 0 : index
    %c0_8 = arith.constant 0 : index
    %22 = vector.load %arg3[%c0_7, %c0_8] : memref<1x128xf32, #tpu.memory_space<vmem>>, vector<1x128xf32>
    %23 = vector.broadcast %22 : vector<1x128xf32> to vector<8x128xf32>
    %24 = arith.addf %21, %23 : vector<8x128xf32>
    %25 = arith.truncf %24 : vector<8x128xf32> to vector<8x128xbf16>
    %c0_9 = arith.constant 0 : index
    %c0_10 = arith.constant 0 : index
    %26 = vector.load %arg4[%c0_9, %c0_10] : memref<128x64xbf16, #tpu.memory_space<vmem>>, vector<128x64xbf16>
    %cst_11 = arith.constant dense<0.000000e+00> : vector<8x64xf32>
    %27 = tpu.matmul %25, %26, %cst_11 {dimension_numbers = #tpu.dot_dimension_numbers<[1], [0], [0], [1], [0, 0, 1, 1], [], []>} : vector<8x128xbf16>, vector<128x64xbf16>, vector<8x64xf32> -> vector<8x64xf32>
    %c0_12 = arith.constant 0 : index
    %c0_13 = arith.constant 0 : index
    %28 = vector.load %arg5[%c0_12, %c0_13] : memref<8x64xf32, #tpu.memory_space<vmem>>, vector<8x64xf32>
    tpu.vector_store %arg5[%c0_12, %c0_13], %27 {strides = array<i32>} : memref<8x64xf32, #tpu.memory_space<vmem>>, vector<8x64xf32>,
    return
  }
  func.func @transform_0(%arg0: i32) -> (i32, i32) {
    %c0_i32 = arith.constant 0 : i32
    %c0_i32_0 = arith.constant 0 : i32
    return %arg0, %c0_i32 : i32, i32
  }
  func.func @transform_1(%arg0: i32) -> (i32, i32) {
    %c0_i32 = arith.constant 0 : i32
    %c0_i32_0 = arith.constant 0 : i32
    %c0_i32_1 = arith.constant 0 : i32
    return %c0_i32, %c0_i32_0 : i32, i32
  }
  func.func @transform_2(%arg0: i32) -> (i32, i32) {
    %c0_i32 = arith.constant 0 : i32
    %c0_i32_0 = arith.constant 0 : i32
    %c0_i32_1 = arith.constant 0 : i32
    return %c0_i32, %c0_i32_0 : i32, i32
  }
  func.func @transform_3(%arg0: i32) -> (i32, i32) {
    %c0_i32 = arith.constant 0 : i32
    %c0_i32_0 = arith.constant 0 : i32
    %c0_i32_1 = arith.constant 0 : i32
    return %c0_i32, %c0_i32_0 : i32, i32
  }
  func.func @transform_4(%arg0: i32) -> (i32, i32) {
    %c0_i32 = arith.constant 0 : i32
    %c0_i32_0 = arith.constant 0 : i32
    return %arg0, %c0_i32 : i32, i32
  }
}

module attributes {stable_mosaic.version = 11 : i64} {
  func.func @kernel(%arg0: i32, %arg1: memref<8x64xf32, #tpu.memory_space<vmem>>, %arg2: memref<1x64xf32, #tpu.memory_space<vmem>>, %arg3: memref<1x64xf32, #tpu.memory_space<vmem>>, %arg4: memref<64x192xbf16, #tpu.memory_space<vmem>>, %arg5: memref<1x192xf32, #tpu.memory_space<vmem>>, %arg6: memref<8x192xf32, #tpu.memory_space<vmem>>) attributes {dimension_semantics = [#tpu.dimension_semantics<parallel>], iteration_bounds = array<i64: 1>, scalar_prefetch = 0 : i64, scratch_operands = 0 : i64, tpu.core_type = #tpu.core_type<tc>, window_params = [{transform_indices = @transform_0, window_bounds = array<i64: 8, 64>}, {pipeline_mode = #tpu.pipeline_mode<synchronous>, transform_indices = @transform_1, window_bounds = array<i64: 1, 64>}, {pipeline_mode = #tpu.pipeline_mode<synchronous>, transform_indices = @transform_2, window_bounds = array<i64: 1, 64>}, {pipeline_mode = #tpu.pipeline_mode<synchronous>, transform_indices = @transform_3, window_bounds = array<i64: 64, 192>}, {pipeline_mode = #tpu.pipeline_mode<synchronous>, transform_indices = @transform_4, window_bounds = array<i64: 1, 192>}, {transform_indices = @transform_5, window_bounds = array<i64: 8, 192>}]} {
    %c0 = arith.constant 0 : index
    %c0_0 = arith.constant 0 : index
    %0 = vector.load %arg1[%c0, %c0_0] : memref<8x64xf32, #tpu.memory_space<vmem>>, vector<8x64xf32>
    %cst = arith.constant dense<0.000000e+00> : vector<8xf32>
    %1 = vector.multi_reduction <add>, %0, %cst [1] : vector<8x64xf32> to vector<8xf32>
    %2 = vector.shape_cast %1 : vector<8xf32> to vector<8x1xf32>
    %cst_1 = arith.constant 6.400000e+01 : f32
    %3 = vector.broadcast %cst_1 : f32 to vector<8x1xf32>
    %4 = arith.divf %2, %3 : vector<8x1xf32>
    %5 = vector.broadcast %4 : vector<8x1xf32> to vector<8x64xf32>
    %6 = arith.subf %0, %5 : vector<8x64xf32>
    %7 = arith.mulf %6, %6 : vector<8x64xf32>
    %cst_2 = arith.constant dense<0.000000e+00> : vector<8xf32>
    %8 = vector.multi_reduction <add>, %7, %cst_2 [1] : vector<8x64xf32> to vector<8xf32>
    %9 = vector.shape_cast %8 : vector<8xf32> to vector<8x1xf32>
    %cst_3 = arith.constant 6.400000e+01 : f32
    %10 = vector.broadcast %cst_3 : f32 to vector<8x1xf32>
    %11 = arith.divf %9, %10 : vector<8x1xf32>
    %12 = vector.broadcast %4 : vector<8x1xf32> to vector<8x64xf32>
    %13 = arith.subf %0, %12 : vector<8x64xf32>
    %cst_4 = arith.constant 9.99999974E-6 : f32
    %14 = vector.broadcast %cst_4 : f32 to vector<8x1xf32>
    %15 = arith.addf %11, %14 : vector<8x1xf32>
    %16 = math.rsqrt %15 : vector<8x1xf32>
    %17 = vector.broadcast %16 : vector<8x1xf32> to vector<8x64xf32>
    %18 = arith.mulf %13, %17 : vector<8x64xf32>
    %c0_5 = arith.constant 0 : index
    %c0_6 = arith.constant 0 : index
    %19 = vector.load %arg2[%c0_5, %c0_6] : memref<1x64xf32, #tpu.memory_space<vmem>>, vector<1x64xf32>
    %20 = vector.broadcast %19 : vector<1x64xf32> to vector<8x64xf32>
    %21 = arith.mulf %18, %20 : vector<8x64xf32>
    %c0_7 = arith.constant 0 : index
    %c0_8 = arith.constant 0 : index
    %22 = vector.load %arg3[%c0_7, %c0_8] : memref<1x64xf32, #tpu.memory_space<vmem>>, vector<1x64xf32>
    %23 = vector.broadcast %22 : vector<1x64xf32> to vector<8x64xf32>
    %24 = arith.addf %21, %23 : vector<8x64xf32>
    %25 = arith.truncf %24 : vector<8x64xf32> to vector<8x64xbf16>
    %c0_9 = arith.constant 0 : index
    %c0_10 = arith.constant 0 : index
    %26 = vector.load %arg4[%c0_9, %c0_10] : memref<64x192xbf16, #tpu.memory_space<vmem>>, vector<64x192xbf16>
    %cst_11 = arith.constant dense<0.000000e+00> : vector<8x192xf32>
    %27 = tpu.matmul %25, %26, %cst_11 {dimension_numbers = #tpu.dot_dimension_numbers<[1], [0], [0], [1], [0, 0, 1, 1], [], []>} : vector<8x64xbf16>, vector<64x192xbf16>, vector<8x192xf32> -> vector<8x192xf32>
    %c0_12 = arith.constant 0 : index
    %c0_13 = arith.constant 0 : index
    %28 = vector.load %arg5[%c0_12, %c0_13] : memref<1x192xf32, #tpu.memory_space<vmem>>, vector<1x192xf32>
    %29 = vector.broadcast %28 : vector<1x192xf32> to vector<8x192xf32>
    %30 = arith.addf %27, %29 : vector<8x192xf32>
    %c0_14 = arith.constant 0 : index
    %c0_15 = arith.constant 0 : index
    %31 = vector.load %arg6[%c0_14, %c0_15] : memref<8x192xf32, #tpu.memory_space<vmem>>, vector<8x192xf32>
    tpu.vector_store %arg6[%c0_14, %c0_15], %30 {strides = array<i32>} : memref<8x192xf32, #tpu.memory_space<vmem>>, vector<8x192xf32>,
    return
  }
  func.func @transform_0(%arg0: i32) -> (i32, i32) {
    %c0_i32 = arith.constant 0 : i32
    %c0_i32_0 = arith.constant 0 : i32
    return %arg0, %c0_i32 : i32, i32
  }
  func.func @transform_1(%arg0: i32) -> (i32, i32) {
    %c0_i32 = arith.constant 0 : i32
    %c0_i32_0 = arith.constant 0 : i32
    %c0_i32_1 = arith.constant 0 : i32
    return %c0_i32, %c0_i32_0 : i32, i32
  }
  func.func @transform_2(%arg0: i32) -> (i32, i32) {
    %c0_i32 = arith.constant 0 : i32
    %c0_i32_0 = arith.constant 0 : i32
    %c0_i32_1 = arith.constant 0 : i32
    return %c0_i32, %c0_i32_0 : i32, i32
  }
  func.func @transform_3(%arg0: i32) -> (i32, i32) {
    %c0_i32 = arith.constant 0 : i32
    %c0_i32_0 = arith.constant 0 : i32
    %c0_i32_1 = arith.constant 0 : i32
    return %c0_i32, %c0_i32_0 : i32, i32
  }
  func.func @transform_4(%arg0: i32) -> (i32, i32) {
    %c0_i32 = arith.constant 0 : i32
    %c0_i32_0 = arith.constant 0 : i32
    %c0_i32_1 = arith.constant 0 : i32
    return %c0_i32, %c0_i32_0 : i32, i32
  }
  func.func @transform_5(%arg0: i32) -> (i32, i32) {
    %c0_i32 = arith.constant 0 : i32
    %c0_i32_0 = arith.constant 0 : i32
    return %arg0, %c0_i32 : i32, i32
  }
}

module attributes {stable_mosaic.version = 11 : i64} {
  func.func @kernel(%arg0: i32, %arg1: memref<8x64xf32, #tpu.memory_space<vmem>>, %arg2: memref<64x64xbf16, #tpu.memory_space<vmem>>, %arg3: memref<1x64xf32, #tpu.memory_space<vmem>>, %arg4: memref<8x64xf32, #tpu.memory_space<vmem>>) attributes {dimension_semantics = [#tpu.dimension_semantics<parallel>], iteration_bounds = array<i64: 1>, scalar_prefetch = 0 : i64, scratch_operands = 0 : i64, tpu.core_type = #tpu.core_type<tc>, window_params = [{transform_indices = @transform_0, window_bounds = array<i64: 8, 64>}, {pipeline_mode = #tpu.pipeline_mode<synchronous>, transform_indices = @transform_1, window_bounds = array<i64: 64, 64>}, {pipeline_mode = #tpu.pipeline_mode<synchronous>, transform_indices = @transform_2, window_bounds = array<i64: 1, 64>}, {transform_indices = @transform_3, window_bounds = array<i64: 8, 64>}]} {
    %c0 = arith.constant 0 : index
    %c0_0 = arith.constant 0 : index
    %0 = vector.load %arg1[%c0, %c0_0] : memref<8x64xf32, #tpu.memory_space<vmem>>, vector<8x64xf32>
    %1 = arith.truncf %0 : vector<8x64xf32> to vector<8x64xbf16>
    %c0_1 = arith.constant 0 : index
    %c0_2 = arith.constant 0 : index
    %2 = vector.load %arg2[%c0_1, %c0_2] : memref<64x64xbf16, #tpu.memory_space<vmem>>, vector<64x64xbf16>
    %cst = arith.constant dense<0.000000e+00> : vector<8x64xf32>
    %3 = tpu.matmul %1, %2, %cst {dimension_numbers = #tpu.dot_dimension_numbers<[1], [0], [0], [1], [0, 0, 1, 1], [], []>} : vector<8x64xbf16>, vector<64x64xbf16>, vector<8x64xf32> -> vector<8x64xf32>
    %c0_3 = arith.constant 0 : index
    %c0_4 = arith.constant 0 : index
    %4 = vector.load %arg3[%c0_3, %c0_4] : memref<1x64xf32, #tpu.memory_space<vmem>>, vector<1x64xf32>
    %5 = vector.broadcast %4 : vector<1x64xf32> to vector<8x64xf32>
    %6 = arith.addf %3, %5 : vector<8x64xf32>
    %c0_5 = arith.constant 0 : index
    %c0_6 = arith.constant 0 : index
    %7 = vector.load %arg4[%c0_5, %c0_6] : memref<8x64xf32, #tpu.memory_space<vmem>>, vector<8x64xf32>
    tpu.vector_store %arg4[%c0_5, %c0_6], %6 {strides = array<i32>} : memref<8x64xf32, #tpu.memory_space<vmem>>, vector<8x64xf32>,
    return
  }
  func.func @transform_0(%arg0: i32) -> (i32, i32) {
    %c0_i32 = arith.constant 0 : i32
    %c0_i32_0 = arith.constant 0 : i32
    return %arg0, %c0_i32 : i32, i32
  }
  func.func @transform_1(%arg0: i32) -> (i32, i32) {
    %c0_i32 = arith.constant 0 : i32
    %c0_i32_0 = arith.constant 0 : i32
    %c0_i32_1 = arith.constant 0 : i32
    return %c0_i32, %c0_i32_0 : i32, i32
  }
  func.func @transform_2(%arg0: i32) -> (i32, i32) {
    %c0_i32 = arith.constant 0 : i32
    %c0_i32_0 = arith.constant 0 : i32
    %c0_i32_1 = arith.constant 0 : i32
    return %c0_i32, %c0_i32_0 : i32, i32
  }
  func.func @transform_3(%arg0: i32) -> (i32, i32) {
    %c0_i32 = arith.constant 0 : i32
    %c0_i32_0 = arith.constant 0 : i32
    return %arg0, %c0_i32 : i32, i32
  }
}

module attributes {stable_mosaic.version = 11 : i64} {
  func.func @_window_attn_kernel(%arg0: i32, %arg1: memref<1x4x192xf32, #tpu.memory_space<vmem>>, %arg2: memref<1x4x4x4xf32, #tpu.memory_space<vmem>>, %arg3: memref<1x4x64xf32, #tpu.memory_space<vmem>>) attributes {dimension_semantics = [#tpu.dimension_semantics<parallel>], iteration_bounds = array<i64: 2>, scalar_prefetch = 0 : i64, scratch_operands = 0 : i64, tpu.core_type = #tpu.core_type<tc>, window_params = [{transform_indices = @transform_0, window_bounds = array<i64: 1, 4, 192>}, {pipeline_mode = #tpu.pipeline_mode<synchronous>, transform_indices = @transform_1, window_bounds = array<i64: 1, 4, 4, 4>}, {transform_indices = @transform_2, window_bounds = array<i64: 1, 4, 64>}]} {
    %c0 = arith.constant 0 : index
    %c0_0 = arith.constant 0 : index
    %c0_1 = arith.constant 0 : index
    %0 = vector.load %arg1[%c0, %c0_0, %c0_1] : memref<1x4x192xf32, #tpu.memory_space<vmem>>, vector<1x4x192xf32>
    %c0_2 = arith.constant 0 : index
    %c0_3 = arith.constant 0 : index
    %c0_4 = arith.constant 0 : index
    %c0_5 = arith.constant 0 : index
    %1 = vector.load %arg2[%c0_2, %c0_3, %c0_4, %c0_5] : memref<1x4x4x4xf32, #tpu.memory_space<vmem>>, vector<1x4x4x4xf32>
    %2 = vector.extract_strided_slice %0 {offsets = [0, 0, 0], sizes = [1, 4, 16], strides = [1, 1, 1]} : vector<1x4x192xf32> to vector<1x4x16xf32>
    %cst = arith.constant 2.500000e-01 : f32
    %3 = vector.broadcast %cst : f32 to vector<1x4x16xf32>
    %4 = arith.mulf %2, %3 : vector<1x4x16xf32>
    %5 = vector.extract_strided_slice %0 {offsets = [0, 0, 64], sizes = [1, 4, 16], strides = [1, 1, 1]} : vector<1x4x192xf32> to vector<1x4x16xf32>
    %6 = vector.extract_strided_slice %0 {offsets = [0, 0, 128], sizes = [1, 4, 16], strides = [1, 1, 1]} : vector<1x4x192xf32> to vector<1x4x16xf32>
    %7 = arith.truncf %4 : vector<1x4x16xf32> to vector<1x4x16xbf16>
    %8 = arith.truncf %5 : vector<1x4x16xf32> to vector<1x4x16xbf16>
    "tpu.trace_start"() <{level = 10 : i32, message = "wqd,wkd->wqk"}> : () -> ()
    %cst_6 = arith.constant dense<0.000000e+00> : vector<1x4x4xf32>
    %9 = tpu.matmul %7, %8, %cst_6 {dimension_numbers = #tpu.dot_dimension_numbers<[2], [2], [1], [1], [0, 0, 0, 1, 1, 1], [0], [0]>} : vector<1x4x16xbf16>, vector<1x4x16xbf16>, vector<1x4x4xf32> -> vector<1x4x4xf32>
    "tpu.trace_stop"() : () -> ()
    %10 = vector.extract_strided_slice %1 {offsets = [0, 0, 0, 0], sizes = [1, 1, 4, 4], strides = [1, 1, 1, 1]} : vector<1x4x4x4xf32> to vector<1x1x4x4xf32>
    %11 = vector.shape_cast %10 : vector<1x1x4x4xf32> to vector<1x4x4xf32>
    %12 = arith.addf %9, %11 : vector<1x4x4xf32>
    %cst_7 = arith.constant dense<0xFF800000> : vector<1x4xf32>
    %13 = vector.multi_reduction <maximumf>, %12, %cst_7 [2] : vector<1x4x4xf32> to vector<1x4xf32>
    %14 = vector.shape_cast %13 : vector<1x4xf32> to vector<1x4x1xf32>
    %15 = vector.broadcast %14 : vector<1x4x1xf32> to vector<1x4x4xf32>
    %16 = arith.subf %12, %15 : vector<1x4x4xf32>
    %17 = math.exp %16 : vector<1x4x4xf32>
    %cst_8 = arith.constant dense<0.000000e+00> : vector<1x4xf32>
    %18 = vector.multi_reduction <add>, %17, %cst_8 [2] : vector<1x4x4xf32> to vector<1x4xf32>
    %19 = vector.shape_cast %18 : vector<1x4xf32> to vector<1x4x1xf32>
    %20 = tpu.reciprocal %19 {approx = true} : vector<1x4x1xf32> -> vector<1x4x1xf32>
    %21 = vector.broadcast %20 : vector<1x4x1xf32> to vector<1x4x4xf32>
    %22 = arith.mulf %17, %21 : vector<1x4x4xf32>
    %23 = arith.truncf %22 : vector<1x4x4xf32> to vector<1x4x4xbf16>
    %24 = arith.truncf %6 : vector<1x4x16xf32> to vector<1x4x16xbf16>
    "tpu.trace_start"() <{level = 10 : i32, message = "wqk,wkd->wqd"}> : () -> ()
    %cst_9 = arith.constant dense<0.000000e+00> : vector<1x4x16xf32>
    %25 = tpu.matmul %23, %24, %cst_9 {dimension_numbers = #tpu.dot_dimension_numbers<[2], [1], [1], [2], [0, 0, 0, 1, 1, 2], [0], [0]>} : vector<1x4x4xbf16>, vector<1x4x16xbf16>, vector<1x4x16xf32> -> vector<1x4x16xf32>
    "tpu.trace_stop"() : () -> ()
    %c0_10 = arith.constant 0 : index
    %c0_11 = arith.constant 0 : index
    %c0_12 = arith.constant 0 : index
    %26 = vector.load %arg3[%c0_10, %c0_11, %c0_12] : memref<1x4x64xf32, #tpu.memory_space<vmem>>, vector<1x4x16xf32>
    tpu.vector_store %arg3[%c0_10, %c0_11, %c0_12], %25 {strides = array<i32>} : memref<1x4x64xf32, #tpu.memory_space<vmem>>, vector<1x4x16xf32>,
    %27 = vector.extract_strided_slice %0 {offsets = [0, 0, 16], sizes = [1, 4, 16], strides = [1, 1, 1]} : vector<1x4x192xf32> to vector<1x4x16xf32>
    %cst_13 = arith.constant 2.500000e-01 : f32
    %28 = vector.broadcast %cst_13 : f32 to vector<1x4x16xf32>
    %29 = arith.mulf %27, %28 : vector<1x4x16xf32>
    %30 = vector.extract_strided_slice %0 {offsets = [0, 0, 80], sizes = [1, 4, 16], strides = [1, 1, 1]} : vector<1x4x192xf32> to vector<1x4x16xf32>
    %31 = vector.extract_strided_slice %0 {offsets = [0, 0, 144], sizes = [1, 4, 16], strides = [1, 1, 1]} : vector<1x4x192xf32> to vector<1x4x16xf32>
    %32 = arith.truncf %29 : vector<1x4x16xf32> to vector<1x4x16xbf16>
    %33 = arith.truncf %30 : vector<1x4x16xf32> to vector<1x4x16xbf16>
    "tpu.trace_start"() <{level = 10 : i32, message = "wqd,wkd->wqk"}> : () -> ()
    %cst_14 = arith.constant dense<0.000000e+00> : vector<1x4x4xf32>
    %34 = tpu.matmul %32, %33, %cst_14 {dimension_numbers = #tpu.dot_dimension_numbers<[2], [2], [1], [1], [0, 0, 0, 1, 1, 1], [0], [0]>} : vector<1x4x16xbf16>, vector<1x4x16xbf16>, vector<1x4x4xf32> -> vector<1x4x4xf32>
    "tpu.trace_stop"() : () -> ()
    %35 = vector.extract_strided_slice %1 {offsets = [0, 1, 0, 0], sizes = [1, 1, 4, 4], strides = [1, 1, 1, 1]} : vector<1x4x4x4xf32> to vector<1x1x4x4xf32>
    %36 = vector.shape_cast %35 : vector<1x1x4x4xf32> to vector<1x4x4xf32>
    %37 = arith.addf %34, %36 : vector<1x4x4xf32>
    %cst_15 = arith.constant dense<0xFF800000> : vector<1x4xf32>
    %38 = vector.multi_reduction <maximumf>, %37, %cst_15 [2] : vector<1x4x4xf32> to vector<1x4xf32>
    %39 = vector.shape_cast %38 : vector<1x4xf32> to vector<1x4x1xf32>
    %40 = vector.broadcast %39 : vector<1x4x1xf32> to vector<1x4x4xf32>
    %41 = arith.subf %37, %40 : vector<1x4x4xf32>
    %42 = math.exp %41 : vector<1x4x4xf32>
    %cst_16 = arith.constant dense<0.000000e+00> : vector<1x4xf32>
    %43 = vector.multi_reduction <add>, %42, %cst_16 [2] : vector<1x4x4xf32> to vector<1x4xf32>
    %44 = vector.shape_cast %43 : vector<1x4xf32> to vector<1x4x1xf32>
    %45 = tpu.reciprocal %44 {approx = true} : vector<1x4x1xf32> -> vector<1x4x1xf32>
    %46 = vector.broadcast %45 : vector<1x4x1xf32> to vector<1x4x4xf32>
    %47 = arith.mulf %42, %46 : vector<1x4x4xf32>
    %48 = arith.truncf %47 : vector<1x4x4xf32> to vector<1x4x4xbf16>
    %49 = arith.truncf %31 : vector<1x4x16xf32> to vector<1x4x16xbf16>
    "tpu.trace_start"() <{level = 10 : i32, message = "wqk,wkd->wqd"}> : () -> ()
    %cst_17 = arith.constant dense<0.000000e+00> : vector<1x4x16xf32>
    %50 = tpu.matmul %48, %49, %cst_17 {dimension_numbers = #tpu.dot_dimension_numbers<[2], [1], [1], [2], [0, 0, 0, 1, 1, 2], [0], [0]>} : vector<1x4x4xbf16>, vector<1x4x16xbf16>, vector<1x4x16xf32> -> vector<1x4x16xf32>
    "tpu.trace_stop"() : () -> ()
    %c0_18 = arith.constant 0 : index
    %c0_19 = arith.constant 0 : index
    %c16 = arith.constant 16 : index
    %51 = vector.load %arg3[%c0_18, %c0_19, %c16] : memref<1x4x64xf32, #tpu.memory_space<vmem>>, vector<1x4x16xf32>
    tpu.vector_store %arg3[%c0_18, %c0_19, %c16], %50 {strides = array<i32>} : memref<1x4x64xf32, #tpu.memory_space<vmem>>, vector<1x4x16xf32>,
    %52 = vector.extract_strided_slice %0 {offsets = [0, 0, 32], sizes = [1, 4, 16], strides = [1, 1, 1]} : vector<1x4x192xf32> to vector<1x4x16xf32>
    %cst_20 = arith.constant 2.500000e-01 : f32
    %53 = vector.broadcast %cst_20 : f32 to vector<1x4x16xf32>
    %54 = arith.mulf %52, %53 : vector<1x4x16xf32>
    %55 = vector.extract_strided_slice %0 {offsets = [0, 0, 96], sizes = [1, 4, 16], strides = [1, 1, 1]} : vector<1x4x192xf32> to vector<1x4x16xf32>
    %56 = vector.extract_strided_slice %0 {offsets = [0, 0, 160], sizes = [1, 4, 16], strides = [1, 1, 1]} : vector<1x4x192xf32> to vector<1x4x16xf32>
    %57 = arith.truncf %54 : vector<1x4x16xf32> to vector<1x4x16xbf16>
    %58 = arith.truncf %55 : vector<1x4x16xf32> to vector<1x4x16xbf16>
    "tpu.trace_start"() <{level = 10 : i32, message = "wqd,wkd->wqk"}> : () -> ()
    %cst_21 = arith.constant dense<0.000000e+00> : vector<1x4x4xf32>
    %59 = tpu.matmul %57, %58, %cst_21 {dimension_numbers = #tpu.dot_dimension_numbers<[2], [2], [1], [1], [0, 0, 0, 1, 1, 1], [0], [0]>} : vector<1x4x16xbf16>, vector<1x4x16xbf16>, vector<1x4x4xf32> -> vector<1x4x4xf32>
    "tpu.trace_stop"() : () -> ()
    %60 = vector.extract_strided_slice %1 {offsets = [0, 2, 0, 0], sizes = [1, 1, 4, 4], strides = [1, 1, 1, 1]} : vector<1x4x4x4xf32> to vector<1x1x4x4xf32>
    %61 = vector.shape_cast %60 : vector<1x1x4x4xf32> to vector<1x4x4xf32>
    %62 = arith.addf %59, %61 : vector<1x4x4xf32>
    %cst_22 = arith.constant dense<0xFF800000> : vector<1x4xf32>
    %63 = vector.multi_reduction <maximumf>, %62, %cst_22 [2] : vector<1x4x4xf32> to vector<1x4xf32>
    %64 = vector.shape_cast %63 : vector<1x4xf32> to vector<1x4x1xf32>
    %65 = vector.broadcast %64 : vector<1x4x1xf32> to vector<1x4x4xf32>
    %66 = arith.subf %62, %65 : vector<1x4x4xf32>
    %67 = math.exp %66 : vector<1x4x4xf32>
    %cst_23 = arith.constant dense<0.000000e+00> : vector<1x4xf32>
    %68 = vector.multi_reduction <add>, %67, %cst_23 [2] : vector<1x4x4xf32> to vector<1x4xf32>
    %69 = vector.shape_cast %68 : vector<1x4xf32> to vector<1x4x1xf32>
    %70 = tpu.reciprocal %69 {approx = true} : vector<1x4x1xf32> -> vector<1x4x1xf32>
    %71 = vector.broadcast %70 : vector<1x4x1xf32> to vector<1x4x4xf32>
    %72 = arith.mulf %67, %71 : vector<1x4x4xf32>
    %73 = arith.truncf %72 : vector<1x4x4xf32> to vector<1x4x4xbf16>
    %74 = arith.truncf %56 : vector<1x4x16xf32> to vector<1x4x16xbf16>
    "tpu.trace_start"() <{level = 10 : i32, message = "wqk,wkd->wqd"}> : () -> ()
    %cst_24 = arith.constant dense<0.000000e+00> : vector<1x4x16xf32>
    %75 = tpu.matmul %73, %74, %cst_24 {dimension_numbers = #tpu.dot_dimension_numbers<[2], [1], [1], [2], [0, 0, 0, 1, 1, 2], [0], [0]>} : vector<1x4x4xbf16>, vector<1x4x16xbf16>, vector<1x4x16xf32> -> vector<1x4x16xf32>
    "tpu.trace_stop"() : () -> ()
    %c0_25 = arith.constant 0 : index
    %c0_26 = arith.constant 0 : index
    %c32 = arith.constant 32 : index
    %76 = vector.load %arg3[%c0_25, %c0_26, %c32] : memref<1x4x64xf32, #tpu.memory_space<vmem>>, vector<1x4x16xf32>
    tpu.vector_store %arg3[%c0_25, %c0_26, %c32], %75 {strides = array<i32>} : memref<1x4x64xf32, #tpu.memory_space<vmem>>, vector<1x4x16xf32>,
    %77 = vector.extract_strided_slice %0 {offsets = [0, 0, 48], sizes = [1, 4, 16], strides = [1, 1, 1]} : vector<1x4x192xf32> to vector<1x4x16xf32>
    %cst_27 = arith.constant 2.500000e-01 : f32
    %78 = vector.broadcast %cst_27 : f32 to vector<1x4x16xf32>
    %79 = arith.mulf %77, %78 : vector<1x4x16xf32>
    %80 = vector.extract_strided_slice %0 {offsets = [0, 0, 112], sizes = [1, 4, 16], strides = [1, 1, 1]} : vector<1x4x192xf32> to vector<1x4x16xf32>
    %81 = vector.extract_strided_slice %0 {offsets = [0, 0, 176], sizes = [1, 4, 16], strides = [1, 1, 1]} : vector<1x4x192xf32> to vector<1x4x16xf32>
    %82 = arith.truncf %79 : vector<1x4x16xf32> to vector<1x4x16xbf16>
    %83 = arith.truncf %80 : vector<1x4x16xf32> to vector<1x4x16xbf16>
    "tpu.trace_start"() <{level = 10 : i32, message = "wqd,wkd->wqk"}> : () -> ()
    %cst_28 = arith.constant dense<0.000000e+00> : vector<1x4x4xf32>
    %84 = tpu.matmul %82, %83, %cst_28 {dimension_numbers = #tpu.dot_dimension_numbers<[2], [2], [1], [1], [0, 0, 0, 1, 1, 1], [0], [0]>} : vector<1x4x16xbf16>, vector<1x4x16xbf16>, vector<1x4x4xf32> -> vector<1x4x4xf32>
    "tpu.trace_stop"() : () -> ()
    %85 = vector.extract_strided_slice %1 {offsets = [0, 3, 0, 0], sizes = [1, 1, 4, 4], strides = [1, 1, 1, 1]} : vector<1x4x4x4xf32> to vector<1x1x4x4xf32>
    %86 = vector.shape_cast %85 : vector<1x1x4x4xf32> to vector<1x4x4xf32>
    %87 = arith.addf %84, %86 : vector<1x4x4xf32>
    %cst_29 = arith.constant dense<0xFF800000> : vector<1x4xf32>
    %88 = vector.multi_reduction <maximumf>, %87, %cst_29 [2] : vector<1x4x4xf32> to vector<1x4xf32>
    %89 = vector.shape_cast %88 : vector<1x4xf32> to vector<1x4x1xf32>
    %90 = vector.broadcast %89 : vector<1x4x1xf32> to vector<1x4x4xf32>
    %91 = arith.subf %87, %90 : vector<1x4x4xf32>
    %92 = math.exp %91 : vector<1x4x4xf32>
    %cst_30 = arith.constant dense<0.000000e+00> : vector<1x4xf32>
    %93 = vector.multi_reduction <add>, %92, %cst_30 [2] : vector<1x4x4xf32> to vector<1x4xf32>
    %94 = vector.shape_cast %93 : vector<1x4xf32> to vector<1x4x1xf32>
    %95 = tpu.reciprocal %94 {approx = true} : vector<1x4x1xf32> -> vector<1x4x1xf32>
    %96 = vector.broadcast %95 : vector<1x4x1xf32> to vector<1x4x4xf32>
    %97 = arith.mulf %92, %96 : vector<1x4x4xf32>
    %98 = arith.truncf %97 : vector<1x4x4xf32> to vector<1x4x4xbf16>
    %99 = arith.truncf %81 : vector<1x4x16xf32> to vector<1x4x16xbf16>
    "tpu.trace_start"() <{level = 10 : i32, message = "wqk,wkd->wqd"}> : () -> ()
    %cst_31 = arith.constant dense<0.000000e+00> : vector<1x4x16xf32>
    %100 = tpu.matmul %98, %99, %cst_31 {dimension_numbers = #tpu.dot_dimension_numbers<[2], [1], [1], [2], [0, 0, 0, 1, 1, 2], [0], [0]>} : vector<1x4x4xbf16>, vector<1x4x16xbf16>, vector<1x4x16xf32> -> vector<1x4x16xf32>
    "tpu.trace_stop"() : () -> ()
    %c0_32 = arith.constant 0 : index
    %c0_33 = arith.constant 0 : index
    %c48 = arith.constant 48 : index
    %101 = vector.load %arg3[%c0_32, %c0_33, %c48] : memref<1x4x64xf32, #tpu.memory_space<vmem>>, vector<1x4x16xf32>
    tpu.vector_store %arg3[%c0_32, %c0_33, %c48], %100 {strides = array<i32>} : memref<1x4x64xf32, #tpu.memory_space<vmem>>, vector<1x4x16xf32>,
    return
  }
  func.func @transform_0(%arg0: i32) -> (i32, i32, i32) {
    %c0_i32 = arith.constant 0 : i32
    %c0_i32_0 = arith.constant 0 : i32
    %c0_i32_1 = arith.constant 0 : i32
    return %arg0, %c0_i32, %c0_i32_0 : i32, i32, i32
  }
  func.func @transform_1(%arg0: i32) -> (i32, i32, i32, i32) {
    %c0_i32 = arith.constant 0 : i32
    %c0_i32_0 = arith.constant 0 : i32
    %c0_i32_1 = arith.constant 0 : i32
    %c0_i32_2 = arith.constant 0 : i32
    %c0_i32_3 = arith.constant 0 : i32
    return %c0_i32, %c0_i32_0, %c0_i32_1, %c0_i32_2 : i32, i32, i32, i32
  }
  func.func @transform_2(%arg0: i32) -> (i32, i32, i32) {
    %c0_i32 = arith.constant 0 : i32
    %c0_i32_0 = arith.constant 0 : i32
    %c0_i32_1 = arith.constant 0 : i32
    return %arg0, %c0_i32, %c0_i32_0 : i32, i32, i32
  }
}

module attributes {stable_mosaic.version = 11 : i64} {
  func.func @kernel(%arg0: i32, %arg1: memref<8x64xf32, #tpu.memory_space<vmem>>, %arg2: memref<1x64xf32, #tpu.memory_space<vmem>>, %arg3: memref<1x64xf32, #tpu.memory_space<vmem>>, %arg4: memref<64x256xbf16, #tpu.memory_space<vmem>>, %arg5: memref<1x256xf32, #tpu.memory_space<vmem>>, %arg6: memref<8x256xf32, #tpu.memory_space<vmem>>) attributes {dimension_semantics = [#tpu.dimension_semantics<parallel>], iteration_bounds = array<i64: 1>, scalar_prefetch = 0 : i64, scratch_operands = 0 : i64, tpu.core_type = #tpu.core_type<tc>, window_params = [{transform_indices = @transform_0, window_bounds = array<i64: 8, 64>}, {pipeline_mode = #tpu.pipeline_mode<synchronous>, transform_indices = @transform_1, window_bounds = array<i64: 1, 64>}, {pipeline_mode = #tpu.pipeline_mode<synchronous>, transform_indices = @transform_2, window_bounds = array<i64: 1, 64>}, {pipeline_mode = #tpu.pipeline_mode<synchronous>, transform_indices = @transform_3, window_bounds = array<i64: 64, 256>}, {pipeline_mode = #tpu.pipeline_mode<synchronous>, transform_indices = @transform_4, window_bounds = array<i64: 1, 256>}, {transform_indices = @transform_5, window_bounds = array<i64: 8, 256>}]} {
    %c0 = arith.constant 0 : index
    %c0_0 = arith.constant 0 : index
    %0 = vector.load %arg1[%c0, %c0_0] : memref<8x64xf32, #tpu.memory_space<vmem>>, vector<8x64xf32>
    %cst = arith.constant dense<0.000000e+00> : vector<8xf32>
    %1 = vector.multi_reduction <add>, %0, %cst [1] : vector<8x64xf32> to vector<8xf32>
    %2 = vector.shape_cast %1 : vector<8xf32> to vector<8x1xf32>
    %cst_1 = arith.constant 6.400000e+01 : f32
    %3 = vector.broadcast %cst_1 : f32 to vector<8x1xf32>
    %4 = arith.divf %2, %3 : vector<8x1xf32>
    %5 = vector.broadcast %4 : vector<8x1xf32> to vector<8x64xf32>
    %6 = arith.subf %0, %5 : vector<8x64xf32>
    %7 = arith.mulf %6, %6 : vector<8x64xf32>
    %cst_2 = arith.constant dense<0.000000e+00> : vector<8xf32>
    %8 = vector.multi_reduction <add>, %7, %cst_2 [1] : vector<8x64xf32> to vector<8xf32>
    %9 = vector.shape_cast %8 : vector<8xf32> to vector<8x1xf32>
    %cst_3 = arith.constant 6.400000e+01 : f32
    %10 = vector.broadcast %cst_3 : f32 to vector<8x1xf32>
    %11 = arith.divf %9, %10 : vector<8x1xf32>
    %12 = vector.broadcast %4 : vector<8x1xf32> to vector<8x64xf32>
    %13 = arith.subf %0, %12 : vector<8x64xf32>
    %cst_4 = arith.constant 9.99999974E-6 : f32
    %14 = vector.broadcast %cst_4 : f32 to vector<8x1xf32>
    %15 = arith.addf %11, %14 : vector<8x1xf32>
    %16 = math.rsqrt %15 : vector<8x1xf32>
    %17 = vector.broadcast %16 : vector<8x1xf32> to vector<8x64xf32>
    %18 = arith.mulf %13, %17 : vector<8x64xf32>
    %c0_5 = arith.constant 0 : index
    %c0_6 = arith.constant 0 : index
    %19 = vector.load %arg2[%c0_5, %c0_6] : memref<1x64xf32, #tpu.memory_space<vmem>>, vector<1x64xf32>
    %20 = vector.broadcast %19 : vector<1x64xf32> to vector<8x64xf32>
    %21 = arith.mulf %18, %20 : vector<8x64xf32>
    %c0_7 = arith.constant 0 : index
    %c0_8 = arith.constant 0 : index
    %22 = vector.load %arg3[%c0_7, %c0_8] : memref<1x64xf32, #tpu.memory_space<vmem>>, vector<1x64xf32>
    %23 = vector.broadcast %22 : vector<1x64xf32> to vector<8x64xf32>
    %24 = arith.addf %21, %23 : vector<8x64xf32>
    %25 = arith.truncf %24 : vector<8x64xf32> to vector<8x64xbf16>
    %c0_9 = arith.constant 0 : index
    %c0_10 = arith.constant 0 : index
    %26 = vector.load %arg4[%c0_9, %c0_10] : memref<64x256xbf16, #tpu.memory_space<vmem>>, vector<64x256xbf16>
    %cst_11 = arith.constant dense<0.000000e+00> : vector<8x256xf32>
    %27 = tpu.matmul %25, %26, %cst_11 {dimension_numbers = #tpu.dot_dimension_numbers<[1], [0], [0], [1], [0, 0, 1, 1], [], []>} : vector<8x64xbf16>, vector<64x256xbf16>, vector<8x256xf32> -> vector<8x256xf32>
    %c0_12 = arith.constant 0 : index
    %c0_13 = arith.constant 0 : index
    %28 = vector.load %arg5[%c0_12, %c0_13] : memref<1x256xf32, #tpu.memory_space<vmem>>, vector<1x256xf32>
    %29 = vector.broadcast %28 : vector<1x256xf32> to vector<8x256xf32>
    %30 = arith.addf %27, %29 : vector<8x256xf32>
    %cst_14 = arith.constant 5.000000e-01 : f32
    %31 = vector.broadcast %cst_14 : f32 to vector<8x256xf32>
    %32 = arith.mulf %31, %30 : vector<8x256xf32>
    %cst_15 = arith.constant 0.707106769 : f32
    %33 = vector.broadcast %cst_15 : f32 to vector<8x256xf32>
    %34 = arith.mulf %30, %33 : vector<8x256xf32>
    %cst_16 = arith.constant 0.000000e+00 : f32
    %35 = vector.broadcast %cst_16 : f32 to vector<8x256xf32>
    %36 = arith.cmpf oge, %34, %35 : vector<8x256xf32>
    %cst_17 = arith.constant 1.000000e+00 : f32
    %cst_18 = arith.constant -1.000000e+00 : f32
    %37 = vector.broadcast %cst_17 : f32 to vector<8x256xf32>
    %38 = vector.broadcast %cst_18 : f32 to vector<8x256xf32>
    %39 = arith.select %36, %37, %38 : vector<8x256xi1>, vector<8x256xf32>
    %40 = math.absf %34 : vector<8x256xf32>
    %cst_19 = arith.constant 0.327591091 : f32
    %41 = vector.broadcast %cst_19 : f32 to vector<8x256xf32>
    %42 = arith.mulf %41, %40 : vector<8x256xf32>
    %cst_20 = arith.constant 1.000000e+00 : f32
    %43 = vector.broadcast %cst_20 : f32 to vector<8x256xf32>
    %44 = arith.addf %43, %42 : vector<8x256xf32>
    %cst_21 = arith.constant 1.000000e+00 : f32
    %45 = vector.broadcast %cst_21 : f32 to vector<8x256xf32>
    %46 = arith.divf %45, %44 : vector<8x256xf32>
    %cst_22 = arith.constant 1.06140542 : f32
    %47 = vector.broadcast %cst_22 : f32 to vector<8x256xf32>
    %48 = arith.mulf %47, %46 : vector<8x256xf32>
    %cst_23 = arith.constant -1.45315206 : f32
    %49 = vector.broadcast %cst_23 : f32 to vector<8x256xf32>
    %50 = arith.addf %48, %49 : vector<8x256xf32>
    %51 = arith.mulf %50, %46 : vector<8x256xf32>
    %cst_24 = arith.constant 1.42141378 : f32
    %52 = vector.broadcast %cst_24 : f32 to vector<8x256xf32>
    %53 = arith.addf %51, %52 : vector<8x256xf32>
    %54 = arith.mulf %53, %46 : vector<8x256xf32>
    %cst_25 = arith.constant -0.284496725 : f32
    %55 = vector.broadcast %cst_25 : f32 to vector<8x256xf32>
    %56 = arith.addf %54, %55 : vector<8x256xf32>
    %57 = arith.mulf %56, %46 : vector<8x256xf32>
    %cst_26 = arith.constant 0.254829586 : f32
    %58 = vector.broadcast %cst_26 : f32 to vector<8x256xf32>
    %59 = arith.addf %57, %58 : vector<8x256xf32>
    %60 = arith.mulf %59, %46 : vector<8x256xf32>
    %cst_27 = arith.constant 0.000000e+00 : f32
    %61 = vector.broadcast %cst_27 : f32 to vector<8x256xf32>
    %62 = arith.subf %61, %40 : vector<8x256xf32>
    %63 = arith.mulf %62, %40 : vector<8x256xf32>
    %64 = math.exp %63 : vector<8x256xf32>
    %65 = arith.mulf %60, %64 : vector<8x256xf32>
    %cst_28 = arith.constant 1.000000e+00 : f32
    %66 = vector.broadcast %cst_28 : f32 to vector<8x256xf32>
    %67 = arith.subf %66, %65 : vector<8x256xf32>
    %68 = arith.mulf %39, %67 : vector<8x256xf32>
    %cst_29 = arith.constant 1.000000e+00 : f32
    %69 = vector.broadcast %cst_29 : f32 to vector<8x256xf32>
    %70 = arith.addf %69, %68 : vector<8x256xf32>
    %71 = arith.mulf %32, %70 : vector<8x256xf32>
    %c0_30 = arith.constant 0 : index
    %c0_31 = arith.constant 0 : index
    %72 = vector.load %arg6[%c0_30, %c0_31] : memref<8x256xf32, #tpu.memory_space<vmem>>, vector<8x256xf32>
    tpu.vector_store %arg6[%c0_30, %c0_31], %71 {strides = array<i32>} : memref<8x256xf32, #tpu.memory_space<vmem>>, vector<8x256xf32>,
    return
  }
  func.func @transform_0(%arg0: i32) -> (i32, i32) {
    %c0_i32 = arith.constant 0 : i32
    %c0_i32_0 = arith.constant 0 : i32
    return %arg0, %c0_i32 : i32, i32
  }
  func.func @transform_1(%arg0: i32) -> (i32, i32) {
    %c0_i32 = arith.constant 0 : i32
    %c0_i32_0 = arith.constant 0 : i32
    %c0_i32_1 = arith.constant 0 : i32
    return %c0_i32, %c0_i32_0 : i32, i32
  }
  func.func @transform_2(%arg0: i32) -> (i32, i32) {
    %c0_i32 = arith.constant 0 : i32
    %c0_i32_0 = arith.constant 0 : i32
    %c0_i32_1 = arith.constant 0 : i32
    return %c0_i32, %c0_i32_0 : i32, i32
  }
  func.func @transform_3(%arg0: i32) -> (i32, i32) {
    %c0_i32 = arith.constant 0 : i32
    %c0_i32_0 = arith.constant 0 : i32
    %c0_i32_1 = arith.constant 0 : i32
    return %c0_i32, %c0_i32_0 : i32, i32
  }
  func.func @transform_4(%arg0: i32) -> (i32, i32) {
    %c0_i32 = arith.constant 0 : i32
    %c0_i32_0 = arith.constant 0 : i32
    %c0_i32_1 = arith.constant 0 : i32
    return %c0_i32, %c0_i32_0 : i32, i32
  }
  func.func @transform_5(%arg0: i32) -> (i32, i32) {
    %c0_i32 = arith.constant 0 : i32
    %c0_i32_0 = arith.constant 0 : i32
    return %arg0, %c0_i32 : i32, i32
  }
}

module attributes {stable_mosaic.version = 11 : i64} {
  func.func @kernel(%arg0: i32, %arg1: memref<8x256xf32, #tpu.memory_space<vmem>>, %arg2: memref<256x64xbf16, #tpu.memory_space<vmem>>, %arg3: memref<1x64xf32, #tpu.memory_space<vmem>>, %arg4: memref<8x64xf32, #tpu.memory_space<vmem>>) attributes {dimension_semantics = [#tpu.dimension_semantics<parallel>], iteration_bounds = array<i64: 1>, scalar_prefetch = 0 : i64, scratch_operands = 0 : i64, tpu.core_type = #tpu.core_type<tc>, window_params = [{transform_indices = @transform_0, window_bounds = array<i64: 8, 256>}, {pipeline_mode = #tpu.pipeline_mode<synchronous>, transform_indices = @transform_1, window_bounds = array<i64: 256, 64>}, {pipeline_mode = #tpu.pipeline_mode<synchronous>, transform_indices = @transform_2, window_bounds = array<i64: 1, 64>}, {transform_indices = @transform_3, window_bounds = array<i64: 8, 64>}]} {
    %c0 = arith.constant 0 : index
    %c0_0 = arith.constant 0 : index
    %0 = vector.load %arg1[%c0, %c0_0] : memref<8x256xf32, #tpu.memory_space<vmem>>, vector<8x256xf32>
    %1 = arith.truncf %0 : vector<8x256xf32> to vector<8x256xbf16>
    %c0_1 = arith.constant 0 : index
    %c0_2 = arith.constant 0 : index
    %2 = vector.load %arg2[%c0_1, %c0_2] : memref<256x64xbf16, #tpu.memory_space<vmem>>, vector<256x64xbf16>
    %cst = arith.constant dense<0.000000e+00> : vector<8x64xf32>
    %3 = tpu.matmul %1, %2, %cst {dimension_numbers = #tpu.dot_dimension_numbers<[1], [0], [0], [1], [0, 0, 1, 1], [], []>} : vector<8x256xbf16>, vector<256x64xbf16>, vector<8x64xf32> -> vector<8x64xf32>
    %c0_3 = arith.constant 0 : index
    %c0_4 = arith.constant 0 : index
    %4 = vector.load %arg3[%c0_3, %c0_4] : memref<1x64xf32, #tpu.memory_space<vmem>>, vector<1x64xf32>
    %5 = vector.broadcast %4 : vector<1x64xf32> to vector<8x64xf32>
    %6 = arith.addf %3, %5 : vector<8x64xf32>
    %c0_5 = arith.constant 0 : index
    %c0_6 = arith.constant 0 : index
    %7 = vector.load %arg4[%c0_5, %c0_6] : memref<8x64xf32, #tpu.memory_space<vmem>>, vector<8x64xf32>
    tpu.vector_store %arg4[%c0_5, %c0_6], %6 {strides = array<i32>} : memref<8x64xf32, #tpu.memory_space<vmem>>, vector<8x64xf32>,
    return
  }
  func.func @transform_0(%arg0: i32) -> (i32, i32) {
    %c0_i32 = arith.constant 0 : i32
    %c0_i32_0 = arith.constant 0 : i32
    return %arg0, %c0_i32 : i32, i32
  }
  func.func @transform_1(%arg0: i32) -> (i32, i32) {
    %c0_i32 = arith.constant 0 : i32
    %c0_i32_0 = arith.constant 0 : i32
    %c0_i32_1 = arith.constant 0 : i32
    return %c0_i32, %c0_i32_0 : i32, i32
  }
  func.func @transform_2(%arg0: i32) -> (i32, i32) {
    %c0_i32 = arith.constant 0 : i32
    %c0_i32_0 = arith.constant 0 : i32
    %c0_i32_1 = arith.constant 0 : i32
    return %c0_i32, %c0_i32_0 : i32, i32
  }
  func.func @transform_3(%arg0: i32) -> (i32, i32) {
    %c0_i32 = arith.constant 0 : i32
    %c0_i32_0 = arith.constant 0 : i32
    return %arg0, %c0_i32 : i32, i32
  }
}

module attributes {stable_mosaic.version = 11 : i64} {
  func.func @_layernorm_kernel(%arg0: i32, %arg1: memref<8x64xf32, #tpu.memory_space<vmem>>, %arg2: memref<1x64xf32, #tpu.memory_space<vmem>>, %arg3: memref<1x64xf32, #tpu.memory_space<vmem>>, %arg4: memref<8x64xf32, #tpu.memory_space<vmem>>) attributes {dimension_semantics = [#tpu.dimension_semantics<parallel>], iteration_bounds = array<i64: 1>, scalar_prefetch = 0 : i64, scratch_operands = 0 : i64, tpu.core_type = #tpu.core_type<tc>, window_params = [{transform_indices = @transform_0, window_bounds = array<i64: 8, 64>}, {pipeline_mode = #tpu.pipeline_mode<synchronous>, transform_indices = @transform_1, window_bounds = array<i64: 1, 64>}, {pipeline_mode = #tpu.pipeline_mode<synchronous>, transform_indices = @transform_2, window_bounds = array<i64: 1, 64>}, {transform_indices = @transform_3, window_bounds = array<i64: 8, 64>}]} {
    %c0 = arith.constant 0 : index
    %c0_0 = arith.constant 0 : index
    %0 = vector.load %arg1[%c0, %c0_0] : memref<8x64xf32, #tpu.memory_space<vmem>>, vector<8x64xf32>
    %cst = arith.constant dense<0.000000e+00> : vector<8xf32>
    %1 = vector.multi_reduction <add>, %0, %cst [1] : vector<8x64xf32> to vector<8xf32>
    %2 = vector.shape_cast %1 : vector<8xf32> to vector<8x1xf32>
    %cst_1 = arith.constant 6.400000e+01 : f32
    %3 = vector.broadcast %cst_1 : f32 to vector<8x1xf32>
    %4 = arith.divf %2, %3 : vector<8x1xf32>
    %5 = vector.broadcast %4 : vector<8x1xf32> to vector<8x64xf32>
    %6 = arith.subf %0, %5 : vector<8x64xf32>
    %7 = arith.mulf %6, %6 : vector<8x64xf32>
    %cst_2 = arith.constant dense<0.000000e+00> : vector<8xf32>
    %8 = vector.multi_reduction <add>, %7, %cst_2 [1] : vector<8x64xf32> to vector<8xf32>
    %9 = vector.shape_cast %8 : vector<8xf32> to vector<8x1xf32>
    %cst_3 = arith.constant 6.400000e+01 : f32
    %10 = vector.broadcast %cst_3 : f32 to vector<8x1xf32>
    %11 = arith.divf %9, %10 : vector<8x1xf32>
    %12 = vector.broadcast %4 : vector<8x1xf32> to vector<8x64xf32>
    %13 = arith.subf %0, %12 : vector<8x64xf32>
    %cst_4 = arith.constant 9.99999974E-6 : f32
    %14 = vector.broadcast %cst_4 : f32 to vector<8x1xf32>
    %15 = arith.addf %11, %14 : vector<8x1xf32>
    %16 = math.rsqrt %15 : vector<8x1xf32>
    %17 = vector.broadcast %16 : vector<8x1xf32> to vector<8x64xf32>
    %18 = arith.mulf %13, %17 : vector<8x64xf32>
    %c0_5 = arith.constant 0 : index
    %c0_6 = arith.constant 0 : index
    %19 = vector.load %arg2[%c0_5, %c0_6] : memref<1x64xf32, #tpu.memory_space<vmem>>, vector<1x64xf32>
    %20 = vector.broadcast %19 : vector<1x64xf32> to vector<8x64xf32>
    %21 = arith.mulf %18, %20 : vector<8x64xf32>
    %c0_7 = arith.constant 0 : index
    %c0_8 = arith.constant 0 : index
    %22 = vector.load %arg3[%c0_7, %c0_8] : memref<1x64xf32, #tpu.memory_space<vmem>>, vector<1x64xf32>
    %23 = vector.broadcast %22 : vector<1x64xf32> to vector<8x64xf32>
    %24 = arith.addf %21, %23 : vector<8x64xf32>
    %c0_9 = arith.constant 0 : index
    %c0_10 = arith.constant 0 : index
    %25 = vector.load %arg4[%c0_9, %c0_10] : memref<8x64xf32, #tpu.memory_space<vmem>>, vector<8x64xf32>
    tpu.vector_store %arg4[%c0_9, %c0_10], %24 {strides = array<i32>} : memref<8x64xf32, #tpu.memory_space<vmem>>, vector<8x64xf32>,
    return
  }
  func.func @transform_0(%arg0: i32) -> (i32, i32) {
    %c0_i32 = arith.constant 0 : i32
    %c0_i32_0 = arith.constant 0 : i32
    return %arg0, %c0_i32 : i32, i32
  }
  func.func @transform_1(%arg0: i32) -> (i32, i32) {
    %c0_i32 = arith.constant 0 : i32
    %c0_i32_0 = arith.constant 0 : i32
    %c0_i32_1 = arith.constant 0 : i32
    return %c0_i32, %c0_i32_0 : i32, i32
  }
  func.func @transform_2(%arg0: i32) -> (i32, i32) {
    %c0_i32 = arith.constant 0 : i32
    %c0_i32_0 = arith.constant 0 : i32
    %c0_i32_1 = arith.constant 0 : i32
    return %c0_i32, %c0_i32_0 : i32, i32
  }
  func.func @transform_3(%arg0: i32) -> (i32, i32) {
    %c0_i32 = arith.constant 0 : i32
    %c0_i32_0 = arith.constant 0 : i32
    return %arg0, %c0_i32 : i32, i32
  }
}

module attributes {stable_mosaic.version = 11 : i64} {
  func.func @kernel(%arg0: i32, %arg1: memref<2x64xf32, #tpu.memory_space<vmem>>, %arg2: memref<64x10xbf16, #tpu.memory_space<vmem>>, %arg3: memref<1x10xf32, #tpu.memory_space<vmem>>, %arg4: memref<2x10xf32, #tpu.memory_space<vmem>>) attributes {dimension_semantics = [#tpu.dimension_semantics<parallel>], iteration_bounds = array<i64: 1>, scalar_prefetch = 0 : i64, scratch_operands = 0 : i64, tpu.core_type = #tpu.core_type<tc>, window_params = [{transform_indices = @transform_0, window_bounds = array<i64: 2, 64>}, {pipeline_mode = #tpu.pipeline_mode<synchronous>, transform_indices = @transform_1, window_bounds = array<i64: 64, 10>}, {pipeline_mode = #tpu.pipeline_mode<synchronous>, transform_indices = @transform_2, window_bounds = array<i64: 1, 10>}, {transform_indices = @transform_3, window_bounds = array<i64: 2, 10>}]} {
    %c0 = arith.constant 0 : index
    %c0_0 = arith.constant 0 : index
    %0 = vector.load %arg1[%c0, %c0_0] : memref<2x64xf32, #tpu.memory_space<vmem>>, vector<2x64xf32>
    %1 = arith.truncf %0 : vector<2x64xf32> to vector<2x64xbf16>
    %c0_1 = arith.constant 0 : index
    %c0_2 = arith.constant 0 : index
    %2 = vector.load %arg2[%c0_1, %c0_2] : memref<64x10xbf16, #tpu.memory_space<vmem>>, vector<64x10xbf16>
    %cst = arith.constant dense<0.000000e+00> : vector<2x10xf32>
    %3 = tpu.matmul %1, %2, %cst {dimension_numbers = #tpu.dot_dimension_numbers<[1], [0], [0], [1], [0, 0, 1, 1], [], []>} : vector<2x64xbf16>, vector<64x10xbf16>, vector<2x10xf32> -> vector<2x10xf32>
    %c0_3 = arith.constant 0 : index
    %c0_4 = arith.constant 0 : index
    %4 = vector.load %arg3[%c0_3, %c0_4] : memref<1x10xf32, #tpu.memory_space<vmem>>, vector<1x10xf32>
    %5 = vector.broadcast %4 : vector<1x10xf32> to vector<2x10xf32>
    %6 = arith.addf %3, %5 : vector<2x10xf32>
    %c0_5 = arith.constant 0 : index
    %c0_6 = arith.constant 0 : index
    %7 = vector.load %arg4[%c0_5, %c0_6] : memref<2x10xf32, #tpu.memory_space<vmem>>, vector<2x10xf32>
    tpu.vector_store %arg4[%c0_5, %c0_6], %6 {strides = array<i32>} : memref<2x10xf32, #tpu.memory_space<vmem>>, vector<2x10xf32>,
    return
  }
  func.func @transform_0(%arg0: i32) -> (i32, i32) {
    %c0_i32 = arith.constant 0 : i32
    %c0_i32_0 = arith.constant 0 : i32
    return %arg0, %c0_i32 : i32, i32
  }
  func.func @transform_1(%arg0: i32) -> (i32, i32) {
    %c0_i32 = arith.constant 0 : i32
    %c0_i32_0 = arith.constant 0 : i32
    %c0_i32_1 = arith.constant 0 : i32
    return %c0_i32, %c0_i32_0 : i32, i32
  }
  func.func @transform_2(%arg0: i32) -> (i32, i32) {
    %c0_i32 = arith.constant 0 : i32
    %c0_i32_0 = arith.constant 0 : i32
    %c0_i32_1 = arith.constant 0 : i32
    return %c0_i32, %c0_i32_0 : i32, i32
  }
  func.func @transform_3(%arg0: i32) -> (i32, i32) {
    %c0_i32 = arith.constant 0 : i32
    %c0_i32_0 = arith.constant 0 : i32
    return %arg0, %c0_i32 : i32, i32
  }
}

</mosaic_0001>

<llo_original>
// kernel: sub.22
$region0: #{sub.22}
  %s0 = inlined_call_operand.vmem [shape: s32[2,2,2], index: 0, kind: input, shape index: {}]
  %s1 = inlined_call_operand.vmem [shape: s32[2,4], index: 1, kind: output, shape index: {}]
  $region1: #{sub.22} parent=0
    #allocation0 [shape = 'u8[4096]{0}', space=vmem, size = 0x1000, scoped, tag = 'scoped mem for output reshape']
    #allocation1 [shape = 'u8[8192]{0}', space=vmem, size = 0x2000, scoped, tag = 'scoped mem for input reshape']
    %s3 = sshllo.u32 0, 2
    %s4 = scalar_lea.vmem %s0, 2
    %v5 = vld [vmem:[%s4] sm:%s3]
    %s6 = scalar_lea.vmem [#allocation1], 8
    %7 = vst [vmem:[%s6] sm:%s3] %v5
    %v8 = vld [vmem:[%s0] sm:%s3]
    %9 = vst [vmem:[#allocation1] sm:%s3] %v8
    %s10 = smov 3
    %v11 = vld [vmem:[#allocation1] ss:$8 sm:%s10]
    %vm12 = vcmask 15360
    %13 = vst.msk [vmem:[#allocation0] sm:$0x3] %vm12, %v11
    %s14 = scalar_lea.vmem [#allocation1], 1
    %s15 = smov 3
    %v16 = vld [vmem:[%s14] ss:$8 sm:%s15]
    %17 = vrot.lane.b32.xlu0 %v16, 2
    %v18 = vpop.permute.xlu0 %17
    %vm19 = vcmask 31760
    %20 = vst.msk [vmem:[#allocation0] sm:$0x3] %vm19, %v18
    %s22 = sshllo.u32 0, 2
    %v24 = vld [vmem:[#allocation0] sm:%s22]
    %s25 = sshllo.u32 0, 2
    %26 = vst [vmem:[%s1] sm:%s25] %v24

// kernel: _lambda_.25
$region0: #{_lambda_.25}
  #allocation0 [shape = 'u32[]', space=smem, size = 0x4, offset = 0x4, fixed_abs, tag = 'smem constant byte address 0x4 - core index']
  #allocation1 [shape = 'u32[144,128]{1,0:T(1,128)}', space=vmem, size = 0x12000, scoped, tag = 'internal scratch']
  %s0 = inlined_call_operand.vmem [shape: f32[32,48], index: 0, kind: input, shape index: {}]
  %s1 = inlined_call_operand.vmem [shape: bf16[48,32], index: 1, kind: input, shape index: {}]
  %s2 = inlined_call_operand.vmem [shape: f32[1,32], index: 2, kind: input, shape index: {}]
  %s3 = inlined_call_operand.vmem [shape: f32[32,32], index: 3, kind: output, shape index: {}]
  %s4 = sld [smem:[#allocation0]]
  $region22: #{_lambda_.25} parent=0
    _
  %s6 = ssub.s32 1, %s4
  %s7 = scalar_select 0, %s6, %s4
  // Predicated region
  $region2: #{_lambda_.25} parent=0 // pred_check
    _
  $region3: #{_lambda_.25} parent=0 // pred_check_branch
    %9 = sbr.rel (0) target = $region5
  $region4: #{_lambda_.25} parent=0 // pred_region
    _
  $region5: #{_lambda_.25} parent=0 // pred_fallthru
    _
  // Predicated region
  $region6: #{_lambda_.25} parent=0 // pred_check
    _
  $region7: #{_lambda_.25} parent=0 // pred_check_branch
    %11 = sbr.rel (0) target = $region9
  $region8: #{_lambda_.25} parent=0 // pred_region
    _
  $region9: #{_lambda_.25} parent=0 // pred_fallthru
    _
  // Predicated region
  $region10: #{_lambda_.25} parent=0 // pred_check
    _
  $region11: #{_lambda_.25} parent=0 // pred_check_branch
    %13 = sbr.rel (0) target = $region13
  $region12: #{_lambda_.25} parent=0 // pred_region
    _
  $region13: #{_lambda_.25} parent=0 // pred_fallthru
    _
  %v15 = vld [vmem:[%s0] sm:$0xff]
  %v16 = vld [vmem:[%s0 + $0x8] sm:$0xff]
  %v17 = vld [vmem:[%s0 + $0x10] sm:$0xff]
  %v18 = vld [vmem:[%s0 + $0x18] sm:$0xff]
  %v19 = vpack.c.bf16 %v16, %v15
  %v20 = vpack.c.bf16 %v18, %v17
  %v21 = vld [vmem:[%s1] sm:$0xf]
  %v22 = vld [vmem:[%s1 + $0x4] sm:$0xf]
  %v23 = vld [vmem:[%s1 + $0x8] sm:$0xf]
  %v24 = vld [vmem:[%s1 + $0xc] sm:$0xf]
  %v25 = vld [vmem:[%s1 + $0x10] sm:$0xf]
  %v26 = vld [vmem:[%s1 + $0x14] sm:$0xf]
  %v27 = vld [vmem:[%s2] sm:$0x1]
  %v29 = vlaneseq
  %v30 = vshrl.u32 %v29, 7
  %v31 = vsub.s32 0, %v30
  %v32 = vrot.slane %v27, %v31
  %v40 = vunpack.c.l.b16 %v21
  %v41 = vunpack.c.l.b16 %v22
  %v42 = vunpack.c.l.b16 %v23
  %v43 = vunpack.c.l.b16 %v24
  %v44 = vunpack.c.l.b16 %v25
  %v45 = vunpack.c.l.b16 %v26
  %v46 = vpack.c.b16 %v41, %v40
  %v47 = vpack.c.b16 %v43, %v42
  %v48 = vpack.c.b16 %v45, %v44
  %vm52 = vcmask 392192
  %v54 = vsel %vm52, %v19, 0
  %v57 = vsel %vm52, %v20, 0
  %59 = vmatprep.subr.bf16.mxu0 0
  %60 = vmatpush1.bf16.msra.mxu0 %v46
  %61 = vmatprep.subr.bf16.mxu0 0
  %62 = vmatpush1.bf16.msra.mxu0 %v47
  %63 = vmatprep.subr.bf16.mxu0 0
  %64 = vmatpush1.bf16.msra.mxu0 %v48
  %65 = vmatprep.subr.bf16.mxu0 0
  %66 = vmatpush1.bf16.msra.mxu0 0
  %67 = vmatprep.subr.bf16.mxu0 0
  %68 = vmatpush1.bf16.msra.mxu0 0
  %69 = vmatprep.subr.bf16.mxu0 0
  %70 = vmatpush1.bf16.msra.mxu0 0
  %71 = vmatprep.subr.bf16.mxu0 0
  %72 = vmatpush1.bf16.msra.mxu0 0
  %73 = vmatprep.subr.bf16.mxu0 0
  %74 = vmatpush1.bf16.msra.mxu0 0
  %75 = vmatprep.subr.bf16.mxu0 0
  %76 = vmatpush1.bf16.msra.mxu0 0
  %77 = vmatprep.subr.bf16.mxu0 0
  %78 = vmatpush1.bf16.msra.mxu0 0
  %79 = vmatprep.subr.bf16.mxu0 0
  %80 = vmatpush1.bf16.msra.mxu0 0
  %81 = vmatprep.subr.bf16.mxu0 0
  %82 = vmatpush1.bf16.msra.mxu0 0
  %83 = vmatprep.subr.bf16.mxu0 0
  %84 = vmatpush1.bf16.msra.mxu0 0
  %85 = vmatprep.subr.bf16.mxu0 0
  %86 = vmatpush1.bf16.msra.mxu0 0
  %87 = vmatprep.subr.bf16.mxu0 0
  %88 = vmatpush1.bf16.msra.mxu0 0
  %89 = vmatprep.subr.bf16.mxu0 0
  %90 = vmatpush1.bf16.msra.mxu0 0
  %91 = vmatprep.mubr.bf16.mxu0 0
  %92 = vmatmul.mubr.bf16.gmra.mrb[0].mxu0 %v54
  %v93 = vpop.f32.mrb[0].mxu0
  %v94 = vadd.f32 %v32, %v93
  %v95 = vpop.f32.mrb[0].mxu0
  %v96 = vpop.f32.mrb[0].mxu0
  %v97 = vadd.f32 %v32, %v96
  %v98 = vpop.f32.mrb[0].mxu0
  %99 = vmatprep.mubr.bf16.mxu0 0
  %100 = vmatmul.mubr.bf16.gmra.mrb[0].mxu0 %v57
  %v101 = vpop.f32.mrb[0].mxu0
  %v102 = vadd.f32 %v32, %v101
  %v103 = vpop.f32.mrb[0].mxu0
  %v104 = vpop.f32.mrb[0].mxu0
  %v105 = vadd.f32 %v32, %v104
  %v106 = vpop.f32.mrb[0].mxu0
  %107 = vdwg.mxu0
  %vm108 = vcmask 261120
  %109 = vst.msk [vmem:[%s3] sm:$0xff] %vm108, %v94
  %110 = vst.msk [vmem:[%s3 + $0x8] sm:$0xff] %vm108, %v97
  %111 = vst.msk [vmem:[%s3 + $0x10] sm:$0xff] %vm108, %v102
  %112 = vst.msk [vmem:[%s3 + $0x18] sm:$0xff] %vm108, %v105
  // Predicated region
  $region14: #{_lambda_.25} parent=0 // pred_check
    _
  $region15: #{_lambda_.25} parent=0 // pred_check_branch
    %114 = sbr.rel (0) target = $region17
  $region16: #{_lambda_.25} parent=0 // pred_region
    _
  $region17: #{_lambda_.25} parent=0 // pred_fallthru
    _
  // Predicated region
  $region18: #{_lambda_.25} parent=0 // pred_check
    _
  $region19: #{_lambda_.25} parent=0 // pred_check_branch
    %116 = sbr.rel (0) target = $region21
  $region20: #{_lambda_.25} parent=0 // pred_region
    _
  $region21: #{_lambda_.25} parent=0 // pred_fallthru
    _

// kernel: _lambda_.27
$region0: #{_lambda_.27}
  #allocation0 [shape = 'u32[]', space=smem, size = 0x4, offset = 0x4, fixed_abs, tag = 'smem constant byte address 0x4 - core index']
  #allocation1 [shape = 'u32[144,128]{1,0:T(1,128)}', space=vmem, size = 0x12000, scoped, tag = 'internal scratch']
  %s0 = inlined_call_operand.vmem [shape: f32[32,32], index: 0, kind: input, shape index: {}]
  %s1 = inlined_call_operand.vmem [shape: f32[1,32], index: 1, kind: input, shape index: {}]
  %s2 = inlined_call_operand.vmem [shape: f32[1,32], index: 2, kind: input, shape index: {}]
  %s3 = inlined_call_operand.vmem [shape: bf16[32,96], index: 3, kind: input, shape index: {}]
  %s4 = inlined_call_operand.vmem [shape: f32[1,96], index: 4, kind: input, shape index: {}]
  %s5 = inlined_call_operand.vmem [shape: f32[32,96], index: 5, kind: output, shape index: {}]
  %s6 = sld [smem:[#allocation0]]
  $region30: #{_lambda_.27} parent=0
    _
  %s8 = ssub.s32 1, %s6
  %s9 = scalar_select 0, %s8, %s6
  // Predicated region
  $region2: #{_lambda_.27} parent=0 // pred_check
    _
  $region3: #{_lambda_.27} parent=0 // pred_check_branch
    %11 = sbr.rel (0) target = $region5
  $region4: #{_lambda_.27} parent=0 // pred_region
    _
  $region5: #{_lambda_.27} parent=0 // pred_fallthru
    _
  // Predicated region
  $region6: #{_lambda_.27} parent=0 // pred_check
    _
  $region7: #{_lambda_.27} parent=0 // pred_check_branch
    %13 = sbr.rel (0) target = $region9
  $region8: #{_lambda_.27} parent=0 // pred_region
    _
  $region9: #{_lambda_.27} parent=0 // pred_fallthru
    _
  // Predicated region
  $region10: #{_lambda_.27} parent=0 // pred_check
    _
  $region11: #{_lambda_.27} parent=0 // pred_check_branch
    %15 = sbr.rel (0) target = $region13
  $region12: #{_lambda_.27} parent=0 // pred_region
    _
  $region13: #{_lambda_.27} parent=0 // pred_fallthru
    _
  // Predicated region
  $region14: #{_lambda_.27} parent=0 // pred_check
    _
  $region15: #{_lambda_.27} parent=0 // pred_check_branch
    %17 = sbr.rel (0) target = $region17
  $region16: #{_lambda_.27} parent=0 // pred_region
    _
  $region17: #{_lambda_.27} parent=0 // pred_fallthru
    _
  // Predicated region
  $region18: #{_lambda_.27} parent=0 // pred_check
    _
  $region19: #{_lambda_.27} parent=0 // pred_check_branch
    %19 = sbr.rel (0) target = $region21
  $region20: #{_lambda_.27} parent=0 // pred_region
    _
  $region21: #{_lambda_.27} parent=0 // pred_fallthru
    _
  %v21 = vld [vmem:[%s0] sm:$0xff]
  %v22 = vld [vmem:[%s0 + $0x8] sm:$0xff]
  %v23 = vld [vmem:[%s0 + $0x10] sm:$0xff]
  %v24 = vld [vmem:[%s0 + $0x18] sm:$0xff]
  %vm25 = vcmask 261120
  %v26 = vsel %vm25, %v21, 0.0
  %27 = vadd.xlane.f32.xlu0 %v26
  %v28 = vpop.xlane.xlu0 %27
  %v29 = vsel %vm25, %v22, 0.0
  %30 = vadd.xlane.f32.xlu0 %v29
  %v31 = vpop.xlane.xlu0 %30
  %v32 = vsel %vm25, %v23, 0.0
  %33 = vadd.xlane.f32.xlu0 %v32
  %v34 = vpop.xlane.xlu0 %33
  %v35 = vsel %vm25, %v24, 0.0
  %36 = vadd.xlane.f32.xlu0 %v35
  %v37 = vpop.xlane.xlu0 %36
  %v38 = vrcp.pop 32.0
  %v39 = vmul.f32 %v28, %v38
  %v40 = vmul.f32 %v31, %v38
  %v41 = vmul.f32 %v34, %v38
  %v42 = vmul.f32 %v37, %v38
  %v43 = vsub.f32 %v21, %v39
  %v44 = vsub.f32 %v22, %v40
  %v45 = vsub.f32 %v23, %v41
  %v46 = vsub.f32 %v24, %v42
  %v47 = vmul.f32 %v43, %v43
  %v48 = vmul.f32 %v44, %v44
  %v49 = vmul.f32 %v45, %v45
  %v50 = vmul.f32 %v46, %v46
  %v51 = vsel %vm25, %v47, 0.0
  %52 = vadd.xlane.f32.xlu0 %v51
  %v53 = vpop.xlane.xlu0 %52
  %v54 = vsel %vm25, %v48, 0.0
  %55 = vadd.xlane.f32.xlu0 %v54
  %v56 = vpop.xlane.xlu0 %55
  %v57 = vsel %vm25, %v49, 0.0
  %58 = vadd.xlane.f32.xlu0 %v57
  %v59 = vpop.xlane.xlu0 %58
  %v60 = vsel %vm25, %v50, 0.0
  %61 = vadd.xlane.f32.xlu0 %v60
  %v62 = vpop.xlane.xlu0 %61
  %v63 = vmul.f32 %v53, %v38
  %v64 = vmul.f32 %v56, %v38
  %v65 = vmul.f32 %v59, %v38
  %v66 = vmul.f32 %v62, %v38
  %v67 = vadd.f32 %v63, 1e-05
  %v68 = vadd.f32 %v64, 1e-05
  %v69 = vadd.f32 %v65, 1e-05
  %v70 = vadd.f32 %v66, 1e-05
  %v71 = vrsqrt.pop %v67
  %v72 = vrsqrt.pop %v68
  %v73 = vrsqrt.pop %v69
  %v74 = vrsqrt.pop %v70
  %v75 = vmul.f32 %v43, %v71
  %v76 = vmul.f32 %v44, %v72
  %v77 = vmul.f32 %v45, %v73
  %v78 = vmul.f32 %v46, %v74
  %v79 = vld [vmem:[%s1] sm:$0x1]
  %v81 = vlaneseq
  %v82 = vshrl.u32 %v81, 7
  %v83 = vsub.s32 0, %v82
  %v84 = vrot.slane %v79, %v83
  %v86 = vmul.f32 %v75, %v84
  %v87 = vmul.f32 %v76, %v84
  %v88 = vmul.f32 %v77, %v84
  %v89 = vmul.f32 %v78, %v84
  %v90 = vld [vmem:[%s2] sm:$0x1]
  %v92 = vlaneseq
  %v93 = vshrl.u32 %v92, 7
  %v94 = vsub.s32 0, %v93
  %v95 = vrot.slane %v90, %v94
  %v97 = vadd.f32 %v86, %v95
  %v98 = vadd.f32 %v87, %v95
  %v99 = vadd.f32 %v88, %v95
  %v100 = vadd.f32 %v89, %v95
  %v101 = vpack.c.bf16 %v98, %v97
  %v102 = vpack.c.bf16 %v100, %v99
  %v103 = vld [vmem:[%s3] sm:$0xf]
  %v104 = vld [vmem:[%s3 + $0x4] sm:$0xf]
  %v105 = vld [vmem:[%s3 + $0x8] sm:$0xf]
  %v106 = vld [vmem:[%s3 + $0xc] sm:$0xf]
  %v107 = vld [vmem:[%s4] sm:$0x1]
  %v109 = vlaneseq
  %v110 = vshrl.u32 %v109, 7
  %v111 = vsub.s32 0, %v110
  %v112 = vrot.slane %v107, %v111
  %v118 = vunpack.c.l.b16 %v103
  %v119 = vunpack.c.l.b16 %v104
  %v120 = vunpack.c.l.b16 %v105
  %v121 = vunpack.c.l.b16 %v106
  %v122 = vpack.c.b16 %v119, %v118
  %v123 = vpack.c.b16 %v121, %v120
  %v127 = vsel %vm25, %v101, 0
  %v130 = vsel %vm25, %v102, 0
  %132 = vmatprep.subr.bf16.mxu0 0
  %133 = vmatpush1.bf16.msra.mxu0 %v122
  %134 = vmatprep.subr.bf16.mxu0 0
  %135 = vmatpush1.bf16.msra.mxu0 %v123
  %136 = vmatprep.subr.bf16.mxu0 0
  %137 = vmatpush1.bf16.msra.mxu0 0
  %138 = vmatprep.subr.bf16.mxu0 0
  %139 = vmatpush1.bf16.msra.mxu0 0
  %140 = vmatprep.subr.bf16.mxu0 0
  %141 = vmatpush1.bf16.msra.mxu0 0
  %142 = vmatprep.subr.bf16.mxu0 0
  %143 = vmatpush1.bf16.msra.mxu0 0
  %144 = vmatprep.subr.bf16.mxu0 0
  %145 = vmatpush1.bf16.msra.mxu0 0
  %146 = vmatprep.subr.bf16.mxu0 0
  %147 = vmatpush1.bf16.msra.mxu0 0
  %148 = vmatprep.subr.bf16.mxu0 0
  %149 = vmatpush1.bf16.msra.mxu0 0
  %150 = vmatprep.subr.bf16.mxu0 0
  %151 = vmatpush1.bf16.msra.mxu0 0
  %152 = vmatprep.subr.bf16.mxu0 0
  %153 = vmatpush1.bf16.msra.mxu0 0
  %154 = vmatprep.subr.bf16.mxu0 0
  %155 = vmatpush1.bf16.msra.mxu0 0
  %156 = vmatprep.subr.bf16.mxu0 0
  %157 = vmatpush1.bf16.msra.mxu0 0
  %158 = vmatprep.subr.bf16.mxu0 0
  %159 = vmatpush1.bf16.msra.mxu0 0
  %160 = vmatprep.subr.bf16.mxu0 0
  %161 = vmatpush1.bf16.msra.mxu0 0
  %162 = vmatprep.subr.bf16.mxu0 0
  %163 = vmatpush1.bf16.msra.mxu0 0
  %164 = vmatprep.mubr.bf16.mxu0 0
  %165 = vmatmul.mubr.bf16.gmra.mrb[0].mxu0 %v127
  %v166 = vpop.f32.mrb[0].mxu0
  %v167 = vadd.f32 %v112, %v166
  %v168 = vpop.f32.mrb[0].mxu0
  %v169 = vpop.f32.mrb[0].mxu0
  %v170 = vadd.f32 %v112, %v169
  %v171 = vpop.f32.mrb[0].mxu0
  %172 = vmatprep.mubr.bf16.mxu0 0
  %173 = vmatmul.mubr.bf16.gmra.mrb[0].mxu0 %v130
  %v174 = vpop.f32.mrb[0].mxu0
  %v175 = vadd.f32 %v112, %v174
  %v176 = vpop.f32.mrb[0].mxu0
  %v177 = vpop.f32.mrb[0].mxu0
  %v178 = vadd.f32 %v112, %v177
  %v179 = vpop.f32.mrb[0].mxu0
  %180 = vdwg.mxu0
  %vm181 = vcmask 785408
  %182 = vst.msk [vmem:[%s5] sm:$0xff] %vm181, %v167
  %183 = vst.msk [vmem:[%s5 + $0x8] sm:$0xff] %vm181, %v170
  %184 = vst.msk [vmem:[%s5 + $0x10] sm:$0xff] %vm181, %v175
  %185 = vst.msk [vmem:[%s5 + $0x18] sm:$0xff] %vm181, %v178
  // Predicated region
  $region22: #{_lambda_.27} parent=0 // pred_check
    _
  $region23: #{_lambda_.27} parent=0 // pred_check_branch
    %187 = sbr.rel (0) target = $region25
  $region24: #{_lambda_.27} parent=0 // pred_region
    _
  $region25: #{_lambda_.27} parent=0 // pred_fallthru
    _
  // Predicated region
  $region26: #{_lambda_.27} parent=0 // pred_check
    _
  $region27: #{_lambda_.27} parent=0 // pred_check_branch
    %189 = sbr.rel (0) target = $region29
  $region28: #{_lambda_.27} parent=0 // pred_region
    _
  $region29: #{_lambda_.27} parent=0 // pred_fallthru
    _

// kernel: _lambda_.26
$region0: #{_lambda_.26}
  #allocation0 [shape = 'u32[]', space=smem, size = 0x4, offset = 0x4, fixed_abs, tag = 'smem constant byte address 0x4 - core index']
  #allocation1 [shape = 'u32[144,128]{1,0:T(1,128)}', space=vmem, size = 0x12000, scoped, tag = 'internal scratch']
  %s0 = inlined_call_operand.vmem [shape: f32[32,32], index: 0, kind: input, shape index: {}]
  %s1 = inlined_call_operand.vmem [shape: f32[1,32], index: 1, kind: input, shape index: {}]
  %s2 = inlined_call_operand.vmem [shape: f32[1,32], index: 2, kind: input, shape index: {}]
  %s3 = inlined_call_operand.vmem [shape: f32[32,32], index: 3, kind: output, shape index: {}]
  %s4 = sld [smem:[#allocation0]]
  $region22: #{_lambda_.26} parent=0
    _
  %s6 = ssub.s32 1, %s4
  %s7 = scalar_select 0, %s6, %s4
  // Predicated region
  $region2: #{_lambda_.26} parent=0 // pred_check
    _
  $region3: #{_lambda_.26} parent=0 // pred_check_branch
    %9 = sbr.rel (0) target = $region5
  $region4: #{_lambda_.26} parent=0 // pred_region
    _
  $region5: #{_lambda_.26} parent=0 // pred_fallthru
    _
  // Predicated region
  $region6: #{_lambda_.26} parent=0 // pred_check
    _
  $region7: #{_lambda_.26} parent=0 // pred_check_branch
    %11 = sbr.rel (0) target = $region9
  $region8: #{_lambda_.26} parent=0 // pred_region
    _
  $region9: #{_lambda_.26} parent=0 // pred_fallthru
    _
  // Predicated region
  $region10: #{_lambda_.26} parent=0 // pred_check
    _
  $region11: #{_lambda_.26} parent=0 // pred_check_branch
    %13 = sbr.rel (0) target = $region13
  $region12: #{_lambda_.26} parent=0 // pred_region
    _
  $region13: #{_lambda_.26} parent=0 // pred_fallthru
    _
  %v14 = vld [vmem:[%s0] sm:$0xff]
  %v15 = vld [vmem:[%s0 + $0x8] sm:$0xff]
  %v16 = vld [vmem:[%s0 + $0x10] sm:$0xff]
  %v17 = vld [vmem:[%s0 + $0x18] sm:$0xff]
  %vm18 = vcmask 261120
  %v19 = vsel %vm18, %v14, 0.0
  %20 = vadd.xlane.f32.xlu0 %v19
  %v21 = vpop.xlane.xlu0 %20
  %v22 = vsel %vm18, %v15, 0.0
  %23 = vadd.xlane.f32.xlu0 %v22
  %v24 = vpop.xlane.xlu0 %23
  %v25 = vsel %vm18, %v16, 0.0
  %26 = vadd.xlane.f32.xlu0 %v25
  %v27 = vpop.xlane.xlu0 %26
  %v28 = vsel %vm18, %v17, 0.0
  %29 = vadd.xlane.f32.xlu0 %v28
  %v30 = vpop.xlane.xlu0 %29
  %v31 = vrcp.pop 32.0
  %v32 = vmul.f32 %v21, %v31
  %v33 = vmul.f32 %v24, %v31
  %v34 = vmul.f32 %v27, %v31
  %v35 = vmul.f32 %v30, %v31
  %v36 = vsub.f32 %v14, %v32
  %v37 = vsub.f32 %v15, %v33
  %v38 = vsub.f32 %v16, %v34
  %v39 = vsub.f32 %v17, %v35
  %v40 = vmul.f32 %v36, %v36
  %v41 = vmul.f32 %v37, %v37
  %v42 = vmul.f32 %v38, %v38
  %v43 = vmul.f32 %v39, %v39
  %v44 = vsel %vm18, %v40, 0.0
  %45 = vadd.xlane.f32.xlu0 %v44
  %v46 = vpop.xlane.xlu0 %45
  %v47 = vsel %vm18, %v41, 0.0
  %48 = vadd.xlane.f32.xlu0 %v47
  %v49 = vpop.xlane.xlu0 %48
  %v50 = vsel %vm18, %v42, 0.0
  %51 = vadd.xlane.f32.xlu0 %v50
  %v52 = vpop.xlane.xlu0 %51
  %v53 = vsel %vm18, %v43, 0.0
  %54 = vadd.xlane.f32.xlu0 %v53
  %v55 = vpop.xlane.xlu0 %54
  %v56 = vmul.f32 %v46, %v31
  %v57 = vmul.f32 %v49, %v31
  %v58 = vmul.f32 %v52, %v31
  %v59 = vmul.f32 %v55, %v31
  %v60 = vadd.f32 %v56, 1e-05
  %v61 = vadd.f32 %v57, 1e-05
  %v62 = vadd.f32 %v58, 1e-05
  %v63 = vadd.f32 %v59, 1e-05
  %v64 = vrsqrt.pop %v60
  %v65 = vrsqrt.pop %v61
  %v66 = vrsqrt.pop %v62
  %v67 = vrsqrt.pop %v63
  %v68 = vmul.f32 %v36, %v64
  %v69 = vmul.f32 %v37, %v65
  %v70 = vmul.f32 %v38, %v66
  %v71 = vmul.f32 %v39, %v67
  %v72 = vld [vmem:[%s1] sm:$0x1]
  %v74 = vlaneseq
  %v75 = vshrl.u32 %v74, 7
  %v76 = vsub.s32 0, %v75
  %v77 = vrot.slane %v72, %v76
  %v79 = vmul.f32 %v68, %v77
  %v80 = vmul.f32 %v69, %v77
  %v81 = vmul.f32 %v70, %v77
  %v82 = vmul.f32 %v71, %v77
  %v83 = vld [vmem:[%s2] sm:$0x1]
  %v85 = vlaneseq
  %v86 = vshrl.u32 %v85, 7
  %v87 = vsub.s32 0, %v86
  %v88 = vrot.slane %v83, %v87
  %v90 = vadd.f32 %v79, %v88
  %v91 = vadd.f32 %v80, %v88
  %v92 = vadd.f32 %v81, %v88
  %v93 = vadd.f32 %v82, %v88
  %94 = vst.msk [vmem:[%s3] sm:$0xff] %vm18, %v90
  %95 = vst.msk [vmem:[%s3 + $0x8] sm:$0xff] %vm18, %v91
  %96 = vst.msk [vmem:[%s3 + $0x10] sm:$0xff] %vm18, %v92
  %97 = vst.msk [vmem:[%s3 + $0x18] sm:$0xff] %vm18, %v93
  // Predicated region
  $region14: #{_lambda_.26} parent=0 // pred_check
    _
  $region15: #{_lambda_.26} parent=0 // pred_check_branch
    %99 = sbr.rel (0) target = $region17
  $region16: #{_lambda_.26} parent=0 // pred_region
    _
  $region17: #{_lambda_.26} parent=0 // pred_fallthru
    _
  // Predicated region
  $region18: #{_lambda_.26} parent=0 // pred_check
    _
  $region19: #{_lambda_.26} parent=0 // pred_check_branch
    %101 = sbr.rel (0) target = $region21
  $region20: #{_lambda_.26} parent=0 // pred_region
    _
  $region21: #{_lambda_.26} parent=0 // pred_fallthru
    _

// kernel: _lambda_.29
$region0: #{_lambda_.29}
  #allocation0 [shape = 'u32[]', space=smem, size = 0x4, offset = 0x4, fixed_abs, tag = 'smem constant byte address 0x4 - core index']
  #allocation1 [shape = 'u32[144,128]{1,0:T(1,128)}', space=vmem, size = 0x12000, scoped, tag = 'internal scratch']
  %s0 = inlined_call_operand.vmem [shape: f32[32,32], index: 0, kind: input, shape index: {}]
  %s1 = inlined_call_operand.vmem [shape: bf16[32,32], index: 1, kind: input, shape index: {}]
  %s2 = inlined_call_operand.vmem [shape: f32[1,32], index: 2, kind: input, shape index: {}]
  %s3 = inlined_call_operand.vmem [shape: f32[32,32], index: 3, kind: output, shape index: {}]
  %s4 = sld [smem:[#allocation0]]
  $region22: #{_lambda_.29} parent=0
    _
  %s6 = ssub.s32 1, %s4
  %s7 = scalar_select 0, %s6, %s4
  // Predicated region
  $region2: #{_lambda_.29} parent=0 // pred_check
    _
  $region3: #{_lambda_.29} parent=0 // pred_check_branch
    %9 = sbr.rel (0) target = $region5
  $region4: #{_lambda_.29} parent=0 // pred_region
    _
  $region5: #{_lambda_.29} parent=0 // pred_fallthru
    _
  // Predicated region
  $region6: #{_lambda_.29} parent=0 // pred_check
    _
  $region7: #{_lambda_.29} parent=0 // pred_check_branch
    %11 = sbr.rel (0) target = $region9
  $region8: #{_lambda_.29} parent=0 // pred_region
    _
  $region9: #{_lambda_.29} parent=0 // pred_fallthru
    _
  // Predicated region
  $region10: #{_lambda_.29} parent=0 // pred_check
    _
  $region11: #{_lambda_.29} parent=0 // pred_check_branch
    %13 = sbr.rel (0) target = $region13
  $region12: #{_lambda_.29} parent=0 // pred_region
    _
  $region13: #{_lambda_.29} parent=0 // pred_fallthru
    _
  %v15 = vld [vmem:[%s0] sm:$0xff]
  %v16 = vld [vmem:[%s0 + $0x8] sm:$0xff]
  %v17 = vld [vmem:[%s0 + $0x10] sm:$0xff]
  %v18 = vld [vmem:[%s0 + $0x18] sm:$0xff]
  %v19 = vpack.c.bf16 %v16, %v15
  %v20 = vpack.c.bf16 %v18, %v17
  %v21 = vld [vmem:[%s1] sm:$0xf]
  %v22 = vld [vmem:[%s1 + $0x4] sm:$0xf]
  %v23 = vld [vmem:[%s1 + $0x8] sm:$0xf]
  %v24 = vld [vmem:[%s1 + $0xc] sm:$0xf]
  %v25 = vld [vmem:[%s2] sm:$0x1]
  %v27 = vlaneseq
  %v28 = vshrl.u32 %v27, 7
  %v29 = vsub.s32 0, %v28
  %v30 = vrot.slane %v25, %v29
  %v36 = vunpack.c.l.b16 %v21
  %v37 = vunpack.c.l.b16 %v22
  %v38 = vunpack.c.l.b16 %v23
  %v39 = vunpack.c.l.b16 %v24
  %v40 = vpack.c.b16 %v37, %v36
  %v41 = vpack.c.b16 %v39, %v38
  %vm44 = vcmask 261120
  %v46 = vsel %vm44, %v19, 0
  %v49 = vsel %vm44, %v20, 0
  %51 = vmatprep.subr.bf16.mxu0 0
  %52 = vmatpush1.bf16.msra.mxu0 %v40
  %53 = vmatprep.subr.bf16.mxu0 0
  %54 = vmatpush1.bf16.msra.mxu0 %v41
  %55 = vmatprep.subr.bf16.mxu0 0
  %56 = vmatpush1.bf16.msra.mxu0 0
  %57 = vmatprep.subr.bf16.mxu0 0
  %58 = vmatpush1.bf16.msra.mxu0 0
  %59 = vmatprep.subr.bf16.mxu0 0
  %60 = vmatpush1.bf16.msra.mxu0 0
  %61 = vmatprep.subr.bf16.mxu0 0
  %62 = vmatpush1.bf16.msra.mxu0 0
  %63 = vmatprep.subr.bf16.mxu0 0
  %64 = vmatpush1.bf16.msra.mxu0 0
  %65 = vmatprep.subr.bf16.mxu0 0
  %66 = vmatpush1.bf16.msra.mxu0 0
  %67 = vmatprep.subr.bf16.mxu0 0
  %68 = vmatpush1.bf16.msra.mxu0 0
  %69 = vmatprep.subr.bf16.mxu0 0
  %70 = vmatpush1.bf16.msra.mxu0 0
  %71 = vmatprep.subr.bf16.mxu0 0
  %72 = vmatpush1.bf16.msra.mxu0 0
  %73 = vmatprep.subr.bf16.mxu0 0
  %74 = vmatpush1.bf16.msra.mxu0 0
  %75 = vmatprep.subr.bf16.mxu0 0
  %76 = vmatpush1.bf16.msra.mxu0 0
  %77 = vmatprep.subr.bf16.mxu0 0
  %78 = vmatpush1.bf16.msra.mxu0 0
  %79 = vmatprep.subr.bf16.mxu0 0
  %80 = vmatpush1.bf16.msra.mxu0 0
  %81 = vmatprep.subr.bf16.mxu0 0
  %82 = vmatpush1.bf16.msra.mxu0 0
  %83 = vmatprep.mubr.bf16.mxu0 0
  %84 = vmatmul.mubr.bf16.gmra.mrb[0].mxu0 %v46
  %v85 = vpop.f32.mrb[0].mxu0
  %v86 = vadd.f32 %v30, %v85
  %v87 = vpop.f32.mrb[0].mxu0
  %v88 = vpop.f32.mrb[0].mxu0
  %v89 = vadd.f32 %v30, %v88
  %v90 = vpop.f32.mrb[0].mxu0
  %91 = vmatprep.mubr.bf16.mxu0 0
  %92 = vmatmul.mubr.bf16.gmra.mrb[0].mxu0 %v49
  %v93 = vpop.f32.mrb[0].mxu0
  %v94 = vadd.f32 %v30, %v93
  %v95 = vpop.f32.mrb[0].mxu0
  %v96 = vpop.f32.mrb[0].mxu0
  %v97 = vadd.f32 %v30, %v96
  %v98 = vpop.f32.mrb[0].mxu0
  %99 = vdwg.mxu0
  %100 = vst.msk [vmem:[%s3] sm:$0xff] %vm44, %v86
  %101 = vst.msk [vmem:[%s3 + $0x8] sm:$0xff] %vm44, %v89
  %102 = vst.msk [vmem:[%s3 + $0x10] sm:$0xff] %vm44, %v94
  %103 = vst.msk [vmem:[%s3 + $0x18] sm:$0xff] %vm44, %v97
  // Predicated region
  $region14: #{_lambda_.29} parent=0 // pred_check
    _
  $region15: #{_lambda_.29} parent=0 // pred_check_branch
    %105 = sbr.rel (0) target = $region17
  $region16: #{_lambda_.29} parent=0 // pred_region
    _
  $region17: #{_lambda_.29} parent=0 // pred_fallthru
    _
  // Predicated region
  $region18: #{_lambda_.29} parent=0 // pred_check
    _
  $region19: #{_lambda_.29} parent=0 // pred_check_branch
    %107 = sbr.rel (0) target = $region21
  $region20: #{_lambda_.29} parent=0 // pred_region
    _
  $region21: #{_lambda_.29} parent=0 // pred_fallthru
    _

// kernel: _lambda_.30
$region0: #{_lambda_.30}
  #allocation0 [shape = 'u32[]', space=smem, size = 0x4, offset = 0x4, fixed_abs, tag = 'smem constant byte address 0x4 - core index']
  #allocation1 [shape = 'u32[144,128]{1,0:T(1,128)}', space=vmem, size = 0x12000, scoped, tag = 'internal scratch']
  %s0 = inlined_call_operand.vmem [shape: f32[32,32], index: 0, kind: input, shape index: {}]
  %s1 = inlined_call_operand.vmem [shape: f32[1,32], index: 1, kind: input, shape index: {}]
  %s2 = inlined_call_operand.vmem [shape: f32[1,32], index: 2, kind: input, shape index: {}]
  %s3 = inlined_call_operand.vmem [shape: bf16[32,128], index: 3, kind: input, shape index: {}]
  %s4 = inlined_call_operand.vmem [shape: f32[1,128], index: 4, kind: input, shape index: {}]
  %s5 = inlined_call_operand.vmem [shape: f32[32,128], index: 5, kind: output, shape index: {}]
  %s6 = sld [smem:[#allocation0]]
  $region30: #{_lambda_.30} parent=0
    _
  %s8 = ssub.s32 1, %s6
  %s9 = scalar_select 0, %s8, %s6
  // Predicated region
  $region2: #{_lambda_.30} parent=0 // pred_check
    _
  $region3: #{_lambda_.30} parent=0 // pred_check_branch
    %11 = sbr.rel (0) target = $region5
  $region4: #{_lambda_.30} parent=0 // pred_region
    _
  $region5: #{_lambda_.30} parent=0 // pred_fallthru
    _
  // Predicated region
  $region6: #{_lambda_.30} parent=0 // pred_check
    _
  $region7: #{_lambda_.30} parent=0 // pred_check_branch
    %13 = sbr.rel (0) target = $region9
  $region8: #{_lambda_.30} parent=0 // pred_region
    _
  $region9: #{_lambda_.30} parent=0 // pred_fallthru
    _
  // Predicated region
  $region10: #{_lambda_.30} parent=0 // pred_check
    _
  $region11: #{_lambda_.30} parent=0 // pred_check_branch
    %15 = sbr.rel (0) target = $region13
  $region12: #{_lambda_.30} parent=0 // pred_region
    _
  $region13: #{_lambda_.30} parent=0 // pred_fallthru
    _
  // Predicated region
  $region14: #{_lambda_.30} parent=0 // pred_check
    _
  $region15: #{_lambda_.30} parent=0 // pred_check_branch
    %17 = sbr.rel (0) target = $region17
  $region16: #{_lambda_.30} parent=0 // pred_region
    _
  $region17: #{_lambda_.30} parent=0 // pred_fallthru
    _
  // Predicated region
  $region18: #{_lambda_.30} parent=0 // pred_check
    _
  $region19: #{_lambda_.30} parent=0 // pred_check_branch
    %19 = sbr.rel (0) target = $region21
  $region20: #{_lambda_.30} parent=0 // pred_region
    _
  $region21: #{_lambda_.30} parent=0 // pred_fallthru
    _
  %v21 = vld [vmem:[%s0] sm:$0xff]
  %v22 = vld [vmem:[%s0 + $0x8] sm:$0xff]
  %v23 = vld [vmem:[%s0 + $0x10] sm:$0xff]
  %v24 = vld [vmem:[%s0 + $0x18] sm:$0xff]
  %vm25 = vcmask 261120
  %v26 = vsel %vm25, %v21, 0.0
  %27 = vadd.xlane.f32.xlu0 %v26
  %v28 = vpop.xlane.xlu0 %27
  %v29 = vsel %vm25, %v22, 0.0
  %30 = vadd.xlane.f32.xlu0 %v29
  %v31 = vpop.xlane.xlu0 %30
  %v32 = vsel %vm25, %v23, 0.0
  %33 = vadd.xlane.f32.xlu0 %v32
  %v34 = vpop.xlane.xlu0 %33
  %v35 = vsel %vm25, %v24, 0.0
  %36 = vadd.xlane.f32.xlu0 %v35
  %v37 = vpop.xlane.xlu0 %36
  %v38 = vrcp.pop 32.0
  %v39 = vmul.f32 %v28, %v38
  %v40 = vmul.f32 %v31, %v38
  %v41 = vmul.f32 %v34, %v38
  %v42 = vmul.f32 %v37, %v38
  %v43 = vsub.f32 %v21, %v39
  %v44 = vsub.f32 %v22, %v40
  %v45 = vsub.f32 %v23, %v41
  %v46 = vsub.f32 %v24, %v42
  %v47 = vmul.f32 %v43, %v43
  %v48 = vmul.f32 %v44, %v44
  %v49 = vmul.f32 %v45, %v45
  %v50 = vmul.f32 %v46, %v46
  %v51 = vsel %vm25, %v47, 0.0
  %52 = vadd.xlane.f32.xlu0 %v51
  %v53 = vpop.xlane.xlu0 %52
  %v54 = vsel %vm25, %v48, 0.0
  %55 = vadd.xlane.f32.xlu0 %v54
  %v56 = vpop.xlane.xlu0 %55
  %v57 = vsel %vm25, %v49, 0.0
  %58 = vadd.xlane.f32.xlu0 %v57
  %v59 = vpop.xlane.xlu0 %58
  %v60 = vsel %vm25, %v50, 0.0
  %61 = vadd.xlane.f32.xlu0 %v60
  %v62 = vpop.xlane.xlu0 %61
  %v63 = vmul.f32 %v53, %v38
  %v64 = vmul.f32 %v56, %v38
  %v65 = vmul.f32 %v59, %v38
  %v66 = vmul.f32 %v62, %v38
  %v67 = vadd.f32 %v63, 1e-05
  %v68 = vadd.f32 %v64, 1e-05
  %v69 = vadd.f32 %v65, 1e-05
  %v70 = vadd.f32 %v66, 1e-05
  %v71 = vrsqrt.pop %v67
  %v72 = vrsqrt.pop %v68
  %v73 = vrsqrt.pop %v69
  %v74 = vrsqrt.pop %v70
  %v75 = vmul.f32 %v43, %v71
  %v76 = vmul.f32 %v44, %v72
  %v77 = vmul.f32 %v45, %v73
  %v78 = vmul.f32 %v46, %v74
  %v79 = vld [vmem:[%s1] sm:$0x1]
  %v81 = vlaneseq
  %v82 = vshrl.u32 %v81, 7
  %v83 = vsub.s32 0, %v82
  %v84 = vrot.slane %v79, %v83
  %v86 = vmul.f32 %v75, %v84
  %v87 = vmul.f32 %v76, %v84
  %v88 = vmul.f32 %v77, %v84
  %v89 = vmul.f32 %v78, %v84
  %v90 = vld [vmem:[%s2] sm:$0x1]
  %v92 = vlaneseq
  %v93 = vshrl.u32 %v92, 7
  %v94 = vsub.s32 0, %v93
  %v95 = vrot.slane %v90, %v94
  %v97 = vadd.f32 %v86, %v95
  %v98 = vadd.f32 %v87, %v95
  %v99 = vadd.f32 %v88, %v95
  %v100 = vadd.f32 %v89, %v95
  %v101 = vpack.c.bf16 %v98, %v97
  %v102 = vpack.c.bf16 %v100, %v99
  %v103 = vld [vmem:[%s3] sm:$0xf]
  %v104 = vld [vmem:[%s3 + $0x4] sm:$0xf]
  %v105 = vld [vmem:[%s3 + $0x8] sm:$0xf]
  %v106 = vld [vmem:[%s3 + $0xc] sm:$0xf]
  %v107 = vld [vmem:[%s4] sm:$0x1]
  %v109 = vlaneseq
  %v110 = vshrl.u32 %v109, 7
  %v111 = vsub.s32 0, %v110
  %v112 = vrot.slane %v107, %v111
  %v118 = vunpack.c.l.b16 %v103
  %v119 = vunpack.c.l.b16 %v104
  %v120 = vunpack.c.l.b16 %v105
  %v121 = vunpack.c.l.b16 %v106
  %v122 = vpack.c.b16 %v119, %v118
  %v123 = vpack.c.b16 %v121, %v120
  %v127 = vsel %vm25, %v101, 0
  %v130 = vsel %vm25, %v102, 0
  %132 = vmatprep.subr.bf16.mxu0 0
  %133 = vmatpush1.bf16.msra.mxu0 %v122
  %134 = vmatprep.subr.bf16.mxu0 0
  %135 = vmatpush1.bf16.msra.mxu0 %v123
  %136 = vmatprep.subr.bf16.mxu0 0
  %137 = vmatpush1.bf16.msra.mxu0 0
  %138 = vmatprep.subr.bf16.mxu0 0
  %139 = vmatpush1.bf16.msra.mxu0 0
  %140 = vmatprep.subr.bf16.mxu0 0
  %141 = vmatpush1.bf16.msra.mxu0 0
  %142 = vmatprep.subr.bf16.mxu0 0
  %143 = vmatpush1.bf16.msra.mxu0 0
  %144 = vmatprep.subr.bf16.mxu0 0
  %145 = vmatpush1.bf16.msra.mxu0 0
  %146 = vmatprep.subr.bf16.mxu0 0
  %147 = vmatpush1.bf16.msra.mxu0 0
  %148 = vmatprep.subr.bf16.mxu0 0
  %149 = vmatpush1.bf16.msra.mxu0 0
  %150 = vmatprep.subr.bf16.mxu0 0
  %151 = vmatpush1.bf16.msra.mxu0 0
  %152 = vmatprep.subr.bf16.mxu0 0
  %153 = vmatpush1.bf16.msra.mxu0 0
  %154 = vmatprep.subr.bf16.mxu0 0
  %155 = vmatpush1.bf16.msra.mxu0 0
  %156 = vmatprep.subr.bf16.mxu0 0
  %157 = vmatpush1.bf16.msra.mxu0 0
  %158 = vmatprep.subr.bf16.mxu0 0
  %159 = vmatpush1.bf16.msra.mxu0 0
  %160 = vmatprep.subr.bf16.mxu0 0
  %161 = vmatpush1.bf16.msra.mxu0 0
  %162 = vmatprep.subr.bf16.mxu0 0
  %163 = vmatpush1.bf16.msra.mxu0 0
  %164 = vmatprep.mubr.bf16.mxu0 0
  %165 = vmatmul.mubr.bf16.gmra.mrb[0].mxu0 %v127
  %v166 = vpop.f32.mrb[0].mxu0
  %v167 = vadd.f32 %v112, %v166
  %v168 = vpop.f32.mrb[0].mxu0
  %v169 = vpop.f32.mrb[0].mxu0
  %v170 = vadd.f32 %v112, %v169
  %v171 = vpop.f32.mrb[0].mxu0
  %172 = vmatprep.mubr.bf16.mxu0 0
  %173 = vmatmul.mubr.bf16.gmra.mrb[0].mxu0 %v130
  %v174 = vpop.f32.mrb[0].mxu0
  %v175 = vadd.f32 %v112, %v174
  %v176 = vpop.f32.mrb[0].mxu0
  %v177 = vpop.f32.mrb[0].mxu0
  %v178 = vadd.f32 %v112, %v177
  %v179 = vpop.f32.mrb[0].mxu0
  %180 = vdwg.mxu0
  %v181 = vmul.f32 %v167, 0.5
  %v182 = vmul.f32 %v170, 0.5
  %v183 = vmul.f32 %v175, 0.5
  %v184 = vmul.f32 %v178, 0.5
  %v185 = vmul.f32 %v167, 0.70710677
  %v186 = vmul.f32 %v170, 0.70710677
  %v187 = vmul.f32 %v175, 0.70710677
  %v188 = vmul.f32 %v178, 0.70710677
  %vm189 = vcmp.ge.f32.partialorder %v185, 0.0
  %vm190 = vcmp.ge.f32.partialorder %v186, 0.0
  %vm191 = vcmp.ge.f32.partialorder %v187, 0.0
  %vm192 = vcmp.ge.f32.partialorder %v188, 0.0
  %v193 = vsel %vm189, 1.0, -1.0
  %v194 = vsel %vm190, 1.0, -1.0
  %v195 = vsel %vm191, 1.0, -1.0
  %v196 = vsel %vm192, 1.0, -1.0
  %v197 = vand.u32 2147483647, %v185
  %v198 = vand.u32 2147483647, %v186
  %v199 = vand.u32 2147483647, %v187
  %v200 = vand.u32 2147483647, %v188
  %v201 = vmul.f32 %v197, 0.3275911
  %v202 = vmul.f32 %v198, 0.3275911
  %v203 = vmul.f32 %v199, 0.3275911
  %v204 = vmul.f32 %v200, 0.3275911
  %v205 = vadd.f32 %v201, 1.0
  %v206 = vadd.f32 %v202, 1.0
  %v207 = vadd.f32 %v203, 1.0
  %v208 = vadd.f32 %v204, 1.0
  %v209 = vrcp.pop %v205
  %v210 = vmul.f32 1.0, %v209
  %v211 = vrcp.pop %v206
  %v212 = vmul.f32 1.0, %v211
  %v213 = vrcp.pop %v207
  %v214 = vmul.f32 1.0, %v213
  %v215 = vrcp.pop %v208
  %v216 = vmul.f32 1.0, %v215
  %v217 = vmul.f32 %v210, 1.0614054
  %v218 = vmul.f32 %v212, 1.0614054
  %v219 = vmul.f32 %v214, 1.0614054
  %v220 = vmul.f32 %v216, 1.0614054
  %v221 = vadd.f32 %v217, -1.4531521
  %v222 = vadd.f32 %v218, -1.4531521
  %v223 = vadd.f32 %v219, -1.4531521
  %v224 = vadd.f32 %v220, -1.4531521
  %v225 = vmul.f32 %v221, %v210
  %v226 = vmul.f32 %v222, %v212
  %v227 = vmul.f32 %v223, %v214
  %v228 = vmul.f32 %v224, %v216
  %v229 = vadd.f32 %v225, 1.4214138
  %v230 = vadd.f32 %v226, 1.4214138
  %v231 = vadd.f32 %v227, 1.4214138
  %v232 = vadd.f32 %v228, 1.4214138
  %v233 = vmul.f32 %v229, %v210
  %v234 = vmul.f32 %v230, %v212
  %v235 = vmul.f32 %v231, %v214
  %v236 = vmul.f32 %v232, %v216
  %v237 = vadd.f32 %v233, -0.28449672
  %v238 = vadd.f32 %v234, -0.28449672
  %v239 = vadd.f32 %v235, -0.28449672
  %v240 = vadd.f32 %v236, -0.28449672
  %v241 = vmul.f32 %v237, %v210
  %v242 = vmul.f32 %v238, %v212
  %v243 = vmul.f32 %v239, %v214
  %v244 = vmul.f32 %v240, %v216
  %v245 = vadd.f32 %v241, 0.2548296
  %v246 = vadd.f32 %v242, 0.2548296
  %v247 = vadd.f32 %v243, 0.2548296
  %v248 = vadd.f32 %v244, 0.2548296
  %v249 = vmul.f32 %v245, %v210
  %v250 = vmul.f32 %v246, %v212
  %v251 = vmul.f32 %v247, %v214
  %v252 = vmul.f32 %v248, %v216
  %v253 = vsub.f32 0.0, %v197
  %v254 = vsub.f32 0.0, %v198
  %v255 = vsub.f32 0.0, %v199
  %v256 = vsub.f32 0.0, %v200
  %v257 = vmul.f32 %v253, %v197
  %v258 = vmul.f32 %v254, %v198
  %v259 = vmul.f32 %v255, %v199
  %v260 = vmul.f32 %v256, %v200
  %v261 = vmul.f32 %v257, 1.442695
  %v262 = vpow.pop %v261
  %v263 = vmul.f32 %v258, 1.442695
  %v264 = vpow.pop %v263
  %v265 = vmul.f32 %v259, 1.442695
  %v266 = vpow.pop %v265
  %v267 = vmul.f32 %v260, 1.442695
  %v268 = vpow.pop %v267
  %v269 = vmul.f32 %v249, %v262
  %v270 = vmul.f32 %v250, %v264
  %v271 = vmul.f32 %v251, %v266
  %v272 = vmul.f32 %v252, %v268
  %v273 = vsub.f32 1.0, %v269
  %v274 = vsub.f32 1.0, %v270
  %v275 = vsub.f32 1.0, %v271
  %v276 = vsub.f32 1.0, %v272
  %v277 = vmul.f32 %v193, %v273
  %v278 = vmul.f32 %v194, %v274
  %v279 = vmul.f32 %v195, %v275
  %v280 = vmul.f32 %v196, %v276
  %v281 = vadd.f32 %v277, 1.0
  %v282 = vadd.f32 %v278, 1.0
  %v283 = vadd.f32 %v279, 1.0
  %v284 = vadd.f32 %v280, 1.0
  %v285 = vmul.f32 %v181, %v281
  %v286 = vmul.f32 %v182, %v282
  %v287 = vmul.f32 %v183, %v283
  %v288 = vmul.f32 %v184, %v284
  %289 = vst [vmem:[%s5] sm:$0xff] %v285
  %290 = vst [vmem:[%s5 + $0x8] sm:$0xff] %v286
  %291 = vst [vmem:[%s5 + $0x10] sm:$0xff] %v287
  %292 = vst [vmem:[%s5 + $0x18] sm:$0xff] %v288
  // Predicated region
  $region22: #{_lambda_.30} parent=0 // pred_check
    _
  $region23: #{_lambda_.30} parent=0 // pred_check_branch
    %294 = sbr.rel (0) target = $region25
  $region24: #{_lambda_.30} parent=0 // pred_region
    _
  $region25: #{_lambda_.30} parent=0 // pred_fallthru
    _
  // Predicated region
  $region26: #{_lambda_.30} parent=0 // pred_check
    _
  $region27: #{_lambda_.30} parent=0 // pred_check_branch
    %296 = sbr.rel (0) target = $region29
  $region28: #{_lambda_.30} parent=0 // pred_region
    _
  $region29: #{_lambda_.30} parent=0 // pred_fallthru
    _

// kernel: _lambda_.31
$region0: #{_lambda_.31}
  #allocation0 [shape = 'u32[]', space=smem, size = 0x4, offset = 0x4, fixed_abs, tag = 'smem constant byte address 0x4 - core index']
  #allocation1 [shape = 'u32[144,128]{1,0:T(1,128)}', space=vmem, size = 0x12000, scoped, tag = 'internal scratch']
  %s0 = inlined_call_operand.vmem [shape: f32[32,128], index: 0, kind: input, shape index: {}]
  %s1 = inlined_call_operand.vmem [shape: bf16[128,32], index: 1, kind: input, shape index: {}]
  %s2 = inlined_call_operand.vmem [shape: f32[1,32], index: 2, kind: input, shape index: {}]
  %s3 = inlined_call_operand.vmem [shape: f32[32,32], index: 3, kind: output, shape index: {}]
  %s4 = sld [smem:[#allocation0]]
  $region22: #{_lambda_.31} parent=0
    _
  %s6 = ssub.s32 1, %s4
  %s7 = scalar_select 0, %s6, %s4
  // Predicated region
  $region2: #{_lambda_.31} parent=0 // pred_check
    _
  $region3: #{_lambda_.31} parent=0 // pred_check_branch
    %9 = sbr.rel (0) target = $region5
  $region4: #{_lambda_.31} parent=0 // pred_region
    _
  $region5: #{_lambda_.31} parent=0 // pred_fallthru
    _
  // Predicated region
  $region6: #{_lambda_.31} parent=0 // pred_check
    _
  $region7: #{_lambda_.31} parent=0 // pred_check_branch
    %11 = sbr.rel (0) target = $region9
  $region8: #{_lambda_.31} parent=0 // pred_region
    _
  $region9: #{_lambda_.31} parent=0 // pred_fallthru
    _
  // Predicated region
  $region10: #{_lambda_.31} parent=0 // pred_check
    _
  $region11: #{_lambda_.31} parent=0 // pred_check_branch
    %13 = sbr.rel (0) target = $region13
  $region12: #{_lambda_.31} parent=0 // pred_region
    _
  $region13: #{_lambda_.31} parent=0 // pred_fallthru
    _
  %v15 = vld [vmem:[%s0] sm:$0xff]
  %v16 = vld [vmem:[%s0 + $0x8] sm:$0xff]
  %v17 = vld [vmem:[%s0 + $0x10] sm:$0xff]
  %v18 = vld [vmem:[%s0 + $0x18] sm:$0xff]
  %v19 = vpack.c.bf16 %v16, %v15
  %v20 = vpack.c.bf16 %v18, %v17
  %v21 = vld [vmem:[%s1] sm:$0xf]
  %v22 = vld [vmem:[%s1 + $0x4] sm:$0xf]
  %v23 = vld [vmem:[%s1 + $0x8] sm:$0xf]
  %v24 = vld [vmem:[%s1 + $0xc] sm:$0xf]
  %v25 = vld [vmem:[%s1 + $0x10] sm:$0xf]
  %v26 = vld [vmem:[%s1 + $0x14] sm:$0xf]
  %v27 = vld [vmem:[%s1 + $0x18] sm:$0xf]
  %v28 = vld [vmem:[%s1 + $0x1c] sm:$0xf]
  %v29 = vld [vmem:[%s1 + $0x20] sm:$0xf]
  %v30 = vld [vmem:[%s1 + $0x24] sm:$0xf]
  %v31 = vld [vmem:[%s1 + $0x28] sm:$0xf]
  %v32 = vld [vmem:[%s1 + $0x2c] sm:$0xf]
  %v33 = vld [vmem:[%s1 + $0x30] sm:$0xf]
  %v34 = vld [vmem:[%s1 + $0x34] sm:$0xf]
  %v35 = vld [vmem:[%s1 + $0x38] sm:$0xf]
  %v36 = vld [vmem:[%s1 + $0x3c] sm:$0xf]
  %v37 = vld [vmem:[%s2] sm:$0x1]
  %v39 = vlaneseq
  %v40 = vshrl.u32 %v39, 7
  %v41 = vsub.s32 0, %v40
  %v42 = vrot.slane %v37, %v41
  %v60 = vunpack.c.l.b16 %v21
  %v61 = vunpack.c.l.b16 %v22
  %v62 = vunpack.c.l.b16 %v23
  %v63 = vunpack.c.l.b16 %v24
  %v64 = vunpack.c.l.b16 %v25
  %v65 = vunpack.c.l.b16 %v26
  %v66 = vunpack.c.l.b16 %v27
  %v67 = vunpack.c.l.b16 %v28
  %v68 = vunpack.c.l.b16 %v29
  %v69 = vunpack.c.l.b16 %v30
  %v70 = vunpack.c.l.b16 %v31
  %v71 = vunpack.c.l.b16 %v32
  %v72 = vunpack.c.l.b16 %v33
  %v73 = vunpack.c.l.b16 %v34
  %v74 = vunpack.c.l.b16 %v35
  %v75 = vunpack.c.l.b16 %v36
  %v76 = vpack.c.b16 %v61, %v60
  %v77 = vpack.c.b16 %v63, %v62
  %v78 = vpack.c.b16 %v65, %v64
  %v79 = vpack.c.b16 %v67, %v66
  %v80 = vpack.c.b16 %v69, %v68
  %v81 = vpack.c.b16 %v71, %v70
  %v82 = vpack.c.b16 %v73, %v72
  %v83 = vpack.c.b16 %v75, %v74
  %92 = vmatprep.subr.bf16.mxu0 0
  %93 = vmatpush1.bf16.msra.mxu0 %v76
  %94 = vmatprep.subr.bf16.mxu0 0
  %95 = vmatpush1.bf16.msra.mxu0 %v77
  %96 = vmatprep.subr.bf16.mxu0 0
  %97 = vmatpush1.bf16.msra.mxu0 %v78
  %98 = vmatprep.subr.bf16.mxu0 0
  %99 = vmatpush1.bf16.msra.mxu0 %v79
  %100 = vmatprep.subr.bf16.mxu0 0
  %101 = vmatpush1.bf16.msra.mxu0 %v80
  %102 = vmatprep.subr.bf16.mxu0 0
  %103 = vmatpush1.bf16.msra.mxu0 %v81
  %104 = vmatprep.subr.bf16.mxu0 0
  %105 = vmatpush1.bf16.msra.mxu0 %v82
  %106 = vmatprep.subr.bf16.mxu0 0
  %107 = vmatpush1.bf16.msra.mxu0 %v83
  %108 = vmatprep.subr.bf16.mxu0 0
  %109 = vmatpush1.bf16.msra.mxu0 0
  %110 = vmatprep.subr.bf16.mxu0 0
  %111 = vmatpush1.bf16.msra.mxu0 0
  %112 = vmatprep.subr.bf16.mxu0 0
  %113 = vmatpush1.bf16.msra.mxu0 0
  %114 = vmatprep.subr.bf16.mxu0 0
  %115 = vmatpush1.bf16.msra.mxu0 0
  %116 = vmatprep.subr.bf16.mxu0 0
  %117 = vmatpush1.bf16.msra.mxu0 0
  %118 = vmatprep.subr.bf16.mxu0 0
  %119 = vmatpush1.bf16.msra.mxu0 0
  %120 = vmatprep.subr.bf16.mxu0 0
  %121 = vmatpush1.bf16.msra.mxu0 0
  %122 = vmatprep.subr.bf16.mxu0 0
  %123 = vmatpush1.bf16.msra.mxu0 0
  %124 = vmatprep.mubr.bf16.mxu0 0
  %125 = vmatmul.mubr.bf16.gmra.mrb[0].mxu0 %v19
  %v126 = vpop.f32.mrb[0].mxu0
  %v127 = vadd.f32 %v42, %v126
  %v128 = vpop.f32.mrb[0].mxu0
  %v129 = vpop.f32.mrb[0].mxu0
  %v130 = vadd.f32 %v42, %v129
  %v131 = vpop.f32.mrb[0].mxu0
  %132 = vmatprep.mubr.bf16.mxu0 0
  %133 = vmatmul.mubr.bf16.gmra.mrb[0].mxu0 %v20
  %v134 = vpop.f32.mrb[0].mxu0
  %v135 = vadd.f32 %v42, %v134
  %v136 = vpop.f32.mrb[0].mxu0
  %v137 = vpop.f32.mrb[0].mxu0
  %v138 = vadd.f32 %v42, %v137
  %v139 = vpop.f32.mrb[0].mxu0
  %140 = vdwg.mxu0
  %vm141 = vcmask 261120
  %142 = vst.msk [vmem:[%s3] sm:$0xff] %vm141, %v127
  %143 = vst.msk [vmem:[%s3 + $0x8] sm:$0xff] %vm141, %v130
  %144 = vst.msk [vmem:[%s3 + $0x10] sm:$0xff] %vm141, %v135
  %145 = vst.msk [vmem:[%s3 + $0x18] sm:$0xff] %vm141, %v138
  // Predicated region
  $region14: #{_lambda_.31} parent=0 // pred_check
    _
  $region15: #{_lambda_.31} parent=0 // pred_check_branch
    %147 = sbr.rel (0) target = $region17
  $region16: #{_lambda_.31} parent=0 // pred_region
    _
  $region17: #{_lambda_.31} parent=0 // pred_fallthru
    _
  // Predicated region
  $region18: #{_lambda_.31} parent=0 // pred_check
    _
  $region19: #{_lambda_.31} parent=0 // pred_check_branch
    %149 = sbr.rel (0) target = $region21
  $region20: #{_lambda_.31} parent=0 // pred_region
    _
  $region21: #{_lambda_.31} parent=0 // pred_fallthru
    _

// kernel: _lambda_.28
$region0: #{_lambda_.28}
  #allocation0 [shape = 'u32[]', space=smem, size = 0x4, offset = 0x4, fixed_abs, tag = 'smem constant byte address 0x4 - core index']
  #allocation1 [shape = 'u32[144,128]{1,0:T(1,128)}', space=vmem, size = 0x12000, scoped, tag = 'internal scratch']
  %s0 = inlined_call_operand.vmem [shape: f32[8,4,96], index: 0, kind: input, shape index: {}]
  %s1 = inlined_call_operand.vmem [shape: f32[4,2,4,4], index: 1, kind: input, shape index: {}]
  %s2 = inlined_call_operand.vmem [shape: f32[8,4,32], index: 2, kind: output, shape index: {}]
  %s3 = sld [smem:[#allocation0]]
  $region41: #{_lambda_.28} parent=0
    _
  %s5 = ssub.s32 1, %s3
  %s6 = scalar_select 0, %s5, %s3
  loop: start=0, step=1, limit=4
  $region2: #{_lambda_.28} parent=0 // loop_pre_header
    _
  $region3: #{_lambda_.28} parent=0 // loop_header
    %s8 = sphi 0, %s12
    %p9 = scmp.ge.s32.totalorder %s8, 4
    %s18 = sphi 0, %s20
    %s21 = sphi 0, %s18
    %s22 = sphi 0, %s21
    %s38 = sphi 0, %s22
    %s42 = sphi 0, %s42
    %s44 = sphi 0, %s42
    %s45 = sphi 0, %s44
    %s59 = sphi 0, %s45
    %s65 = sphi 0, %s67
    %s68 = sphi 0, %s65
    %s69 = sphi 0, %s68
    %s85 = sphi 0, %s69
  $region4: #{_lambda_.28} parent=0 // loop_header_branch
    %11 = sbr.rel (%p9) target = $region8
  $region5: #{_lambda_.28} parent=0 // loop_body
    %s13 = ssub.s32 %s8, 1
    %s14 = ssub.s32 %s8, 2
    %s15 = sadd.s32 %s8, 1
    %s16 = ssub.s32 %s8, %s15
    %p17 = scmp.eq.s32.totalorder %s16, 0
    %s19 = sadd.s32 %s18, 1
    %s20 = scalar_select %p17, %s18, %s19
    %p23 = pneg %p17
    %p24 = scmp.eq.s32.totalorder %s8, 1
    %p25 = por %p23, %p24
    %p26 = scmp.ne.s32.totalorder %s18, %s21
    %p27 = scmp.eq.s32.totalorder %s8, 0
    %p28 = por %p26, %p27
    %p29 = scmp.ne.s32.totalorder %s18, %s21
    %p30 = scmp.eq.s32.totalorder %s13, 1
    %p31 = por %p29, %p30
    %p32 = scmp.ne.s32.totalorder %s21, %s22
    %p33 = scmp.eq.s32.totalorder %s13, 0
    %p34 = por %p32, %p33
    %p35 = scmp.ne.s32.totalorder %s21, %s22
    %p36 = scmp.eq.s32.totalorder %s14, 1
    %p37 = por %p35, %p36
    %p39 = scmp.ne.s32.totalorder %s22, %s38
    %p40 = scmp.eq.s32.totalorder %s14, 0
    %p41 = por %p39, %p40
    %s43 = sadd.s32 %s42, 1
    %p46 = scmp.eq.s32.totalorder %s8, 1
    %p47 = scmp.ne.s32.totalorder %s42, %s44
    %p48 = scmp.eq.s32.totalorder %s8, 0
    %p49 = por %p47, %p48
    %p50 = scmp.ne.s32.totalorder %s42, %s44
    %p51 = scmp.eq.s32.totalorder %s13, 1
    %p52 = por %p50, %p51
    %p53 = scmp.ne.s32.totalorder %s44, %s45
    %p54 = scmp.eq.s32.totalorder %s13, 0
    %p55 = por %p53, %p54
    %p56 = scmp.ne.s32.totalorder %s44, %s45
    %p57 = scmp.eq.s32.totalorder %s14, 1
    %p58 = por %p56, %p57
    %p60 = scmp.ne.s32.totalorder %s45, %s59
    %p61 = scmp.eq.s32.totalorder %s14, 0
    %p62 = por %p60, %p61
    %s63 = ssub.s32 %s8, %s15
    %p64 = scmp.eq.s32.totalorder %s63, 0
    %s66 = sadd.s32 %s65, 1
    %s67 = scalar_select %p64, %s65, %s66
    %p70 = pneg %p64
    %p71 = scmp.eq.s32.totalorder %s8, 1
    %p72 = por %p70, %p71
    %p73 = scmp.ne.s32.totalorder %s65, %s68
    %p74 = scmp.eq.s32.totalorder %s8, 0
    %p75 = por %p73, %p74
    %p76 = scmp.ne.s32.totalorder %s65, %s68
    %p77 = scmp.eq.s32.totalorder %s13, 1
    %p78 = por %p76, %p77
    %p79 = scmp.ne.s32.totalorder %s68, %s69
    %p80 = scmp.eq.s32.totalorder %s13, 0
    %p81 = por %p79, %p80
    %p82 = scmp.ne.s32.totalorder %s68, %s69
    %p83 = scmp.eq.s32.totalorder %s14, 1
    %p84 = por %p82, %p83
    %p86 = scmp.ne.s32.totalorder %s69, %s85
    %p87 = scmp.eq.s32.totalorder %s14, 0
    %p88 = por %p86, %p87
    %p89 = scmp.le.s32.totalorder 1, %s8
    %p90 = scmp.lt.s32.totalorder %s8, 3
    %p91 = pnand %p89, %p90
    %p92 = pneg %p91
    // Predicated region
    $region9: #{_lambda_.28} parent=5 // pred_check
      _
    $region10: #{_lambda_.28} parent=5 // pred_check_branch
      %94 = sbr.rel (%p91) target = $region12
    $region11: #{_lambda_.28} parent=5 // pred_region
      %s95 = ssub.s32 %s8, 1
      // Predicated region
      $region13: #{_lambda_.28} parent=11 // pred_check
        %p96 = pneg %p55
      $region14: #{_lambda_.28} parent=11 // pred_check_branch
        %98 = sbr.rel (%p96) target = $region16
      $region15: #{_lambda_.28} parent=11 // pred_region
        _
      $region16: #{_lambda_.28} parent=11 // pred_fallthru
        _
    $region12: #{_lambda_.28} parent=5 // pred_fallthru
      _
    %p99 = scmp.lt.s32.totalorder %s8, 2
    // Predicated region
    $region17: #{_lambda_.28} parent=5 // pred_check
      %p100 = pneg %p99
    $region18: #{_lambda_.28} parent=5 // pred_check_branch
      %102 = sbr.rel (%p100) target = $region20
    $region19: #{_lambda_.28} parent=5 // pred_region
      // Predicated region
      $region21: #{_lambda_.28} parent=19 // pred_check
        %p103 = pneg %p28
      $region22: #{_lambda_.28} parent=19 // pred_check_branch
        %105 = sbr.rel (%p103) target = $region24
      $region23: #{_lambda_.28} parent=19 // pred_region
        %s106 = smul.u32 4, %s8
        %p107 = scmp.lt.s32.totalorder %s106, 7
        %s108 = scalar_select %p107, %s106, 7
        %s109 = smul.addr %s108, 4
        %s110 = scalar_lea.vmem %s0, %s109
        %s111 = smul.u32 4, %s8
      $region24: #{_lambda_.28} parent=19 // pred_fallthru
        _
    $region20: #{_lambda_.28} parent=5 // pred_fallthru
      _
    %p112 = scmp.le.s32.totalorder 1, %s8
    %p113 = scmp.lt.s32.totalorder %s8, 3
    %p114 = pnand %p112, %p113
    %p115 = pneg %p114
    // Predicated region
    $region25: #{_lambda_.28} parent=5 // pred_check
      _
    $region26: #{_lambda_.28} parent=5 // pred_check_branch
      %117 = sbr.rel (%p114) target = $region28
    $region27: #{_lambda_.28} parent=5 // pred_region
      %s118 = ssub.s32 %s8, 1
      %s119 = smul.u32 4, %s13
      %p120 = scmp.lt.s32.totalorder %s119, 7
      %s121 = scalar_select %p120, %s119, 7
      %s122 = smul.addr %s121, 4
      %s123 = scalar_lea.vmem %s0, %s122
      %p124 = pneg %p34
      %p125 = pneg %p31
      %p126 = pneg %p55
      %p127 = pneg %p52
      %p128 = pneg %p81
      %p129 = pneg %p78
      %s130 = smul.u32 4, %s13
      %p131 = scmp.lt.s32.totalorder %s130, 7
      %s132 = scalar_select %p131, %s130, 7
      %s133 = smul.addr %s132, 4
      %s134 = scalar_lea.vmem %s2, %s133
      %s135 = smul.u32 4, %s13
      %p136 = scmp.lt.s32.totalorder %s135, 7
      %s137 = scalar_select %p136, %s135, 7
      %s138 = smul.addr %s137, 4
      %s139 = scalar_lea.vmem %s0, %s138
      %s140 = smul.u32 4, %s13
      %s141 = smul.u32 4, %s13
      %p142 = scmp.lt.s32.totalorder %s141, 7
      %s143 = scalar_select %p142, %s141, 7
      %s144 = smul.addr %s143, 4
      %s145 = scalar_lea.vmem %s2, %s144
      %s146 = smul.u32 4, %s13
      %v148 = vld [vmem:[%s139] sm:$0xf]
      %v149 = vld [vmem:[%s139 + $0x4] sm:$0xf]
      %v150 = vld [vmem:[%s139 + $0x8] sm:$0xf]
      %v151 = vld [vmem:[%s139 + $0xc] sm:$0xf]
      %v152 = vld [vmem:[%s1] sm:$0xf]
      %v153 = vld [vmem:[%s1 + $0x4] sm:$0xf]
      %v154 = vld [vmem:[%s1 + $0x8] sm:$0xf]
      %v155 = vld [vmem:[%s1 + $0xc] sm:$0xf]
      %v156 = vld [vmem:[%s1 + $0x10] sm:$0xf]
      %v157 = vld [vmem:[%s1 + $0x14] sm:$0xf]
      %v158 = vld [vmem:[%s1 + $0x18] sm:$0xf]
      %v159 = vld [vmem:[%s1 + $0x1c] sm:$0xf]
      %v160 = vmul.f32 %v148, 0.25
      %v161 = vmul.f32 %v149, 0.25
      %v162 = vmul.f32 %v150, 0.25
      %v163 = vmul.f32 %v151, 0.25
      %v164 = vpack.c.bf16 %v160, %v160
      %v165 = vpack.c.bf16 %v161, %v161
      %v166 = vpack.c.bf16 %v162, %v162
      %v167 = vpack.c.bf16 %v163, %v163
      %v168 = vpack.c.bf16 %v148, %v148
      %v169 = vpack.c.bf16 %v149, %v149
      %v170 = vpack.c.bf16 %v150, %v150
      %v171 = vpack.c.bf16 %v151, %v151
      %173 = vrot.lane.b32.xlu0 %v168, 96
      %v174 = vpop.permute.xlu0 %173
      %vm175 = vcmask 130048
      %v177 = vsel %vm175, %v164, 0
      %v180 = vsel %vm175, %v174, 0
      %182 = vmatprep.subr.bf16.mxu0 0
      %183 = vmatpush1.bf16.xpose.msra.mxu0 %v180
      %184 = vmatprep.subr.bf16.mxu0 0
      %185 = vmatpush1.bf16.xpose.msra.mxu0 0
      %186 = vmatprep.subr.bf16.mxu0 0
      %187 = vmatpush1.bf16.xpose.msra.mxu0 0
      %188 = vmatprep.subr.bf16.mxu0 0
      %189 = vmatpush1.bf16.xpose.msra.mxu0 0
      %190 = vmatprep.subr.bf16.mxu0 0
      %191 = vmatpush1.bf16.xpose.msra.mxu0 0
      %192 = vmatprep.subr.bf16.mxu0 0
      %193 = vmatpush1.bf16.xpose.msra.mxu0 0
      %194 = vmatprep.subr.bf16.mxu0 0
      %195 = vmatpush1.bf16.xpose.msra.mxu0 0
      %196 = vmatprep.subr.bf16.mxu0 0
      %197 = vmatpush1.bf16.xpose.msra.mxu0 0
      %198 = vmatprep.subr.bf16.mxu0 0
      %199 = vmatpush1.bf16.xpose.msra.mxu0 0
      %200 = vmatprep.subr.bf16.mxu0 0
      %201 = vmatpush1.bf16.xpose.msra.mxu0 0
      %202 = vmatprep.subr.bf16.mxu0 0
      %203 = vmatpush1.bf16.xpose.msra.mxu0 0
      %204 = vmatprep.subr.bf16.mxu0 0
      %205 = vmatpush1.bf16.xpose.msra.mxu0 0
      %206 = vmatprep.subr.bf16.mxu0 0
      %207 = vmatpush1.bf16.xpose.msra.mxu0 0
      %208 = vmatprep.subr.bf16.mxu0 0
      %209 = vmatpush1.bf16.xpose.msra.mxu0 0
      %210 = vmatprep.subr.bf16.mxu0 0
      %211 = vmatpush1.bf16.xpose.msra.mxu0 0
      %212 = vmatprep.subr.bf16.mxu0 0
      %213 = vmatpush1.bf16.xpose.msra.mxu0 0
      %214 = vmatprep.mubr.bf16.mxu0 0
      %215 = vmatmul.mubr.bf16.gmra.mrb[0].mxu0 %v177
      %v216 = vpop.f32.mrb[0].mxu0
      %v217 = vadd.f32 %v152, %v216
      %v218 = vpop.f32.mrb[0].mxu0
      %v219 = vpop.f32.mrb[0].mxu0
      %v220 = vpop.f32.mrb[0].mxu0
      %221 = vdwg.mxu0
      %223 = vrot.lane.b32.xlu0 %v169, 96
      %v224 = vpop.permute.xlu0 %223
      %v226 = vsel %vm175, %v165, 0
      %v229 = vsel %vm175, %v224, 0
      %231 = vmatprep.subr.bf16.mxu0 0
      %232 = vmatpush1.bf16.xpose.msra.mxu0 %v229
      %233 = vmatprep.subr.bf16.mxu0 0
      %234 = vmatpush1.bf16.xpose.msra.mxu0 0
      %235 = vmatprep.subr.bf16.mxu0 0
      %236 = vmatpush1.bf16.xpose.msra.mxu0 0
      %237 = vmatprep.subr.bf16.mxu0 0
      %238 = vmatpush1.bf16.xpose.msra.mxu0 0
      %239 = vmatprep.subr.bf16.mxu0 0
      %240 = vmatpush1.bf16.xpose.msra.mxu0 0
      %241 = vmatprep.subr.bf16.mxu0 0
      %242 = vmatpush1.bf16.xpose.msra.mxu0 0
      %243 = vmatprep.subr.bf16.mxu0 0
      %244 = vmatpush1.bf16.xpose.msra.mxu0 0
      %245 = vmatprep.subr.bf16.mxu0 0
      %246 = vmatpush1.bf16.xpose.msra.mxu0 0
      %247 = vmatprep.subr.bf16.mxu0 0
      %248 = vmatpush1.bf16.xpose.msra.mxu0 0
      %249 = vmatprep.subr.bf16.mxu0 0
      %250 = vmatpush1.bf16.xpose.msra.mxu0 0
      %251 = vmatprep.subr.bf16.mxu0 0
      %252 = vmatpush1.bf16.xpose.msra.mxu0 0
      %253 = vmatprep.subr.bf16.mxu0 0
      %254 = vmatpush1.bf16.xpose.msra.mxu0 0
      %255 = vmatprep.subr.bf16.mxu0 0
      %256 = vmatpush1.bf16.xpose.msra.mxu0 0
      %257 = vmatprep.subr.bf16.mxu0 0
      %258 = vmatpush1.bf16.xpose.msra.mxu0 0
      %259 = vmatprep.subr.bf16.mxu0 0
      %260 = vmatpush1.bf16.xpose.msra.mxu0 0
      %261 = vmatprep.subr.bf16.mxu0 0
      %262 = vmatpush1.bf16.xpose.msra.mxu0 0
      %263 = vmatprep.mubr.bf16.mxu0 0
      %264 = vmatmul.mubr.bf16.gmra.mrb[0].mxu0 %v226
      %v265 = vpop.f32.mrb[0].mxu0
      %v266 = vadd.f32 %v154, %v265
      %v267 = vpop.f32.mrb[0].mxu0
      %v268 = vpop.f32.mrb[0].mxu0
      %v269 = vpop.f32.mrb[0].mxu0
      %270 = vdwg.mxu0
      %272 = vrot.lane.b32.xlu0 %v170, 96
      %v273 = vpop.permute.xlu0 %272
      %v275 = vsel %vm175, %v166, 0
      %v278 = vsel %vm175, %v273, 0
      %280 = vmatprep.subr.bf16.mxu0 0
      %281 = vmatpush1.bf16.xpose.msra.mxu0 %v278
      %282 = vmatprep.subr.bf16.mxu0 0
      %283 = vmatpush1.bf16.xpose.msra.mxu0 0
      %284 = vmatprep.subr.bf16.mxu0 0
      %285 = vmatpush1.bf16.xpose.msra.mxu0 0
      %286 = vmatprep.subr.bf16.mxu0 0
      %287 = vmatpush1.bf16.xpose.msra.mxu0 0
      %288 = vmatprep.subr.bf16.mxu0 0
      %289 = vmatpush1.bf16.xpose.msra.mxu0 0
      %290 = vmatprep.subr.bf16.mxu0 0
      %291 = vmatpush1.bf16.xpose.msra.mxu0 0
      %292 = vmatprep.subr.bf16.mxu0 0
      %293 = vmatpush1.bf16.xpose.msra.mxu0 0
      %294 = vmatprep.subr.bf16.mxu0 0
      %295 = vmatpush1.bf16.xpose.msra.mxu0 0
      %296 = vmatprep.subr.bf16.mxu0 0
      %297 = vmatpush1.bf16.xpose.msra.mxu0 0
      %298 = vmatprep.subr.bf16.mxu0 0
      %299 = vmatpush1.bf16.xpose.msra.mxu0 0
      %300 = vmatprep.subr.bf16.mxu0 0
      %301 = vmatpush1.bf16.xpose.msra.mxu0 0
      %302 = vmatprep.subr.bf16.mxu0 0
      %303 = vmatpush1.bf16.xpose.msra.mxu0 0
      %304 = vmatprep.subr.bf16.mxu0 0
      %305 = vmatpush1.bf16.xpose.msra.mxu0 0
      %306 = vmatprep.subr.bf16.mxu0 0
      %307 = vmatpush1.bf16.xpose.msra.mxu0 0
      %308 = vmatprep.subr.bf16.mxu0 0
      %309 = vmatpush1.bf16.xpose.msra.mxu0 0
      %310 = vmatprep.subr.bf16.mxu0 0
      %311 = vmatpush1.bf16.xpose.msra.mxu0 0
      %312 = vmatprep.mubr.bf16.mxu0 0
      %313 = vmatmul.mubr.bf16.gmra.mrb[0].mxu0 %v275
      %v314 = vpop.f32.mrb[0].mxu0
      %v315 = vadd.f32 %v156, %v314
      %v316 = vpop.f32.mrb[0].mxu0
      %v317 = vpop.f32.mrb[0].mxu0
      %v318 = vpop.f32.mrb[0].mxu0
      %319 = vdwg.mxu0
      %321 = vrot.lane.b32.xlu0 %v171, 96
      %v322 = vpop.permute.xlu0 %321
      %v324 = vsel %vm175, %v167, 0
      %v327 = vsel %vm175, %v322, 0
      %329 = vmatprep.subr.bf16.mxu0 0
      %330 = vmatpush1.bf16.xpose.msra.mxu0 %v327
      %331 = vmatprep.subr.bf16.mxu0 0
      %332 = vmatpush1.bf16.xpose.msra.mxu0 0
      %333 = vmatprep.subr.bf16.mxu0 0
      %334 = vmatpush1.bf16.xpose.msra.mxu0 0
      %335 = vmatprep.subr.bf16.mxu0 0
      %336 = vmatpush1.bf16.xpose.msra.mxu0 0
      %337 = vmatprep.subr.bf16.mxu0 0
      %338 = vmatpush1.bf16.xpose.msra.mxu0 0
      %339 = vmatprep.subr.bf16.mxu0 0
      %340 = vmatpush1.bf16.xpose.msra.mxu0 0
      %341 = vmatprep.subr.bf16.mxu0 0
      %342 = vmatpush1.bf16.xpose.msra.mxu0 0
      %343 = vmatprep.subr.bf16.mxu0 0
      %344 = vmatpush1.bf16.xpose.msra.mxu0 0
      %345 = vmatprep.subr.bf16.mxu0 0
      %346 = vmatpush1.bf16.xpose.msra.mxu0 0
      %347 = vmatprep.subr.bf16.mxu0 0
      %348 = vmatpush1.bf16.xpose.msra.mxu0 0
      %349 = vmatprep.subr.bf16.mxu0 0
      %350 = vmatpush1.bf16.xpose.msra.mxu0 0
      %351 = vmatprep.subr.bf16.mxu0 0
      %352 = vmatpush1.bf16.xpose.msra.mxu0 0
      %353 = vmatprep.subr.bf16.mxu0 0
      %354 = vmatpush1.bf16.xpose.msra.mxu0 0
      %355 = vmatprep.subr.bf16.mxu0 0
      %356 = vmatpush1.bf16.xpose.msra.mxu0 0
      %357 = vmatprep.subr.bf16.mxu0 0
      %358 = vmatpush1.bf16.xpose.msra.mxu0 0
      %359 = vmatprep.subr.bf16.mxu0 0
      %360 = vmatpush1.bf16.xpose.msra.mxu0 0
      %361 = vmatprep.mubr.bf16.mxu0 0
      %362 = vmatmul.mubr.bf16.gmra.mrb[0].mxu0 %v324
      %v363 = vpop.f32.mrb[0].mxu0
      %v364 = vadd.f32 %v158, %v363
      %v365 = vpop.f32.mrb[0].mxu0
      %v366 = vpop.f32.mrb[0].mxu0
      %v367 = vpop.f32.mrb[0].mxu0
      %368 = vdwg.mxu0
      %vm369 = vcmask 27648
      %v370 = vsel %vm369, %v217, -inf
      %371 = vmax.xlane.f32.xlu0 %v370
      %v372 = vpop.xlane.xlu0 %371
      %v373 = vsel %vm369, %v266, -inf
      %374 = vmax.xlane.f32.xlu0 %v373
      %v375 = vpop.xlane.xlu0 %374
      %v376 = vsel %vm369, %v315, -inf
      %377 = vmax.xlane.f32.xlu0 %v376
      %v378 = vpop.xlane.xlu0 %377
      %v379 = vsel %vm369, %v364, -inf
      %380 = vmax.xlane.f32.xlu0 %v379
      %v381 = vpop.xlane.xlu0 %380
      %v382 = vsub.f32 %v217, %v372
      %v383 = vsub.f32 %v266, %v375
      %v384 = vsub.f32 %v315, %v378
      %v385 = vsub.f32 %v364, %v381
      %v386 = vmul.f32 %v382, 1.442695
      %v387 = vpow.pop %v386
      %v388 = vmul.f32 %v383, 1.442695
      %v389 = vpow.pop %v388
      %v390 = vmul.f32 %v384, 1.442695
      %v391 = vpow.pop %v390
      %v392 = vmul.f32 %v385, 1.442695
      %v393 = vpow.pop %v392
      %v394 = vsel %vm369, %v387, 0.0
      %395 = vadd.xlane.f32.xlu0 %v394
      %v396 = vpop.xlane.xlu0 %395
      %v397 = vsel %vm369, %v389, 0.0
      %398 = vadd.xlane.f32.xlu0 %v397
      %v399 = vpop.xlane.xlu0 %398
      %v400 = vsel %vm369, %v391, 0.0
      %401 = vadd.xlane.f32.xlu0 %v400
      %v402 = vpop.xlane.xlu0 %401
      %v403 = vsel %vm369, %v393, 0.0
      %404 = vadd.xlane.f32.xlu0 %v403
      %v405 = vpop.xlane.xlu0 %404
      %v406 = vrcp.pop %v396
      %v407 = vrcp.pop %v399
      %v408 = vrcp.pop %v402
      %v409 = vrcp.pop %v405
      %v410 = vmul.f32 %v387, %v406
      %v411 = vmul.f32 %v389, %v407
      %v412 = vmul.f32 %v391, %v408
      %v413 = vmul.f32 %v393, %v409
      %v414 = vpack.c.bf16 %v410, %v410
      %v415 = vpack.c.bf16 %v411, %v411
      %v416 = vpack.c.bf16 %v412, %v412
      %v417 = vpack.c.bf16 %v413, %v413
      %418 = vrot.lane.b32.xlu0 %v168, 64
      %v419 = vpop.permute.xlu0 %418
      %vm420 = vcmask 31744
      %v422 = vsel %vm420, %v414, 0
      %vm424 = vcmask 1041408
      %v426 = vsel %vm424, %v419, 0
      %428 = vmatprep.subr.bf16.mxu0 0
      %429 = vmatpush1.bf16.msra.mxu0 %v426
      %430 = vmatprep.subr.bf16.mxu0 0
      %431 = vmatpush1.bf16.msra.mxu0 0
      %432 = vmatprep.subr.bf16.mxu0 0
      %433 = vmatpush1.bf16.msra.mxu0 0
      %434 = vmatprep.subr.bf16.mxu0 0
      %435 = vmatpush1.bf16.msra.mxu0 0
      %436 = vmatprep.subr.bf16.mxu0 0
      %437 = vmatpush1.bf16.msra.mxu0 0
      %438 = vmatprep.subr.bf16.mxu0 0
      %439 = vmatpush1.bf16.msra.mxu0 0
      %440 = vmatprep.subr.bf16.mxu0 0
      %441 = vmatpush1.bf16.msra.mxu0 0
      %442 = vmatprep.subr.bf16.mxu0 0
      %443 = vmatpush1.bf16.msra.mxu0 0
      %444 = vmatprep.subr.bf16.mxu0 0
      %445 = vmatpush1.bf16.msra.mxu0 0
      %446 = vmatprep.subr.bf16.mxu0 0
      %447 = vmatpush1.bf16.msra.mxu0 0
      %448 = vmatprep.subr.bf16.mxu0 0
      %449 = vmatpush1.bf16.msra.mxu0 0
      %450 = vmatprep.subr.bf16.mxu0 0
      %451 = vmatpush1.bf16.msra.mxu0 0
      %452 = vmatprep.subr.bf16.mxu0 0
      %453 = vmatpush1.bf16.msra.mxu0 0
      %454 = vmatprep.subr.bf16.mxu0 0
      %455 = vmatpush1.bf16.msra.mxu0 0
      %456 = vmatprep.subr.bf16.mxu0 0
      %457 = vmatpush1.bf16.msra.mxu0 0
      %458 = vmatprep.subr.bf16.mxu0 0
      %459 = vmatpush1.bf16.msra.mxu0 0
      %460 = vmatprep.mubr.bf16.mxu0 0
      %461 = vmatmul.mubr.bf16.gmra.mrb[0].mxu0 %v422
      %v462 = vpop.f32.mrb[0].mxu0
      %v463 = vadd.f32 0.0, %v462
      %v464 = vpop.f32.mrb[0].mxu0
      %v465 = vpop.f32.mrb[0].mxu0
      %v466 = vpop.f32.mrb[0].mxu0
      %467 = vdwg.mxu0
      %468 = vrot.lane.b32.xlu0 %v169, 64
      %v469 = vpop.permute.xlu0 %468
      %v471 = vsel %vm420, %v415, 0
      %v474 = vsel %vm424, %v469, 0
      %476 = vmatprep.subr.bf16.mxu0 0
      %477 = vmatpush1.bf16.msra.mxu0 %v474
      %478 = vmatprep.subr.bf16.mxu0 0
      %479 = vmatpush1.bf16.msra.mxu0 0
      %480 = vmatprep.subr.bf16.mxu0 0
      %481 = vmatpush1.bf16.msra.mxu0 0
      %482 = vmatprep.subr.bf16.mxu0 0
      %483 = vmatpush1.bf16.msra.mxu0 0
      %484 = vmatprep.subr.bf16.mxu0 0
      %485 = vmatpush1.bf16.msra.mxu0 0
      %486 = vmatprep.subr.bf16.mxu0 0
      %487 = vmatpush1.bf16.msra.mxu0 0
      %488 = vmatprep.subr.bf16.mxu0 0
      %489 = vmatpush1.bf16.msra.mxu0 0
      %490 = vmatprep.subr.bf16.mxu0 0
      %491 = vmatpush1.bf16.msra.mxu0 0
      %492 = vmatprep.subr.bf16.mxu0 0
      %493 = vmatpush1.bf16.msra.mxu0 0
      %494 = vmatprep.subr.bf16.mxu0 0
      %495 = vmatpush1.bf16.msra.mxu0 0
      %496 = vmatprep.subr.bf16.mxu0 0
      %497 = vmatpush1.bf16.msra.mxu0 0
      %498 = vmatprep.subr.bf16.mxu0 0
      %499 = vmatpush1.bf16.msra.mxu0 0
      %500 = vmatprep.subr.bf16.mxu0 0
      %501 = vmatpush1.bf16.msra.mxu0 0
      %502 = vmatprep.subr.bf16.mxu0 0
      %503 = vmatpush1.bf16.msra.mxu0 0
      %504 = vmatprep.subr.bf16.mxu0 0
      %505 = vmatpush1.bf16.msra.mxu0 0
      %506 = vmatprep.subr.bf16.mxu0 0
      %507 = vmatpush1.bf16.msra.mxu0 0
      %508 = vmatprep.mubr.bf16.mxu0 0
      %509 = vmatmul.mubr.bf16.gmra.mrb[0].mxu0 %v471
      %v510 = vpop.f32.mrb[0].mxu0
      %v511 = vadd.f32 0.0, %v510
      %v512 = vpop.f32.mrb[0].mxu0
      %v513 = vpop.f32.mrb[0].mxu0
      %v514 = vpop.f32.mrb[0].mxu0
      %515 = vdwg.mxu0
      %516 = vrot.lane.b32.xlu0 %v170, 64
      %v517 = vpop.permute.xlu0 %516
      %v519 = vsel %vm420, %v416, 0
      %v522 = vsel %vm424, %v517, 0
      %524 = vmatprep.subr.bf16.mxu0 0
      %525 = vmatpush1.bf16.msra.mxu0 %v522
      %526 = vmatprep.subr.bf16.mxu0 0
      %527 = vmatpush1.bf16.msra.mxu0 0
      %528 = vmatprep.subr.bf16.mxu0 0
      %529 = vmatpush1.bf16.msra.mxu0 0
      %530 = vmatprep.subr.bf16.mxu0 0
      %531 = vmatpush1.bf16.msra.mxu0 0
      %532 = vmatprep.subr.bf16.mxu0 0
      %533 = vmatpush1.bf16.msra.mxu0 0
      %534 = vmatprep.subr.bf16.mxu0 0
      %535 = vmatpush1.bf16.msra.mxu0 0
      %536 = vmatprep.subr.bf16.mxu0 0
      %537 = vmatpush1.bf16.msra.mxu0 0
      %538 = vmatprep.subr.bf16.mxu0 0
      %539 = vmatpush1.bf16.msra.mxu0 0
      %540 = vmatprep.subr.bf16.mxu0 0
      %541 = vmatpush1.bf16.msra.mxu0 0
      %542 = vmatprep.subr.bf16.mxu0 0
      %543 = vmatpush1.bf16.msra.mxu0 0
      %544 = vmatprep.subr.bf16.mxu0 0
      %545 = vmatpush1.bf16.msra.mxu0 0
      %546 = vmatprep.subr.bf16.mxu0 0
      %547 = vmatpush1.bf16.msra.mxu0 0
      %548 = vmatprep.subr.bf16.mxu0 0
      %549 = vmatpush1.bf16.msra.mxu0 0
      %550 = vmatprep.subr.bf16.mxu0 0
      %551 = vmatpush1.bf16.msra.mxu0 0
      %552 = vmatprep.subr.bf16.mxu0 0
      %553 = vmatpush1.bf16.msra.mxu0 0
      %554 = vmatprep.subr.bf16.mxu0 0
      %555 = vmatpush1.bf16.msra.mxu0 0
      %556 = vmatprep.mubr.bf16.mxu0 0
      %557 = vmatmul.mubr.bf16.gmra.mrb[0].mxu0 %v519
      %v558 = vpop.f32.mrb[0].mxu0
      %v559 = vadd.f32 0.0, %v558
      %v560 = vpop.f32.mrb[0].mxu0
      %v561 = vpop.f32.mrb[0].mxu0
      %v562 = vpop.f32.mrb[0].mxu0
      %563 = vdwg.mxu0
      %564 = vrot.lane.b32.xlu0 %v171, 64
      %v565 = vpop.permute.xlu0 %564
      %v567 = vsel %vm420, %v417, 0
      %v570 = vsel %vm424, %v565, 0
      %572 = vmatprep.subr.bf16.mxu0 0
      %573 = vmatpush1.bf16.msra.mxu0 %v570
      %574 = vmatprep.subr.bf16.mxu0 0
      %575 = vmatpush1.bf16.msra.mxu0 0
      %576 = vmatprep.subr.bf16.mxu0 0
      %577 = vmatpush1.bf16.msra.mxu0 0
      %578 = vmatprep.subr.bf16.mxu0 0
      %579 = vmatpush1.bf16.msra.mxu0 0
      %580 = vmatprep.subr.bf16.mxu0 0
      %581 = vmatpush1.bf16.msra.mxu0 0
      %582 = vmatprep.subr.bf16.mxu0 0
      %583 = vmatpush1.bf16.msra.mxu0 0
      %584 = vmatprep.subr.bf16.mxu0 0
      %585 = vmatpush1.bf16.msra.mxu0 0
      %586 = vmatprep.subr.bf16.mxu0 0
      %587 = vmatpush1.bf16.msra.mxu0 0
      %588 = vmatprep.subr.bf16.mxu0 0
      %589 = vmatpush1.bf16.msra.mxu0 0
      %590 = vmatprep.subr.bf16.mxu0 0
      %591 = vmatpush1.bf16.msra.mxu0 0
      %592 = vmatprep.subr.bf16.mxu0 0
      %593 = vmatpush1.bf16.msra.mxu0 0
      %594 = vmatprep.subr.bf16.mxu0 0
      %595 = vmatpush1.bf16.msra.mxu0 0
      %596 = vmatprep.subr.bf16.mxu0 0
      %597 = vmatpush1.bf16.msra.mxu0 0
      %598 = vmatprep.subr.bf16.mxu0 0
      %599 = vmatpush1.bf16.msra.mxu0 0
      %600 = vmatprep.subr.bf16.mxu0 0
      %601 = vmatpush1.bf16.msra.mxu0 0
      %602 = vmatprep.subr.bf16.mxu0 0
      %603 = vmatpush1.bf16.msra.mxu0 0
      %604 = vmatprep.mubr.bf16.mxu0 0
      %605 = vmatmul.mubr.bf16.gmra.mrb[0].mxu0 %v567
      %v606 = vpop.f32.mrb[0].mxu0
      %v607 = vadd.f32 0.0, %v606
      %v608 = vpop.f32.mrb[0].mxu0
      %v609 = vpop.f32.mrb[0].mxu0
      %v610 = vpop.f32.mrb[0].mxu0
      %611 = vdwg.mxu0
      %vm612 = vcmask 125952
      %613 = vst.msk [vmem:[%s145] sm:$0xf] %vm612, %v463
      %614 = vst.msk [vmem:[%s145 + $0x4] sm:$0xf] %vm612, %v511
      %615 = vst.msk [vmem:[%s145 + $0x8] sm:$0xf] %vm612, %v559
      %616 = vst.msk [vmem:[%s145 + $0xc] sm:$0xf] %vm612, %v607
      %618 = vrot.lane.b32.xlu0 %v164, 112
      %v619 = vpop.permute.xlu0 %618
      %620 = vrot.lane.b32.xlu0 %v168, 80
      %v621 = vpop.permute.xlu0 %620
      %v623 = vsel %vm175, %v619, 0
      %v626 = vsel %vm175, %v621, 0
      %628 = vmatprep.subr.bf16.mxu0 0
      %629 = vmatpush1.bf16.xpose.msra.mxu0 %v626
      %630 = vmatprep.subr.bf16.mxu0 0
      %631 = vmatpush1.bf16.xpose.msra.mxu0 0
      %632 = vmatprep.subr.bf16.mxu0 0
      %633 = vmatpush1.bf16.xpose.msra.mxu0 0
      %634 = vmatprep.subr.bf16.mxu0 0
      %635 = vmatpush1.bf16.xpose.msra.mxu0 0
      %636 = vmatprep.subr.bf16.mxu0 0
      %637 = vmatpush1.bf16.xpose.msra.mxu0 0
      %638 = vmatprep.subr.bf16.mxu0 0
      %639 = vmatpush1.bf16.xpose.msra.mxu0 0
      %640 = vmatprep.subr.bf16.mxu0 0
      %641 = vmatpush1.bf16.xpose.msra.mxu0 0
      %642 = vmatprep.subr.bf16.mxu0 0
      %643 = vmatpush1.bf16.xpose.msra.mxu0 0
      %644 = vmatprep.subr.bf16.mxu0 0
      %645 = vmatpush1.bf16.xpose.msra.mxu0 0
      %646 = vmatprep.subr.bf16.mxu0 0
      %647 = vmatpush1.bf16.xpose.msra.mxu0 0
      %648 = vmatprep.subr.bf16.mxu0 0
      %649 = vmatpush1.bf16.xpose.msra.mxu0 0
      %650 = vmatprep.subr.bf16.mxu0 0
      %651 = vmatpush1.bf16.xpose.msra.mxu0 0
      %652 = vmatprep.subr.bf16.mxu0 0
      %653 = vmatpush1.bf16.xpose.msra.mxu0 0
      %654 = vmatprep.subr.bf16.mxu0 0
      %655 = vmatpush1.bf16.xpose.msra.mxu0 0
      %656 = vmatprep.subr.bf16.mxu0 0
      %657 = vmatpush1.bf16.xpose.msra.mxu0 0
      %658 = vmatprep.subr.bf16.mxu0 0
      %659 = vmatpush1.bf16.xpose.msra.mxu0 0
      %660 = vmatprep.mubr.bf16.mxu0 0
      %661 = vmatmul.mubr.bf16.gmra.mrb[0].mxu0 %v623
      %v662 = vpop.f32.mrb[0].mxu0
      %v663 = vadd.f32 %v153, %v662
      %v664 = vpop.f32.mrb[0].mxu0
      %v665 = vpop.f32.mrb[0].mxu0
      %v666 = vpop.f32.mrb[0].mxu0
      %667 = vdwg.mxu0
      %669 = vrot.lane.b32.xlu0 %v165, 112
      %v670 = vpop.permute.xlu0 %669
      %671 = vrot.lane.b32.xlu0 %v169, 80
      %v672 = vpop.permute.xlu0 %671
      %v674 = vsel %vm175, %v670, 0
      %v677 = vsel %vm175, %v672, 0
      %679 = vmatprep.subr.bf16.mxu0 0
      %680 = vmatpush1.bf16.xpose.msra.mxu0 %v677
      %681 = vmatprep.subr.bf16.mxu0 0
      %682 = vmatpush1.bf16.xpose.msra.mxu0 0
      %683 = vmatprep.subr.bf16.mxu0 0
      %684 = vmatpush1.bf16.xpose.msra.mxu0 0
      %685 = vmatprep.subr.bf16.mxu0 0
      %686 = vmatpush1.bf16.xpose.msra.mxu0 0
      %687 = vmatprep.subr.bf16.mxu0 0
      %688 = vmatpush1.bf16.xpose.msra.mxu0 0
      %689 = vmatprep.subr.bf16.mxu0 0
      %690 = vmatpush1.bf16.xpose.msra.mxu0 0
      %691 = vmatprep.subr.bf16.mxu0 0
      %692 = vmatpush1.bf16.xpose.msra.mxu0 0
      %693 = vmatprep.subr.bf16.mxu0 0
      %694 = vmatpush1.bf16.xpose.msra.mxu0 0
      %695 = vmatprep.subr.bf16.mxu0 0
      %696 = vmatpush1.bf16.xpose.msra.mxu0 0
      %697 = vmatprep.subr.bf16.mxu0 0
      %698 = vmatpush1.bf16.xpose.msra.mxu0 0
      %699 = vmatprep.subr.bf16.mxu0 0
      %700 = vmatpush1.bf16.xpose.msra.mxu0 0
      %701 = vmatprep.subr.bf16.mxu0 0
      %702 = vmatpush1.bf16.xpose.msra.mxu0 0
      %703 = vmatprep.subr.bf16.mxu0 0
      %704 = vmatpush1.bf16.xpose.msra.mxu0 0
      %705 = vmatprep.subr.bf16.mxu0 0
      %706 = vmatpush1.bf16.xpose.msra.mxu0 0
      %707 = vmatprep.subr.bf16.mxu0 0
      %708 = vmatpush1.bf16.xpose.msra.mxu0 0
      %709 = vmatprep.subr.bf16.mxu0 0
      %710 = vmatpush1.bf16.xpose.msra.mxu0 0
      %711 = vmatprep.mubr.bf16.mxu0 0
      %712 = vmatmul.mubr.bf16.gmra.mrb[0].mxu0 %v674
      %v713 = vpop.f32.mrb[0].mxu0
      %v714 = vadd.f32 %v155, %v713
      %v715 = vpop.f32.mrb[0].mxu0
      %v716 = vpop.f32.mrb[0].mxu0
      %v717 = vpop.f32.mrb[0].mxu0
      %718 = vdwg.mxu0
      %720 = vrot.lane.b32.xlu0 %v166, 112
      %v721 = vpop.permute.xlu0 %720
      %722 = vrot.lane.b32.xlu0 %v170, 80
      %v723 = vpop.permute.xlu0 %722
      %v725 = vsel %vm175, %v721, 0
      %v728 = vsel %vm175, %v723, 0
      %730 = vmatprep.subr.bf16.mxu0 0
      %731 = vmatpush1.bf16.xpose.msra.mxu0 %v728
      %732 = vmatprep.subr.bf16.mxu0 0
      %733 = vmatpush1.bf16.xpose.msra.mxu0 0
      %734 = vmatprep.subr.bf16.mxu0 0
      %735 = vmatpush1.bf16.xpose.msra.mxu0 0
      %736 = vmatprep.subr.bf16.mxu0 0
      %737 = vmatpush1.bf16.xpose.msra.mxu0 0
      %738 = vmatprep.subr.bf16.mxu0 0
      %739 = vmatpush1.bf16.xpose.msra.mxu0 0
      %740 = vmatprep.subr.bf16.mxu0 0
      %741 = vmatpush1.bf16.xpose.msra.mxu0 0
      %742 = vmatprep.subr.bf16.mxu0 0
      %743 = vmatpush1.bf16.xpose.msra.mxu0 0
      %744 = vmatprep.subr.bf16.mxu0 0
      %745 = vmatpush1.bf16.xpose.msra.mxu0 0
      %746 = vmatprep.subr.bf16.mxu0 0
      %747 = vmatpush1.bf16.xpose.msra.mxu0 0
      %748 = vmatprep.subr.bf16.mxu0 0
      %749 = vmatpush1.bf16.xpose.msra.mxu0 0
      %750 = vmatprep.subr.bf16.mxu0 0
      %751 = vmatpush1.bf16.xpose.msra.mxu0 0
      %752 = vmatprep.subr.bf16.mxu0 0
      %753 = vmatpush1.bf16.xpose.msra.mxu0 0
      %754 = vmatprep.subr.bf16.mxu0 0
      %755 = vmatpush1.bf16.xpose.msra.mxu0 0
      %756 = vmatprep.subr.bf16.mxu0 0
      %757 = vmatpush1.bf16.xpose.msra.mxu0 0
      %758 = vmatprep.subr.bf16.mxu0 0
      %759 = vmatpush1.bf16.xpose.msra.mxu0 0
      %760 = vmatprep.subr.bf16.mxu0 0
      %761 = vmatpush1.bf16.xpose.msra.mxu0 0
      %762 = vmatprep.mubr.bf16.mxu0 0
      %763 = vmatmul.mubr.bf16.gmra.mrb[0].mxu0 %v725
      %v764 = vpop.f32.mrb[0].mxu0
      %v765 = vadd.f32 %v157, %v764
      %v766 = vpop.f32.mrb[0].mxu0
      %v767 = vpop.f32.mrb[0].mxu0
      %v768 = vpop.f32.mrb[0].mxu0
      %769 = vdwg.mxu0
      %771 = vrot.lane.b32.xlu0 %v167, 112
      %v772 = vpop.permute.xlu0 %771
      %773 = vrot.lane.b32.xlu0 %v171, 80
      %v774 = vpop.permute.xlu0 %773
      %v776 = vsel %vm175, %v772, 0
      %v779 = vsel %vm175, %v774, 0
      %781 = vmatprep.subr.bf16.mxu0 0
      %782 = vmatpush1.bf16.xpose.msra.mxu0 %v779
      %783 = vmatprep.subr.bf16.mxu0 0
      %784 = vmatpush1.bf16.xpose.msra.mxu0 0
      %785 = vmatprep.subr.bf16.mxu0 0
      %786 = vmatpush1.bf16.xpose.msra.mxu0 0
      %787 = vmatprep.subr.bf16.mxu0 0
      %788 = vmatpush1.bf16.xpose.msra.mxu0 0
      %789 = vmatprep.subr.bf16.mxu0 0
      %790 = vmatpush1.bf16.xpose.msra.mxu0 0
      %791 = vmatprep.subr.bf16.mxu0 0
      %792 = vmatpush1.bf16.xpose.msra.mxu0 0
      %793 = vmatprep.subr.bf16.mxu0 0
      %794 = vmatpush1.bf16.xpose.msra.mxu0 0
      %795 = vmatprep.subr.bf16.mxu0 0
      %796 = vmatpush1.bf16.xpose.msra.mxu0 0
      %797 = vmatprep.subr.bf16.mxu0 0
      %798 = vmatpush1.bf16.xpose.msra.mxu0 0
      %799 = vmatprep.subr.bf16.mxu0 0
      %800 = vmatpush1.bf16.xpose.msra.mxu0 0
      %801 = vmatprep.subr.bf16.mxu0 0
      %802 = vmatpush1.bf16.xpose.msra.mxu0 0
      %803 = vmatprep.subr.bf16.mxu0 0
      %804 = vmatpush1.bf16.xpose.msra.mxu0 0
      %805 = vmatprep.subr.bf16.mxu0 0
      %806 = vmatpush1.bf16.xpose.msra.mxu0 0
      %807 = vmatprep.subr.bf16.mxu0 0
      %808 = vmatpush1.bf16.xpose.msra.mxu0 0
      %809 = vmatprep.subr.bf16.mxu0 0
      %810 = vmatpush1.bf16.xpose.msra.mxu0 0
      %811 = vmatprep.subr.bf16.mxu0 0
      %812 = vmatpush1.bf16.xpose.msra.mxu0 0
      %813 = vmatprep.mubr.bf16.mxu0 0
      %814 = vmatmul.mubr.bf16.gmra.mrb[0].mxu0 %v776
      %v815 = vpop.f32.mrb[0].mxu0
      %v816 = vadd.f32 %v159, %v815
      %v817 = vpop.f32.mrb[0].mxu0
      %v818 = vpop.f32.mrb[0].mxu0
      %v819 = vpop.f32.mrb[0].mxu0
      %820 = vdwg.mxu0
      %v821 = vsel %vm369, %v663, -inf
      %822 = vmax.xlane.f32.xlu0 %v821
      %v823 = vpop.xlane.xlu0 %822
      %v824 = vsel %vm369, %v714, -inf
      %825 = vmax.xlane.f32.xlu0 %v824
      %v826 = vpop.xlane.xlu0 %825
      %v827 = vsel %vm369, %v765, -inf
      %828 = vmax.xlane.f32.xlu0 %v827
      %v829 = vpop.xlane.xlu0 %828
      %v830 = vsel %vm369, %v816, -inf
      %831 = vmax.xlane.f32.xlu0 %v830
      %v832 = vpop.xlane.xlu0 %831
      %v833 = vsub.f32 %v663, %v823
      %v834 = vsub.f32 %v714, %v826
      %v835 = vsub.f32 %v765, %v829
      %v836 = vsub.f32 %v816, %v832
      %v837 = vmul.f32 %v833, 1.442695
      %v838 = vpow.pop %v837
      %v839 = vmul.f32 %v834, 1.442695
      %v840 = vpow.pop %v839
      %v841 = vmul.f32 %v835, 1.442695
      %v842 = vpow.pop %v841
      %v843 = vmul.f32 %v836, 1.442695
      %v844 = vpow.pop %v843
      %v845 = vsel %vm369, %v838, 0.0
      %846 = vadd.xlane.f32.xlu0 %v845
      %v847 = vpop.xlane.xlu0 %846
      %v848 = vsel %vm369, %v840, 0.0
      %849 = vadd.xlane.f32.xlu0 %v848
      %v850 = vpop.xlane.xlu0 %849
      %v851 = vsel %vm369, %v842, 0.0
      %852 = vadd.xlane.f32.xlu0 %v851
      %v853 = vpop.xlane.xlu0 %852
      %v854 = vsel %vm369, %v844, 0.0
      %855 = vadd.xlane.f32.xlu0 %v854
      %v856 = vpop.xlane.xlu0 %855
      %v857 = vrcp.pop %v847
      %v858 = vrcp.pop %v850
      %v859 = vrcp.pop %v853
      %v860 = vrcp.pop %v856
      %v861 = vmul.f32 %v838, %v857
      %v862 = vmul.f32 %v840, %v858
      %v863 = vmul.f32 %v842, %v859
      %v864 = vmul.f32 %v844, %v860
      %v865 = vpack.c.bf16 %v861, %v861
      %v866 = vpack.c.bf16 %v862, %v862
      %v867 = vpack.c.bf16 %v863, %v863
      %v868 = vpack.c.bf16 %v864, %v864
      %869 = vrot.lane.b32.xlu0 %v168, 48
      %v870 = vpop.permute.xlu0 %869
      %v872 = vsel %vm420, %v865, 0
      %v875 = vsel %vm424, %v870, 0
      %877 = vmatprep.subr.bf16.mxu0 0
      %878 = vmatpush1.bf16.msra.mxu0 %v875
      %879 = vmatprep.subr.bf16.mxu0 0
      %880 = vmatpush1.bf16.msra.mxu0 0
      %881 = vmatprep.subr.bf16.mxu0 0
      %882 = vmatpush1.bf16.msra.mxu0 0
      %883 = vmatprep.subr.bf16.mxu0 0
      %884 = vmatpush1.bf16.msra.mxu0 0
      %885 = vmatprep.subr.bf16.mxu0 0
      %886 = vmatpush1.bf16.msra.mxu0 0
      %887 = vmatprep.subr.bf16.mxu0 0
      %888 = vmatpush1.bf16.msra.mxu0 0
      %889 = vmatprep.subr.bf16.mxu0 0
      %890 = vmatpush1.bf16.msra.mxu0 0
      %891 = vmatprep.subr.bf16.mxu0 0
      %892 = vmatpush1.bf16.msra.mxu0 0
      %893 = vmatprep.subr.bf16.mxu0 0
      %894 = vmatpush1.bf16.msra.mxu0 0
      %895 = vmatprep.subr.bf16.mxu0 0
      %896 = vmatpush1.bf16.msra.mxu0 0
      %897 = vmatprep.subr.bf16.mxu0 0
      %898 = vmatpush1.bf16.msra.mxu0 0
      %899 = vmatprep.subr.bf16.mxu0 0
      %900 = vmatpush1.bf16.msra.mxu0 0
      %901 = vmatprep.subr.bf16.mxu0 0
      %902 = vmatpush1.bf16.msra.mxu0 0
      %903 = vmatprep.subr.bf16.mxu0 0
      %904 = vmatpush1.bf16.msra.mxu0 0
      %905 = vmatprep.subr.bf16.mxu0 0
      %906 = vmatpush1.bf16.msra.mxu0 0
      %907 = vmatprep.subr.bf16.mxu0 0
      %908 = vmatpush1.bf16.msra.mxu0 0
      %909 = vmatprep.mubr.bf16.mxu0 0
      %910 = vmatmul.mubr.bf16.gmra.mrb[0].mxu0 %v872
      %v911 = vpop.f32.mrb[0].mxu0
      %v912 = vadd.f32 0.0, %v911
      %v913 = vpop.f32.mrb[0].mxu0
      %v914 = vpop.f32.mrb[0].mxu0
      %v915 = vpop.f32.mrb[0].mxu0
      %916 = vdwg.mxu0
      %917 = vrot.lane.b32.xlu0 %v169, 48
      %v918 = vpop.permute.xlu0 %917
      %v920 = vsel %vm420, %v866, 0
      %v923 = vsel %vm424, %v918, 0
      %925 = vmatprep.subr.bf16.mxu0 0
      %926 = vmatpush1.bf16.msra.mxu0 %v923
      %927 = vmatprep.subr.bf16.mxu0 0
      %928 = vmatpush1.bf16.msra.mxu0 0
      %929 = vmatprep.subr.bf16.mxu0 0
      %930 = vmatpush1.bf16.msra.mxu0 0
      %931 = vmatprep.subr.bf16.mxu0 0
      %932 = vmatpush1.bf16.msra.mxu0 0
      %933 = vmatprep.subr.bf16.mxu0 0
      %934 = vmatpush1.bf16.msra.mxu0 0
      %935 = vmatprep.subr.bf16.mxu0 0
      %936 = vmatpush1.bf16.msra.mxu0 0
      %937 = vmatprep.subr.bf16.mxu0 0
      %938 = vmatpush1.bf16.msra.mxu0 0
      %939 = vmatprep.subr.bf16.mxu0 0
      %940 = vmatpush1.bf16.msra.mxu0 0
      %941 = vmatprep.subr.bf16.mxu0 0
      %942 = vmatpush1.bf16.msra.mxu0 0
      %943 = vmatprep.subr.bf16.mxu0 0
      %944 = vmatpush1.bf16.msra.mxu0 0
      %945 = vmatprep.subr.bf16.mxu0 0
      %946 = vmatpush1.bf16.msra.mxu0 0
      %947 = vmatprep.subr.bf16.mxu0 0
      %948 = vmatpush1.bf16.msra.mxu0 0
      %949 = vmatprep.subr.bf16.mxu0 0
      %950 = vmatpush1.bf16.msra.mxu0 0
      %951 = vmatprep.subr.bf16.mxu0 0
      %952 = vmatpush1.bf16.msra.mxu0 0
      %953 = vmatprep.subr.bf16.mxu0 0
      %954 = vmatpush1.bf16.msra.mxu0 0
      %955 = vmatprep.subr.bf16.mxu0 0
      %956 = vmatpush1.bf16.msra.mxu0 0
      %957 = vmatprep.mubr.bf16.mxu0 0
      %958 = vmatmul.mubr.bf16.gmra.mrb[0].mxu0 %v920
      %v959 = vpop.f32.mrb[0].mxu0
      %v960 = vadd.f32 0.0, %v959
      %v961 = vpop.f32.mrb[0].mxu0
      %v962 = vpop.f32.mrb[0].mxu0
      %v963 = vpop.f32.mrb[0].mxu0
      %964 = vdwg.mxu0
      %965 = vrot.lane.b32.xlu0 %v170, 48
      %v966 = vpop.permute.xlu0 %965
      %v968 = vsel %vm420, %v867, 0
      %v971 = vsel %vm424, %v966, 0
      %973 = vmatprep.subr.bf16.mxu0 0
      %974 = vmatpush1.bf16.msra.mxu0 %v971
      %975 = vmatprep.subr.bf16.mxu0 0
      %976 = vmatpush1.bf16.msra.mxu0 0
      %977 = vmatprep.subr.bf16.mxu0 0
      %978 = vmatpush1.bf16.msra.mxu0 0
      %979 = vmatprep.subr.bf16.mxu0 0
      %980 = vmatpush1.bf16.msra.mxu0 0
      %981 = vmatprep.subr.bf16.mxu0 0
      %982 = vmatpush1.bf16.msra.mxu0 0
      %983 = vmatprep.subr.bf16.mxu0 0
      %984 = vmatpush1.bf16.msra.mxu0 0
      %985 = vmatprep.subr.bf16.mxu0 0
      %986 = vmatpush1.bf16.msra.mxu0 0
      %987 = vmatprep.subr.bf16.mxu0 0
      %988 = vmatpush1.bf16.msra.mxu0 0
      %989 = vmatprep.subr.bf16.mxu0 0
      %990 = vmatpush1.bf16.msra.mxu0 0
      %991 = vmatprep.subr.bf16.mxu0 0
      %992 = vmatpush1.bf16.msra.mxu0 0
      %993 = vmatprep.subr.bf16.mxu0 0
      %994 = vmatpush1.bf16.msra.mxu0 0
      %995 = vmatprep.subr.bf16.mxu0 0
      %996 = vmatpush1.bf16.msra.mxu0 0
      %997 = vmatprep.subr.bf16.mxu0 0
      %998 = vmatpush1.bf16.msra.mxu0 0
      %999 = vmatprep.subr.bf16.mxu0 0
      %1000 = vmatpush1.bf16.msra.mxu0 0
      %1001 = vmatprep.subr.bf16.mxu0 0
      %1002 = vmatpush1.bf16.msra.mxu0 0
      %1003 = vmatprep.subr.bf16.mxu0 0
      %1004 = vmatpush1.bf16.msra.mxu0 0
      %1005 = vmatprep.mubr.bf16.mxu0 0
      %1006 = vmatmul.mubr.bf16.gmra.mrb[0].mxu0 %v968
      %v1007 = vpop.f32.mrb[0].mxu0
      %v1008 = vadd.f32 0.0, %v1007
      %v1009 = vpop.f32.mrb[0].mxu0
      %v1010 = vpop.f32.mrb[0].mxu0
      %v1011 = vpop.f32.mrb[0].mxu0
      %1012 = vdwg.mxu0
      %1013 = vrot.lane.b32.xlu0 %v171, 48
      %v1014 = vpop.permute.xlu0 %1013
      %v1016 = vsel %vm420, %v868, 0
      %v1019 = vsel %vm424, %v1014, 0
      %1021 = vmatprep.subr.bf16.mxu0 0
      %1022 = vmatpush1.bf16.msra.mxu0 %v1019
      %1023 = vmatprep.subr.bf16.mxu0 0
      %1024 = vmatpush1.bf16.msra.mxu0 0
      %1025 = vmatprep.subr.bf16.mxu0 0
      %1026 = vmatpush1.bf16.msra.mxu0 0
      %1027 = vmatprep.subr.bf16.mxu0 0
      %1028 = vmatpush1.bf16.msra.mxu0 0
      %1029 = vmatprep.subr.bf16.mxu0 0
      %1030 = vmatpush1.bf16.msra.mxu0 0
      %1031 = vmatprep.subr.bf16.mxu0 0
      %1032 = vmatpush1.bf16.msra.mxu0 0
      %1033 = vmatprep.subr.bf16.mxu0 0
      %1034 = vmatpush1.bf16.msra.mxu0 0
      %1035 = vmatprep.subr.bf16.mxu0 0
      %1036 = vmatpush1.bf16.msra.mxu0 0
      %1037 = vmatprep.subr.bf16.mxu0 0
      %1038 = vmatpush1.bf16.msra.mxu0 0
      %1039 = vmatprep.subr.bf16.mxu0 0
      %1040 = vmatpush1.bf16.msra.mxu0 0
      %1041 = vmatprep.subr.bf16.mxu0 0
      %1042 = vmatpush1.bf16.msra.mxu0 0
      %1043 = vmatprep.subr.bf16.mxu0 0
      %1044 = vmatpush1.bf16.msra.mxu0 0
      %1045 = vmatprep.subr.bf16.mxu0 0
      %1046 = vmatpush1.bf16.msra.mxu0 0
      %1047 = vmatprep.subr.bf16.mxu0 0
      %1048 = vmatpush1.bf16.msra.mxu0 0
      %1049 = vmatprep.subr.bf16.mxu0 0
      %1050 = vmatpush1.bf16.msra.mxu0 0
      %1051 = vmatprep.subr.bf16.mxu0 0
      %1052 = vmatpush1.bf16.msra.mxu0 0
      %1053 = vmatprep.mubr.bf16.mxu0 0
      %1054 = vmatmul.mubr.bf16.gmra.mrb[0].mxu0 %v1016
      %v1055 = vpop.f32.mrb[0].mxu0
      %v1056 = vadd.f32 0.0, %v1055
      %v1057 = vpop.f32.mrb[0].mxu0
      %v1058 = vpop.f32.mrb[0].mxu0
      %v1059 = vpop.f32.mrb[0].mxu0
      %1060 = vdwg.mxu0
      %1065 = vrot.lane.b32.xlu0 %v912, 16
      %v1066 = vpop.permute.xlu0 %1065
      %1067 = vrot.lane.b32.xlu0 %v960, 16
      %v1068 = vpop.permute.xlu0 %1067
      %1069 = vrot.lane.b32.xlu0 %v1008, 16
      %v1070 = vpop.permute.xlu0 %1069
      %1071 = vrot.lane.b32.xlu0 %v1056, 16
      %v1072 = vpop.permute.xlu0 %1071
      %vm1077 = vcmask 257152
      %1078 = vst.msk [vmem:[%s145] sm:$0xf] %vm1077, %v1066
      %1079 = vst.msk [vmem:[%s145 + $0x4] sm:$0xf] %vm1077, %v1068
      %1080 = vst.msk [vmem:[%s145 + $0x8] sm:$0xf] %vm1077, %v1070
      %1081 = vst.msk [vmem:[%s145 + $0xc] sm:$0xf] %vm1077, %v1072
      %s1082 = smul.u32 4, %s13
      %p1083 = scmp.lt.s32.totalorder %s1082, 7
      %s1084 = scalar_select %p1083, %s1082, 7
      %s1085 = smul.addr %s1084, 4
      %s1086 = scalar_lea.vmem %s2, %s1085
      // Predicated region
      $region29: #{_lambda_.28} parent=27 // pred_check
        %p1087 = pneg %p78
      $region30: #{_lambda_.28} parent=27 // pred_check_branch
        %1089 = sbr.rel (%p1087) target = $region32
      $region31: #{_lambda_.28} parent=27 // pred_region
        %s1090 = smul.u32 4, %s13
      $region32: #{_lambda_.28} parent=27 // pred_fallthru
        _
    $region28: #{_lambda_.28} parent=5 // pred_fallthru
      _
    %p1091 = scmp.le.s32.totalorder 2, %s8
    // Predicated region
    $region33: #{_lambda_.28} parent=5 // pred_check
      %p1092 = pneg %p1091
    $region34: #{_lambda_.28} parent=5 // pred_check_branch
      %1094 = sbr.rel (%p1092) target = $region36
    $region35: #{_lambda_.28} parent=5 // pred_region
      %s1095 = ssub.s32 %s8, 2
      // Predicated region
      $region37: #{_lambda_.28} parent=35 // pred_check
        %p1096 = pneg %p84
      $region38: #{_lambda_.28} parent=35 // pred_check_branch
        %1098 = sbr.rel (%p1096) target = $region40
      $region39: #{_lambda_.28} parent=35 // pred_region
        %s1099 = smul.u32 4, %s14
        %p1100 = scmp.lt.s32.totalorder %s1099, 7
        %s1101 = scalar_select %p1100, %s1099, 7
        %s1102 = smul.addr %s1101, 4
        %s1103 = scalar_lea.vmem %s2, %s1102
      $region40: #{_lambda_.28} parent=35 // pred_fallthru
        _
    $region36: #{_lambda_.28} parent=5 // pred_fallthru
      _
  $region6: #{_lambda_.28} parent=0 // loop_footer
    %s12 = sadd.s32 1, %s8
  $region7: #{_lambda_.28} parent=0 // loop_footer_branch
    %7 = sbr.rel target = $region3
  $region8: #{_lambda_.28} parent=0 // loop_exit
    _

// kernel: sub.29
$region0: #{sub.29}
  %s0 = inlined_call_operand.vmem [shape: f32[1,2,2,2,2,1], index: 0, kind: input, shape index: {}]
  %s1 = inlined_call_operand.vmem [shape: f32[4,4], index: 1, kind: output, shape index: {}]
  $region1: #{sub.29} parent=0
    #allocation0 [shape = 'u8[4096]{0}', space=vmem, size = 0x1000, scoped, tag = 'scoped mem for output reshape']
    #allocation1 [shape = 'u8[16384]{0}', space=vmem, size = 0x4000, scoped, tag = 'scoped mem for input reshape']
    %s3 = sshllo.u32 0, 2
    %s4 = smul.addr 2, 3
    %s5 = scalar_lea.vmem %s0, %s4
    %v6 = vld [vmem:[%s5] sm:%s3]
    %s7 = scalar_lea.vmem [#allocation1], 24
    %8 = vst [vmem:[%s7] sm:%s3] %v6
    %s9 = smul.addr 2, 2
    %s10 = scalar_lea.vmem %s0, %s9
    %v11 = vld [vmem:[%s10] sm:%s3]
    %s12 = scalar_lea.vmem [#allocation1], 16
    %13 = vst [vmem:[%s12] sm:%s3] %v11
    %s14 = scalar_lea.vmem %s0, 2
    %v15 = vld [vmem:[%s14] sm:%s3]
    %s16 = scalar_lea.vmem [#allocation1], 8
    %17 = vst [vmem:[%s16] sm:%s3] %v15
    %v18 = vld [vmem:[%s0] sm:%s3]
    %19 = vst [vmem:[#allocation1] sm:%s3] %v18
    %v20 = vld [vmem:[#allocation1] ss:$8 sm:$0xf]
    %vm21 = vcmask 15360
    %22 = vst.msk [vmem:[#allocation0] sm:$0xf] %vm21, %v20
    %s23 = scalar_lea.vmem [#allocation1], 1
    %v24 = vld [vmem:[%s23] ss:$8 sm:$0xf]
    %25 = vrot.lane.b32.xlu0 %v24, 2
    %v26 = vpop.permute.xlu0 %25
    %vm27 = vcmask 31760
    %28 = vst.msk [vmem:[#allocation0] sm:$0xf] %vm27, %v26
    %s30 = sshllo.u32 0, 4
    %v32 = vld [vmem:[#allocation0] sm:%s30]
    %s33 = sshllo.u32 0, 4
    %34 = vst [vmem:[%s1] sm:%s33] %v32

// kernel: _lambda_.37
$region0: #{_lambda_.37}
  #allocation0 [shape = 'u32[]', space=smem, size = 0x4, offset = 0x4, fixed_abs, tag = 'smem constant byte address 0x4 - core index']
  #allocation1 [shape = 'u32[144,128]{1,0:T(1,128)}', space=vmem, size = 0x12000, scoped, tag = 'internal scratch']
  %s0 = inlined_call_operand.vmem [shape: f32[8,128], index: 0, kind: input, shape index: {}]
  %s1 = inlined_call_operand.vmem [shape: f32[1,128], index: 1, kind: input, shape index: {}]
  %s2 = inlined_call_operand.vmem [shape: f32[1,128], index: 2, kind: input, shape index: {}]
  %s3 = inlined_call_operand.vmem [shape: bf16[128,64], index: 3, kind: input, shape index: {}]
  %s4 = inlined_call_operand.vmem [shape: f32[8,64], index: 4, kind: output, shape index: {}]
  %s5 = sld [smem:[#allocation0]]
  $region26: #{_lambda_.37} parent=0
    _
  %s7 = ssub.s32 1, %s5
  %s8 = scalar_select 0, %s7, %s5
  // Predicated region
  $region2: #{_lambda_.37} parent=0 // pred_check
    _
  $region3: #{_lambda_.37} parent=0 // pred_check_branch
    %10 = sbr.rel (0) target = $region5
  $region4: #{_lambda_.37} parent=0 // pred_region
    _
  $region5: #{_lambda_.37} parent=0 // pred_fallthru
    _
  // Predicated region
  $region6: #{_lambda_.37} parent=0 // pred_check
    _
  $region7: #{_lambda_.37} parent=0 // pred_check_branch
    %12 = sbr.rel (0) target = $region9
  $region8: #{_lambda_.37} parent=0 // pred_region
    _
  $region9: #{_lambda_.37} parent=0 // pred_fallthru
    _
  // Predicated region
  $region10: #{_lambda_.37} parent=0 // pred_check
    _
  $region11: #{_lambda_.37} parent=0 // pred_check_branch
    %14 = sbr.rel (0) target = $region13
  $region12: #{_lambda_.37} parent=0 // pred_region
    _
  $region13: #{_lambda_.37} parent=0 // pred_fallthru
    _
  // Predicated region
  $region14: #{_lambda_.37} parent=0 // pred_check
    _
  $region15: #{_lambda_.37} parent=0 // pred_check_branch
    %16 = sbr.rel (0) target = $region17
  $region16: #{_lambda_.37} parent=0 // pred_region
    _
  $region17: #{_lambda_.37} parent=0 // pred_fallthru
    _
  %v18 = vld [vmem:[%s0] sm:$0xff]
  %19 = vadd.xlane.f32.xlu0 %v18
  %v20 = vpop.xlane.xlu0 %19
  %v21 = vrcp.pop 128.0
  %v22 = vmul.f32 %v20, %v21
  %v23 = vsub.f32 %v18, %v22
  %v24 = vmul.f32 %v23, %v23
  %25 = vadd.xlane.f32.xlu0 %v24
  %v26 = vpop.xlane.xlu0 %25
  %v27 = vmul.f32 %v26, %v21
  %v28 = vadd.f32 %v27, 1e-05
  %v29 = vrsqrt.pop %v28
  %v30 = vmul.f32 %v23, %v29
  %v31 = vld [vmem:[%s1] sm:$0x1]
  %v33 = vlaneseq
  %v34 = vshrl.u32 %v33, 7
  %v35 = vsub.s32 0, %v34
  %v36 = vrot.slane %v31, %v35
  %v38 = vmul.f32 %v30, %v36
  %v39 = vld [vmem:[%s2] sm:$0x1]
  %v41 = vlaneseq
  %v42 = vshrl.u32 %v41, 7
  %v43 = vsub.s32 0, %v42
  %v44 = vrot.slane %v39, %v43
  %v46 = vadd.f32 %v38, %v44
  %v47 = vpack.c.bf16 %v46, %v46
  %v48 = vld [vmem:[%s3] sm:$0xf]
  %v49 = vld [vmem:[%s3 + $0x4] sm:$0xf]
  %v50 = vld [vmem:[%s3 + $0x8] sm:$0xf]
  %v51 = vld [vmem:[%s3 + $0xc] sm:$0xf]
  %v52 = vld [vmem:[%s3 + $0x10] sm:$0xf]
  %v53 = vld [vmem:[%s3 + $0x14] sm:$0xf]
  %v54 = vld [vmem:[%s3 + $0x18] sm:$0xf]
  %v55 = vld [vmem:[%s3 + $0x1c] sm:$0xf]
  %v56 = vld [vmem:[%s3 + $0x20] sm:$0xf]
  %v57 = vld [vmem:[%s3 + $0x24] sm:$0xf]
  %v58 = vld [vmem:[%s3 + $0x28] sm:$0xf]
  %v59 = vld [vmem:[%s3 + $0x2c] sm:$0xf]
  %v60 = vld [vmem:[%s3 + $0x30] sm:$0xf]
  %v61 = vld [vmem:[%s3 + $0x34] sm:$0xf]
  %v62 = vld [vmem:[%s3 + $0x38] sm:$0xf]
  %v63 = vld [vmem:[%s3 + $0x3c] sm:$0xf]
  %v80 = vunpack.c.l.b16 %v48
  %v81 = vunpack.c.l.b16 %v49
  %v82 = vunpack.c.l.b16 %v50
  %v83 = vunpack.c.l.b16 %v51
  %v84 = vunpack.c.l.b16 %v52
  %v85 = vunpack.c.l.b16 %v53
  %v86 = vunpack.c.l.b16 %v54
  %v87 = vunpack.c.l.b16 %v55
  %v88 = vunpack.c.l.b16 %v56
  %v89 = vunpack.c.l.b16 %v57
  %v90 = vunpack.c.l.b16 %v58
  %v91 = vunpack.c.l.b16 %v59
  %v92 = vunpack.c.l.b16 %v60
  %v93 = vunpack.c.l.b16 %v61
  %v94 = vunpack.c.l.b16 %v62
  %v95 = vunpack.c.l.b16 %v63
  %v96 = vpack.c.b16 %v81, %v80
  %v97 = vpack.c.b16 %v83, %v82
  %v98 = vpack.c.b16 %v85, %v84
  %v99 = vpack.c.b16 %v87, %v86
  %v100 = vpack.c.b16 %v89, %v88
  %v101 = vpack.c.b16 %v91, %v90
  %v102 = vpack.c.b16 %v93, %v92
  %v103 = vpack.c.b16 %v95, %v94
  %112 = vmatprep.subr.bf16.mxu0 0
  %113 = vmatpush1.bf16.msra.mxu0 %v96
  %114 = vmatprep.subr.bf16.mxu0 0
  %115 = vmatpush1.bf16.msra.mxu0 %v97
  %116 = vmatprep.subr.bf16.mxu0 0
  %117 = vmatpush1.bf16.msra.mxu0 %v98
  %118 = vmatprep.subr.bf16.mxu0 0
  %119 = vmatpush1.bf16.msra.mxu0 %v99
  %120 = vmatprep.subr.bf16.mxu0 0
  %121 = vmatpush1.bf16.msra.mxu0 %v100
  %122 = vmatprep.subr.bf16.mxu0 0
  %123 = vmatpush1.bf16.msra.mxu0 %v101
  %124 = vmatprep.subr.bf16.mxu0 0
  %125 = vmatpush1.bf16.msra.mxu0 %v102
  %126 = vmatprep.subr.bf16.mxu0 0
  %127 = vmatpush1.bf16.msra.mxu0 %v103
  %128 = vmatprep.subr.bf16.mxu0 0
  %129 = vmatpush1.bf16.msra.mxu0 0
  %130 = vmatprep.subr.bf16.mxu0 0
  %131 = vmatpush1.bf16.msra.mxu0 0
  %132 = vmatprep.subr.bf16.mxu0 0
  %133 = vmatpush1.bf16.msra.mxu0 0
  %134 = vmatprep.subr.bf16.mxu0 0
  %135 = vmatpush1.bf16.msra.mxu0 0
  %136 = vmatprep.subr.bf16.mxu0 0
  %137 = vmatpush1.bf16.msra.mxu0 0
  %138 = vmatprep.subr.bf16.mxu0 0
  %139 = vmatpush1.bf16.msra.mxu0 0
  %140 = vmatprep.subr.bf16.mxu0 0
  %141 = vmatpush1.bf16.msra.mxu0 0
  %142 = vmatprep.subr.bf16.mxu0 0
  %143 = vmatpush1.bf16.msra.mxu0 0
  %144 = vmatprep.mubr.bf16.mxu0 0
  %145 = vmatmul.mubr.bf16.gmra.mrb[0].mxu0 %v47
  %v146 = vpop.f32.mrb[0].mxu0
  %v147 = vadd.f32 0.0, %v146
  %v148 = vpop.f32.mrb[0].mxu0
  %v149 = vpop.f32.mrb[0].mxu0
  %v150 = vpop.f32.mrb[0].mxu0
  %151 = vdwg.mxu0
  %vm152 = vcmask 523264
  %153 = vst.msk [vmem:[%s4] sm:$0xff] %vm152, %v147
  // Predicated region
  $region18: #{_lambda_.37} parent=0 // pred_check
    _
  $region19: #{_lambda_.37} parent=0 // pred_check_branch
    %155 = sbr.rel (0) target = $region21
  $region20: #{_lambda_.37} parent=0 // pred_region
    _
  $region21: #{_lambda_.37} parent=0 // pred_fallthru
    _
  // Predicated region
  $region22: #{_lambda_.37} parent=0 // pred_check
    _
  $region23: #{_lambda_.37} parent=0 // pred_check_branch
    %157 = sbr.rel (0) target = $region25
  $region24: #{_lambda_.37} parent=0 // pred_region
    _
  $region25: #{_lambda_.37} parent=0 // pred_fallthru
    _

// kernel: _lambda_.38
$region0: #{_lambda_.38}
  #allocation0 [shape = 'u32[]', space=smem, size = 0x4, offset = 0x4, fixed_abs, tag = 'smem constant byte address 0x4 - core index']
  #allocation1 [shape = 'u32[144,128]{1,0:T(1,128)}', space=vmem, size = 0x12000, scoped, tag = 'internal scratch']
  %s0 = inlined_call_operand.vmem [shape: f32[8,64], index: 0, kind: input, shape index: {}]
  %s1 = inlined_call_operand.vmem [shape: f32[1,64], index: 1, kind: input, shape index: {}]
  %s2 = inlined_call_operand.vmem [shape: f32[1,64], index: 2, kind: input, shape index: {}]
  %s3 = inlined_call_operand.vmem [shape: bf16[64,192], index: 3, kind: input, shape index: {}]
  %s4 = inlined_call_operand.vmem [shape: f32[1,192], index: 4, kind: input, shape index: {}]
  %s5 = inlined_call_operand.vmem [shape: f32[8,192], index: 5, kind: output, shape index: {}]
  %s6 = sld [smem:[#allocation0]]
  $region30: #{_lambda_.38} parent=0
    _
  %s8 = ssub.s32 1, %s6
  %s9 = scalar_select 0, %s8, %s6
  // Predicated region
  $region2: #{_lambda_.38} parent=0 // pred_check
    _
  $region3: #{_lambda_.38} parent=0 // pred_check_branch
    %11 = sbr.rel (0) target = $region5
  $region4: #{_lambda_.38} parent=0 // pred_region
    _
  $region5: #{_lambda_.38} parent=0 // pred_fallthru
    _
  // Predicated region
  $region6: #{_lambda_.38} parent=0 // pred_check
    _
  $region7: #{_lambda_.38} parent=0 // pred_check_branch
    %13 = sbr.rel (0) target = $region9
  $region8: #{_lambda_.38} parent=0 // pred_region
    _
  $region9: #{_lambda_.38} parent=0 // pred_fallthru
    _
  // Predicated region
  $region10: #{_lambda_.38} parent=0 // pred_check
    _
  $region11: #{_lambda_.38} parent=0 // pred_check_branch
    %15 = sbr.rel (0) target = $region13
  $region12: #{_lambda_.38} parent=0 // pred_region
    _
  $region13: #{_lambda_.38} parent=0 // pred_fallthru
    _
  // Predicated region
  $region14: #{_lambda_.38} parent=0 // pred_check
    _
  $region15: #{_lambda_.38} parent=0 // pred_check_branch
    %17 = sbr.rel (0) target = $region17
  $region16: #{_lambda_.38} parent=0 // pred_region
    _
  $region17: #{_lambda_.38} parent=0 // pred_fallthru
    _
  // Predicated region
  $region18: #{_lambda_.38} parent=0 // pred_check
    _
  $region19: #{_lambda_.38} parent=0 // pred_check_branch
    %19 = sbr.rel (0) target = $region21
  $region20: #{_lambda_.38} parent=0 // pred_region
    _
  $region21: #{_lambda_.38} parent=0 // pred_fallthru
    _
  %v21 = vld [vmem:[%s0] sm:$0xff]
  %vm22 = vcmask 523264
  %v23 = vsel %vm22, %v21, 0.0
  %24 = vadd.xlane.f32.xlu0 %v23
  %v25 = vpop.xlane.xlu0 %24
  %v26 = vrcp.pop 64.0
  %v27 = vmul.f32 %v25, %v26
  %v28 = vsub.f32 %v21, %v27
  %v29 = vmul.f32 %v28, %v28
  %v30 = vsel %vm22, %v29, 0.0
  %31 = vadd.xlane.f32.xlu0 %v30
  %v32 = vpop.xlane.xlu0 %31
  %v33 = vmul.f32 %v32, %v26
  %v34 = vadd.f32 %v33, 1e-05
  %v35 = vrsqrt.pop %v34
  %v36 = vmul.f32 %v28, %v35
  %v37 = vld [vmem:[%s1] sm:$0x1]
  %v39 = vlaneseq
  %v40 = vshrl.u32 %v39, 7
  %v41 = vsub.s32 0, %v40
  %v42 = vrot.slane %v37, %v41
  %v44 = vmul.f32 %v36, %v42
  %v45 = vld [vmem:[%s2] sm:$0x1]
  %v47 = vlaneseq
  %v48 = vshrl.u32 %v47, 7
  %v49 = vsub.s32 0, %v48
  %v50 = vrot.slane %v45, %v49
  %v52 = vadd.f32 %v44, %v50
  %v53 = vpack.c.bf16 %v52, %v52
  %v54 = vld [vmem:[%s3] sm:$0xff]
  %v55 = vld [vmem:[%s3 + $0x8] sm:$0xff]
  %v56 = vld [vmem:[%s3 + $0x10] sm:$0xff]
  %v57 = vld [vmem:[%s3 + $0x18] sm:$0xff]
  %v58 = vld [vmem:[%s3 + $0x20] sm:$0xff]
  %v59 = vld [vmem:[%s3 + $0x28] sm:$0xff]
  %v60 = vld [vmem:[%s3 + $0x30] sm:$0xff]
  %v61 = vld [vmem:[%s3 + $0x38] sm:$0xff]
  %v62 = vld [vmem:[%s4] sm:$0x3]
  %v64 = vlaneseq
  %v65 = vshrl.u32 %v64, 7
  %v66 = vsub.s32 0, %v65
  %v67 = vrot.slane %v62, %v66
  %v68 = vlaneseq
  %v69 = vshrl.u32 %v68, 7
  %v70 = vsub.s32 1, %v69
  %v71 = vrot.slane %v62, %v70
  %v82 = vunpack.c.l.b16 %v54
  %v83 = vunpack.c.h.b16 %v54
  %v84 = vunpack.c.l.b16 %v55
  %v85 = vunpack.c.h.b16 %v55
  %v86 = vunpack.c.l.b16 %v56
  %v87 = vunpack.c.h.b16 %v56
  %v88 = vunpack.c.l.b16 %v57
  %v89 = vunpack.c.h.b16 %v57
  %v90 = vunpack.c.l.b16 %v58
  %v91 = vunpack.c.h.b16 %v58
  %v92 = vunpack.c.l.b16 %v59
  %v93 = vunpack.c.h.b16 %v59
  %v94 = vunpack.c.l.b16 %v60
  %v95 = vunpack.c.h.b16 %v60
  %v96 = vunpack.c.l.b16 %v61
  %v97 = vunpack.c.h.b16 %v61
  %v98 = vpack.c.b16 %v84, %v82
  %v99 = vpack.c.b16 %v85, %v83
  %v100 = vpack.c.b16 %v88, %v86
  %v101 = vpack.c.b16 %v89, %v87
  %v102 = vpack.c.b16 %v92, %v90
  %v103 = vpack.c.b16 %v93, %v91
  %v104 = vpack.c.b16 %v96, %v94
  %v105 = vpack.c.b16 %v97, %v95
  %v115 = vsel %vm22, %v53, 0
  %117 = vmatprep.subr.bf16.mxu0 %v99
  %118 = vmatpush1.bf16.msra.mxu0 %v98
  %119 = vmatprep.subr.bf16.mxu0 %v101
  %120 = vmatpush1.bf16.msra.mxu0 %v100
  %121 = vmatprep.subr.bf16.mxu0 %v103
  %122 = vmatpush1.bf16.msra.mxu0 %v102
  %123 = vmatprep.subr.bf16.mxu0 %v105
  %124 = vmatpush1.bf16.msra.mxu0 %v104
  %125 = vmatprep.subr.bf16.mxu0 0
  %126 = vmatpush1.bf16.msra.mxu0 0
  %127 = vmatprep.subr.bf16.mxu0 0
  %128 = vmatpush1.bf16.msra.mxu0 0
  %129 = vmatprep.subr.bf16.mxu0 0
  %130 = vmatpush1.bf16.msra.mxu0 0
  %131 = vmatprep.subr.bf16.mxu0 0
  %132 = vmatpush1.bf16.msra.mxu0 0
  %133 = vmatprep.subr.bf16.mxu0 0
  %134 = vmatpush1.bf16.msra.mxu0 0
  %135 = vmatprep.subr.bf16.mxu0 0
  %136 = vmatpush1.bf16.msra.mxu0 0
  %137 = vmatprep.subr.bf16.mxu0 0
  %138 = vmatpush1.bf16.msra.mxu0 0
  %139 = vmatprep.subr.bf16.mxu0 0
  %140 = vmatpush1.bf16.msra.mxu0 0
  %141 = vmatprep.subr.bf16.mxu0 0
  %142 = vmatpush1.bf16.msra.mxu0 0
  %143 = vmatprep.subr.bf16.mxu0 0
  %144 = vmatpush1.bf16.msra.mxu0 0
  %145 = vmatprep.subr.bf16.mxu0 0
  %146 = vmatpush1.bf16.msra.mxu0 0
  %147 = vmatprep.subr.bf16.mxu0 0
  %148 = vmatpush1.bf16.msra.mxu0 0
  %149 = vmatprep.mubr.bf16.mxu0 0
  %150 = vmatmul.mubr.bf16.gmra.mrb[0].mxu0 %v115
  %v151 = vpop.f32.mrb[0].mxu0
  %v152 = vadd.f32 %v67, %v151
  %v153 = vpop.f32.mrb[0].mxu0
  %v154 = vadd.f32 %v71, %v153
  %v155 = vpop.f32.mrb[0].mxu0
  %v156 = vpop.f32.mrb[0].mxu0
  %157 = vdwg.mxu0
  %158 = vst [vmem:[%s5] sm:$0xff] %v152
  %159 = vst.msk [vmem:[%s5 + $0x8] sm:$0xff] %vm22, %v154
  // Predicated region
  $region22: #{_lambda_.38} parent=0 // pred_check
    _
  $region23: #{_lambda_.38} parent=0 // pred_check_branch
    %161 = sbr.rel (0) target = $region25
  $region24: #{_lambda_.38} parent=0 // pred_region
    _
  $region25: #{_lambda_.38} parent=0 // pred_fallthru
    _
  // Predicated region
  $region26: #{_lambda_.38} parent=0 // pred_check
    _
  $region27: #{_lambda_.38} parent=0 // pred_check_branch
    %163 = sbr.rel (0) target = $region29
  $region28: #{_lambda_.38} parent=0 // pred_region
    _
  $region29: #{_lambda_.38} parent=0 // pred_fallthru
    _

// kernel: _lambda_.40
$region0: #{_lambda_.40}
  #allocation0 [shape = 'u32[]', space=smem, size = 0x4, offset = 0x4, fixed_abs, tag = 'smem constant byte address 0x4 - core index']
  #allocation1 [shape = 'u32[144,128]{1,0:T(1,128)}', space=vmem, size = 0x12000, scoped, tag = 'internal scratch']
  %s0 = inlined_call_operand.vmem [shape: f32[8,64], index: 0, kind: input, shape index: {}]
  %s1 = inlined_call_operand.vmem [shape: bf16[64,64], index: 1, kind: input, shape index: {}]
  %s2 = inlined_call_operand.vmem [shape: f32[1,64], index: 2, kind: input, shape index: {}]
  %s3 = inlined_call_operand.vmem [shape: f32[8,64], index: 3, kind: output, shape index: {}]
  %s4 = sld [smem:[#allocation0]]
  $region22: #{_lambda_.40} parent=0
    _
  %s6 = ssub.s32 1, %s4
  %s7 = scalar_select 0, %s6, %s4
  // Predicated region
  $region2: #{_lambda_.40} parent=0 // pred_check
    _
  $region3: #{_lambda_.40} parent=0 // pred_check_branch
    %9 = sbr.rel (0) target = $region5
  $region4: #{_lambda_.40} parent=0 // pred_region
    _
  $region5: #{_lambda_.40} parent=0 // pred_fallthru
    _
  // Predicated region
  $region6: #{_lambda_.40} parent=0 // pred_check
    _
  $region7: #{_lambda_.40} parent=0 // pred_check_branch
    %11 = sbr.rel (0) target = $region9
  $region8: #{_lambda_.40} parent=0 // pred_region
    _
  $region9: #{_lambda_.40} parent=0 // pred_fallthru
    _
  // Predicated region
  $region10: #{_lambda_.40} parent=0 // pred_check
    _
  $region11: #{_lambda_.40} parent=0 // pred_check_branch
    %13 = sbr.rel (0) target = $region13
  $region12: #{_lambda_.40} parent=0 // pred_region
    _
  $region13: #{_lambda_.40} parent=0 // pred_fallthru
    _
  %v15 = vld [vmem:[%s0] sm:$0xff]
  %v16 = vpack.c.bf16 %v15, %v15
  %v17 = vld [vmem:[%s1] sm:$0xf]
  %v18 = vld [vmem:[%s1 + $0x4] sm:$0xf]
  %v19 = vld [vmem:[%s1 + $0x8] sm:$0xf]
  %v20 = vld [vmem:[%s1 + $0xc] sm:$0xf]
  %v21 = vld [vmem:[%s1 + $0x10] sm:$0xf]
  %v22 = vld [vmem:[%s1 + $0x14] sm:$0xf]
  %v23 = vld [vmem:[%s1 + $0x18] sm:$0xf]
  %v24 = vld [vmem:[%s1 + $0x1c] sm:$0xf]
  %v25 = vld [vmem:[%s2] sm:$0x1]
  %v27 = vlaneseq
  %v28 = vshrl.u32 %v27, 7
  %v29 = vsub.s32 0, %v28
  %v30 = vrot.slane %v25, %v29
  %v40 = vunpack.c.l.b16 %v17
  %v41 = vunpack.c.l.b16 %v18
  %v42 = vunpack.c.l.b16 %v19
  %v43 = vunpack.c.l.b16 %v20
  %v44 = vunpack.c.l.b16 %v21
  %v45 = vunpack.c.l.b16 %v22
  %v46 = vunpack.c.l.b16 %v23
  %v47 = vunpack.c.l.b16 %v24
  %v48 = vpack.c.b16 %v41, %v40
  %v49 = vpack.c.b16 %v43, %v42
  %v50 = vpack.c.b16 %v45, %v44
  %v51 = vpack.c.b16 %v47, %v46
  %vm56 = vcmask 523264
  %v58 = vsel %vm56, %v16, 0
  %60 = vmatprep.subr.bf16.mxu0 0
  %61 = vmatpush1.bf16.msra.mxu0 %v48
  %62 = vmatprep.subr.bf16.mxu0 0
  %63 = vmatpush1.bf16.msra.mxu0 %v49
  %64 = vmatprep.subr.bf16.mxu0 0
  %65 = vmatpush1.bf16.msra.mxu0 %v50
  %66 = vmatprep.subr.bf16.mxu0 0
  %67 = vmatpush1.bf16.msra.mxu0 %v51
  %68 = vmatprep.subr.bf16.mxu0 0
  %69 = vmatpush1.bf16.msra.mxu0 0
  %70 = vmatprep.subr.bf16.mxu0 0
  %71 = vmatpush1.bf16.msra.mxu0 0
  %72 = vmatprep.subr.bf16.mxu0 0
  %73 = vmatpush1.bf16.msra.mxu0 0
  %74 = vmatprep.subr.bf16.mxu0 0
  %75 = vmatpush1.bf16.msra.mxu0 0
  %76 = vmatprep.subr.bf16.mxu0 0
  %77 = vmatpush1.bf16.msra.mxu0 0
  %78 = vmatprep.subr.bf16.mxu0 0
  %79 = vmatpush1.bf16.msra.mxu0 0
  %80 = vmatprep.subr.bf16.mxu0 0
  %81 = vmatpush1.bf16.msra.mxu0 0
  %82 = vmatprep.subr.bf16.mxu0 0
  %83 = vmatpush1.bf16.msra.mxu0 0
  %84 = vmatprep.subr.bf16.mxu0 0
  %85 = vmatpush1.bf16.msra.mxu0 0
  %86 = vmatprep.subr.bf16.mxu0 0
  %87 = vmatpush1.bf16.msra.mxu0 0
  %88 = vmatprep.subr.bf16.mxu0 0
  %89 = vmatpush1.bf16.msra.mxu0 0
  %90 = vmatprep.subr.bf16.mxu0 0
  %91 = vmatpush1.bf16.msra.mxu0 0
  %92 = vmatprep.mubr.bf16.mxu0 0
  %93 = vmatmul.mubr.bf16.gmra.mrb[0].mxu0 %v58
  %v94 = vpop.f32.mrb[0].mxu0
  %v95 = vadd.f32 %v30, %v94
  %v96 = vpop.f32.mrb[0].mxu0
  %v97 = vpop.f32.mrb[0].mxu0
  %v98 = vpop.f32.mrb[0].mxu0
  %99 = vdwg.mxu0
  %100 = vst.msk [vmem:[%s3] sm:$0xff] %vm56, %v95
  // Predicated region
  $region14: #{_lambda_.40} parent=0 // pred_check
    _
  $region15: #{_lambda_.40} parent=0 // pred_check_branch
    %102 = sbr.rel (0) target = $region17
  $region16: #{_lambda_.40} parent=0 // pred_region
    _
  $region17: #{_lambda_.40} parent=0 // pred_fallthru
    _
  // Predicated region
  $region18: #{_lambda_.40} parent=0 // pred_check
    _
  $region19: #{_lambda_.40} parent=0 // pred_check_branch
    %104 = sbr.rel (0) target = $region21
  $region20: #{_lambda_.40} parent=0 // pred_region
    _
  $region21: #{_lambda_.40} parent=0 // pred_fallthru
    _

// kernel: _lambda_.39
$region0: #{_lambda_.39}
  #allocation0 [shape = 'u32[]', space=smem, size = 0x4, offset = 0x4, fixed_abs, tag = 'smem constant byte address 0x4 - core index']
  #allocation1 [shape = 'u32[144,128]{1,0:T(1,128)}', space=vmem, size = 0x12000, scoped, tag = 'internal scratch']
  %s0 = inlined_call_operand.vmem [shape: f32[2,4,192], index: 0, kind: input, shape index: {}]
  %s1 = inlined_call_operand.vmem [shape: f32[1,4,4,4], index: 1, kind: input, shape index: {}]
  %s2 = inlined_call_operand.vmem [shape: f32[2,4,64], index: 2, kind: output, shape index: {}]
  %s3 = sld [smem:[#allocation0]]
  $region41: #{_lambda_.39} parent=0
    _
  %s5 = ssub.s32 1, %s3
  %s6 = scalar_select 0, %s5, %s3
  loop: start=0, step=1, limit=4
  $region2: #{_lambda_.39} parent=0 // loop_pre_header
    _
  $region3: #{_lambda_.39} parent=0 // loop_header
    %s8 = sphi 0, %s12
    %p9 = scmp.ge.s32.totalorder %s8, 4
    %s18 = sphi 0, %s20
    %s21 = sphi 0, %s18
    %s22 = sphi 0, %s21
    %s38 = sphi 0, %s22
    %s42 = sphi 0, %s42
    %s44 = sphi 0, %s42
    %s45 = sphi 0, %s44
    %s59 = sphi 0, %s45
    %s65 = sphi 0, %s67
    %s68 = sphi 0, %s65
    %s69 = sphi 0, %s68
    %s85 = sphi 0, %s69
  $region4: #{_lambda_.39} parent=0 // loop_header_branch
    %11 = sbr.rel (%p9) target = $region8
  $region5: #{_lambda_.39} parent=0 // loop_body
    %s13 = ssub.s32 %s8, 1
    %s14 = ssub.s32 %s8, 2
    %s15 = sadd.s32 %s8, 1
    %s16 = ssub.s32 %s8, %s15
    %p17 = scmp.eq.s32.totalorder %s16, 0
    %s19 = sadd.s32 %s18, 1
    %s20 = scalar_select %p17, %s18, %s19
    %p23 = pneg %p17
    %p24 = scmp.eq.s32.totalorder %s8, 1
    %p25 = por %p23, %p24
    %p26 = scmp.ne.s32.totalorder %s18, %s21
    %p27 = scmp.eq.s32.totalorder %s8, 0
    %p28 = por %p26, %p27
    %p29 = scmp.ne.s32.totalorder %s18, %s21
    %p30 = scmp.eq.s32.totalorder %s13, 1
    %p31 = por %p29, %p30
    %p32 = scmp.ne.s32.totalorder %s21, %s22
    %p33 = scmp.eq.s32.totalorder %s13, 0
    %p34 = por %p32, %p33
    %p35 = scmp.ne.s32.totalorder %s21, %s22
    %p36 = scmp.eq.s32.totalorder %s14, 1
    %p37 = por %p35, %p36
    %p39 = scmp.ne.s32.totalorder %s22, %s38
    %p40 = scmp.eq.s32.totalorder %s14, 0
    %p41 = por %p39, %p40
    %s43 = sadd.s32 %s42, 1
    %p46 = scmp.eq.s32.totalorder %s8, 1
    %p47 = scmp.ne.s32.totalorder %s42, %s44
    %p48 = scmp.eq.s32.totalorder %s8, 0
    %p49 = por %p47, %p48
    %p50 = scmp.ne.s32.totalorder %s42, %s44
    %p51 = scmp.eq.s32.totalorder %s13, 1
    %p52 = por %p50, %p51
    %p53 = scmp.ne.s32.totalorder %s44, %s45
    %p54 = scmp.eq.s32.totalorder %s13, 0
    %p55 = por %p53, %p54
    %p56 = scmp.ne.s32.totalorder %s44, %s45
    %p57 = scmp.eq.s32.totalorder %s14, 1
    %p58 = por %p56, %p57
    %p60 = scmp.ne.s32.totalorder %s45, %s59
    %p61 = scmp.eq.s32.totalorder %s14, 0
    %p62 = por %p60, %p61
    %s63 = ssub.s32 %s8, %s15
    %p64 = scmp.eq.s32.totalorder %s63, 0
    %s66 = sadd.s32 %s65, 1
    %s67 = scalar_select %p64, %s65, %s66
    %p70 = pneg %p64
    %p71 = scmp.eq.s32.totalorder %s8, 1
    %p72 = por %p70, %p71
    %p73 = scmp.ne.s32.totalorder %s65, %s68
    %p74 = scmp.eq.s32.totalorder %s8, 0
    %p75 = por %p73, %p74
    %p76 = scmp.ne.s32.totalorder %s65, %s68
    %p77 = scmp.eq.s32.totalorder %s13, 1
    %p78 = por %p76, %p77
    %p79 = scmp.ne.s32.totalorder %s68, %s69
    %p80 = scmp.eq.s32.totalorder %s13, 0
    %p81 = por %p79, %p80
    %p82 = scmp.ne.s32.totalorder %s68, %s69
    %p83 = scmp.eq.s32.totalorder %s14, 1
    %p84 = por %p82, %p83
    %p86 = scmp.ne.s32.totalorder %s69, %s85
    %p87 = scmp.eq.s32.totalorder %s14, 0
    %p88 = por %p86, %p87
    %p89 = scmp.le.s32.totalorder 1, %s8
    %p90 = scmp.lt.s32.totalorder %s8, 3
    %p91 = pnand %p89, %p90
    %p92 = pneg %p91
    // Predicated region
    $region9: #{_lambda_.39} parent=5 // pred_check
      _
    $region10: #{_lambda_.39} parent=5 // pred_check_branch
      %94 = sbr.rel (%p91) target = $region12
    $region11: #{_lambda_.39} parent=5 // pred_region
      %s95 = ssub.s32 %s8, 1
      // Predicated region
      $region13: #{_lambda_.39} parent=11 // pred_check
        %p96 = pneg %p55
      $region14: #{_lambda_.39} parent=11 // pred_check_branch
        %98 = sbr.rel (%p96) target = $region16
      $region15: #{_lambda_.39} parent=11 // pred_region
        _
      $region16: #{_lambda_.39} parent=11 // pred_fallthru
        _
    $region12: #{_lambda_.39} parent=5 // pred_fallthru
      _
    %p99 = scmp.lt.s32.totalorder %s8, 2
    // Predicated region
    $region17: #{_lambda_.39} parent=5 // pred_check
      %p100 = pneg %p99
    $region18: #{_lambda_.39} parent=5 // pred_check_branch
      %102 = sbr.rel (%p100) target = $region20
    $region19: #{_lambda_.39} parent=5 // pred_region
      // Predicated region
      $region21: #{_lambda_.39} parent=19 // pred_check
        %p103 = pneg %p28
      $region22: #{_lambda_.39} parent=19 // pred_check_branch
        %105 = sbr.rel (%p103) target = $region24
      $region23: #{_lambda_.39} parent=19 // pred_region
        %p106 = scmp.lt.s32.totalorder %s8, 1
        %s107 = scalar_select %p106, %s8, 1
        %s108 = smul.addr %s107, 2
        %s109 = smul.addr %s108, 4
        %s110 = scalar_lea.vmem %s0, %s109
      $region24: #{_lambda_.39} parent=19 // pred_fallthru
        _
    $region20: #{_lambda_.39} parent=5 // pred_fallthru
      _
    %p111 = scmp.le.s32.totalorder 1, %s8
    %p112 = scmp.lt.s32.totalorder %s8, 3
    %p113 = pnand %p111, %p112
    %p114 = pneg %p113
    // Predicated region
    $region25: #{_lambda_.39} parent=5 // pred_check
      _
    $region26: #{_lambda_.39} parent=5 // pred_check_branch
      %116 = sbr.rel (%p113) target = $region28
    $region27: #{_lambda_.39} parent=5 // pred_region
      %s117 = ssub.s32 %s8, 1
      %p118 = scmp.lt.s32.totalorder %s13, 1
      %s119 = scalar_select %p118, %s13, 1
      %s120 = smul.addr %s119, 2
      %s121 = smul.addr %s120, 4
      %s122 = scalar_lea.vmem %s0, %s121
      %p123 = pneg %p34
      %p124 = pneg %p31
      %p125 = pneg %p55
      %p126 = pneg %p52
      %p127 = pneg %p81
      %p128 = pneg %p78
      %p129 = scmp.lt.s32.totalorder %s13, 1
      %s130 = scalar_select %p129, %s13, 1
      %s131 = smul.addr %s130, 4
      %s132 = scalar_lea.vmem %s2, %s131
      %p133 = scmp.lt.s32.totalorder %s13, 1
      %s134 = scalar_select %p133, %s13, 1
      %s135 = smul.addr %s134, 2
      %s136 = smul.addr %s135, 4
      %s137 = scalar_lea.vmem %s0, %s136
      %p138 = scmp.lt.s32.totalorder %s13, 1
      %s139 = scalar_select %p138, %s13, 1
      %s140 = smul.addr %s139, 4
      %s141 = scalar_lea.vmem %s2, %s140
      %v143 = vld [vmem:[%s137] sm:$0xff]
      %v144 = vld [vmem:[%s1] sm:$0xf]
      %v145 = vld [vmem:[%s1 + $0x4] sm:$0xf]
      %v146 = vld [vmem:[%s1 + $0x8] sm:$0xf]
      %v147 = vld [vmem:[%s1 + $0xc] sm:$0xf]
      %v148 = vmul.f32 %v143, 0.25
      %v149 = vpack.c.bf16 %v148, %v148
      %v150 = vpack.c.bf16 %v143, %v143
      %152 = vrot.lane.b32.xlu0 %v150, 64
      %v153 = vpop.permute.xlu0 %152
      %vm154 = vcmask 130048
      %v156 = vsel %vm154, %v149, 0
      %v159 = vsel %vm154, %v153, 0
      %161 = vmatprep.subr.bf16.mxu0 0
      %162 = vmatpush1.bf16.xpose.msra.mxu0 %v159
      %163 = vmatprep.subr.bf16.mxu0 0
      %164 = vmatpush1.bf16.xpose.msra.mxu0 0
      %165 = vmatprep.subr.bf16.mxu0 0
      %166 = vmatpush1.bf16.xpose.msra.mxu0 0
      %167 = vmatprep.subr.bf16.mxu0 0
      %168 = vmatpush1.bf16.xpose.msra.mxu0 0
      %169 = vmatprep.subr.bf16.mxu0 0
      %170 = vmatpush1.bf16.xpose.msra.mxu0 0
      %171 = vmatprep.subr.bf16.mxu0 0
      %172 = vmatpush1.bf16.xpose.msra.mxu0 0
      %173 = vmatprep.subr.bf16.mxu0 0
      %174 = vmatpush1.bf16.xpose.msra.mxu0 0
      %175 = vmatprep.subr.bf16.mxu0 0
      %176 = vmatpush1.bf16.xpose.msra.mxu0 0
      %177 = vmatprep.subr.bf16.mxu0 0
      %178 = vmatpush1.bf16.xpose.msra.mxu0 0
      %179 = vmatprep.subr.bf16.mxu0 0
      %180 = vmatpush1.bf16.xpose.msra.mxu0 0
      %181 = vmatprep.subr.bf16.mxu0 0
      %182 = vmatpush1.bf16.xpose.msra.mxu0 0
      %183 = vmatprep.subr.bf16.mxu0 0
      %184 = vmatpush1.bf16.xpose.msra.mxu0 0
      %185 = vmatprep.subr.bf16.mxu0 0
      %186 = vmatpush1.bf16.xpose.msra.mxu0 0
      %187 = vmatprep.subr.bf16.mxu0 0
      %188 = vmatpush1.bf16.xpose.msra.mxu0 0
      %189 = vmatprep.subr.bf16.mxu0 0
      %190 = vmatpush1.bf16.xpose.msra.mxu0 0
      %191 = vmatprep.subr.bf16.mxu0 0
      %192 = vmatpush1.bf16.xpose.msra.mxu0 0
      %193 = vmatprep.mubr.bf16.mxu0 0
      %194 = vmatmul.mubr.bf16.gmra.mrb[0].mxu0 %v156
      %v195 = vpop.f32.mrb[0].mxu0
      %v196 = vadd.f32 %v144, %v195
      %v197 = vpop.f32.mrb[0].mxu0
      %v198 = vpop.f32.mrb[0].mxu0
      %v199 = vpop.f32.mrb[0].mxu0
      %200 = vdwg.mxu0
      %vm201 = vcmask 27648
      %v202 = vsel %vm201, %v196, -inf
      %203 = vmax.xlane.f32.xlu0 %v202
      %v204 = vpop.xlane.xlu0 %203
      %v205 = vsub.f32 %v196, %v204
      %v206 = vmul.f32 %v205, 1.442695
      %v207 = vpow.pop %v206
      %v208 = vsel %vm201, %v207, 0.0
      %209 = vadd.xlane.f32.xlu0 %v208
      %v210 = vpop.xlane.xlu0 %209
      %v211 = vrcp.pop %v210
      %v212 = vmul.f32 %v207, %v211
      %v213 = vpack.c.bf16 %v212, %v212
      %v215 = vcombine.high %v143, %v143
      %v217 = vpack.c.bf16 %v215, %v215
      %vm218 = vcmask 31744
      %v220 = vsel %vm218, %v213, 0
      %vm222 = vcmask 1041408
      %v224 = vsel %vm222, %v217, 0
      %226 = vmatprep.subr.bf16.mxu0 0
      %227 = vmatpush1.bf16.msra.mxu0 %v224
      %228 = vmatprep.subr.bf16.mxu0 0
      %229 = vmatpush1.bf16.msra.mxu0 0
      %230 = vmatprep.subr.bf16.mxu0 0
      %231 = vmatpush1.bf16.msra.mxu0 0
      %232 = vmatprep.subr.bf16.mxu0 0
      %233 = vmatpush1.bf16.msra.mxu0 0
      %234 = vmatprep.subr.bf16.mxu0 0
      %235 = vmatpush1.bf16.msra.mxu0 0
      %236 = vmatprep.subr.bf16.mxu0 0
      %237 = vmatpush1.bf16.msra.mxu0 0
      %238 = vmatprep.subr.bf16.mxu0 0
      %239 = vmatpush1.bf16.msra.mxu0 0
      %240 = vmatprep.subr.bf16.mxu0 0
      %241 = vmatpush1.bf16.msra.mxu0 0
      %242 = vmatprep.subr.bf16.mxu0 0
      %243 = vmatpush1.bf16.msra.mxu0 0
      %244 = vmatprep.subr.bf16.mxu0 0
      %245 = vmatpush1.bf16.msra.mxu0 0
      %246 = vmatprep.subr.bf16.mxu0 0
      %247 = vmatpush1.bf16.msra.mxu0 0
      %248 = vmatprep.subr.bf16.mxu0 0
      %249 = vmatpush1.bf16.msra.mxu0 0
      %250 = vmatprep.subr.bf16.mxu0 0
      %251 = vmatpush1.bf16.msra.mxu0 0
      %252 = vmatprep.subr.bf16.mxu0 0
      %253 = vmatpush1.bf16.msra.mxu0 0
      %254 = vmatprep.subr.bf16.mxu0 0
      %255 = vmatpush1.bf16.msra.mxu0 0
      %256 = vmatprep.subr.bf16.mxu0 0
      %257 = vmatpush1.bf16.msra.mxu0 0
      %258 = vmatprep.mubr.bf16.mxu0 0
      %259 = vmatmul.mubr.bf16.gmra.mrb[0].mxu0 %v220
      %v260 = vpop.f32.mrb[0].mxu0
      %v261 = vadd.f32 0.0, %v260
      %v262 = vpop.f32.mrb[0].mxu0
      %v263 = vpop.f32.mrb[0].mxu0
      %v264 = vpop.f32.mrb[0].mxu0
      %265 = vdwg.mxu0
      %vm266 = vcmask 125952
      %267 = vst.msk [vmem:[%s141] sm:$0xf] %vm266, %v261
      %269 = vrot.lane.b32.xlu0 %v149, 112
      %v270 = vpop.permute.xlu0 %269
      %271 = vrot.lane.b32.xlu0 %v150, 48
      %v272 = vpop.permute.xlu0 %271
      %v274 = vsel %vm154, %v270, 0
      %v277 = vsel %vm154, %v272, 0
      %279 = vmatprep.subr.bf16.mxu0 0
      %280 = vmatpush1.bf16.xpose.msra.mxu0 %v277
      %281 = vmatprep.subr.bf16.mxu0 0
      %282 = vmatpush1.bf16.xpose.msra.mxu0 0
      %283 = vmatprep.subr.bf16.mxu0 0
      %284 = vmatpush1.bf16.xpose.msra.mxu0 0
      %285 = vmatprep.subr.bf16.mxu0 0
      %286 = vmatpush1.bf16.xpose.msra.mxu0 0
      %287 = vmatprep.subr.bf16.mxu0 0
      %288 = vmatpush1.bf16.xpose.msra.mxu0 0
      %289 = vmatprep.subr.bf16.mxu0 0
      %290 = vmatpush1.bf16.xpose.msra.mxu0 0
      %291 = vmatprep.subr.bf16.mxu0 0
      %292 = vmatpush1.bf16.xpose.msra.mxu0 0
      %293 = vmatprep.subr.bf16.mxu0 0
      %294 = vmatpush1.bf16.xpose.msra.mxu0 0
      %295 = vmatprep.subr.bf16.mxu0 0
      %296 = vmatpush1.bf16.xpose.msra.mxu0 0
      %297 = vmatprep.subr.bf16.mxu0 0
      %298 = vmatpush1.bf16.xpose.msra.mxu0 0
      %299 = vmatprep.subr.bf16.mxu0 0
      %300 = vmatpush1.bf16.xpose.msra.mxu0 0
      %301 = vmatprep.subr.bf16.mxu0 0
      %302 = vmatpush1.bf16.xpose.msra.mxu0 0
      %303 = vmatprep.subr.bf16.mxu0 0
      %304 = vmatpush1.bf16.xpose.msra.mxu0 0
      %305 = vmatprep.subr.bf16.mxu0 0
      %306 = vmatpush1.bf16.xpose.msra.mxu0 0
      %307 = vmatprep.subr.bf16.mxu0 0
      %308 = vmatpush1.bf16.xpose.msra.mxu0 0
      %309 = vmatprep.subr.bf16.mxu0 0
      %310 = vmatpush1.bf16.xpose.msra.mxu0 0
      %311 = vmatprep.mubr.bf16.mxu0 0
      %312 = vmatmul.mubr.bf16.gmra.mrb[0].mxu0 %v274
      %v313 = vpop.f32.mrb[0].mxu0
      %v314 = vadd.f32 %v145, %v313
      %v315 = vpop.f32.mrb[0].mxu0
      %v316 = vpop.f32.mrb[0].mxu0
      %v317 = vpop.f32.mrb[0].mxu0
      %318 = vdwg.mxu0
      %v319 = vsel %vm201, %v314, -inf
      %320 = vmax.xlane.f32.xlu0 %v319
      %v321 = vpop.xlane.xlu0 %320
      %v322 = vsub.f32 %v314, %v321
      %v323 = vmul.f32 %v322, 1.442695
      %v324 = vpow.pop %v323
      %v325 = vsel %vm201, %v324, 0.0
      %326 = vadd.xlane.f32.xlu0 %v325
      %v327 = vpop.xlane.xlu0 %326
      %v328 = vrcp.pop %v327
      %v329 = vmul.f32 %v324, %v328
      %v330 = vpack.c.bf16 %v329, %v329
      %331 = vrot.lane.b32.xlu0 %v215, 112
      %v332 = vpop.permute.xlu0 %331
      %v334 = vpack.c.bf16 %v332, %v332
      %v336 = vsel %vm218, %v330, 0
      %v339 = vsel %vm222, %v334, 0
      %341 = vmatprep.subr.bf16.mxu0 0
      %342 = vmatpush1.bf16.msra.mxu0 %v339
      %343 = vmatprep.subr.bf16.mxu0 0
      %344 = vmatpush1.bf16.msra.mxu0 0
      %345 = vmatprep.subr.bf16.mxu0 0
      %346 = vmatpush1.bf16.msra.mxu0 0
      %347 = vmatprep.subr.bf16.mxu0 0
      %348 = vmatpush1.bf16.msra.mxu0 0
      %349 = vmatprep.subr.bf16.mxu0 0
      %350 = vmatpush1.bf16.msra.mxu0 0
      %351 = vmatprep.subr.bf16.mxu0 0
      %352 = vmatpush1.bf16.msra.mxu0 0
      %353 = vmatprep.subr.bf16.mxu0 0
      %354 = vmatpush1.bf16.msra.mxu0 0
      %355 = vmatprep.subr.bf16.mxu0 0
      %356 = vmatpush1.bf16.msra.mxu0 0
      %357 = vmatprep.subr.bf16.mxu0 0
      %358 = vmatpush1.bf16.msra.mxu0 0
      %359 = vmatprep.subr.bf16.mxu0 0
      %360 = vmatpush1.bf16.msra.mxu0 0
      %361 = vmatprep.subr.bf16.mxu0 0
      %362 = vmatpush1.bf16.msra.mxu0 0
      %363 = vmatprep.subr.bf16.mxu0 0
      %364 = vmatpush1.bf16.msra.mxu0 0
      %365 = vmatprep.subr.bf16.mxu0 0
      %366 = vmatpush1.bf16.msra.mxu0 0
      %367 = vmatprep.subr.bf16.mxu0 0
      %368 = vmatpush1.bf16.msra.mxu0 0
      %369 = vmatprep.subr.bf16.mxu0 0
      %370 = vmatpush1.bf16.msra.mxu0 0
      %371 = vmatprep.subr.bf16.mxu0 0
      %372 = vmatpush1.bf16.msra.mxu0 0
      %373 = vmatprep.mubr.bf16.mxu0 0
      %374 = vmatmul.mubr.bf16.gmra.mrb[0].mxu0 %v336
      %v375 = vpop.f32.mrb[0].mxu0
      %v376 = vadd.f32 0.0, %v375
      %v377 = vpop.f32.mrb[0].mxu0
      %v378 = vpop.f32.mrb[0].mxu0
      %v379 = vpop.f32.mrb[0].mxu0
      %380 = vdwg.mxu0
      %382 = vrot.lane.b32.xlu0 %v376, 16
      %v383 = vpop.permute.xlu0 %382
      %vm385 = vcmask 257152
      %386 = vst.msk [vmem:[%s141] sm:$0xf] %vm385, %v383
      %387 = vrot.lane.b32.xlu0 %v149, 96
      %v388 = vpop.permute.xlu0 %387
      %389 = vrot.lane.b32.xlu0 %v150, 32
      %v390 = vpop.permute.xlu0 %389
      %v392 = vsel %vm154, %v388, 0
      %v395 = vsel %vm154, %v390, 0
      %397 = vmatprep.subr.bf16.mxu0 0
      %398 = vmatpush1.bf16.xpose.msra.mxu0 %v395
      %399 = vmatprep.subr.bf16.mxu0 0
      %400 = vmatpush1.bf16.xpose.msra.mxu0 0
      %401 = vmatprep.subr.bf16.mxu0 0
      %402 = vmatpush1.bf16.xpose.msra.mxu0 0
      %403 = vmatprep.subr.bf16.mxu0 0
      %404 = vmatpush1.bf16.xpose.msra.mxu0 0
      %405 = vmatprep.subr.bf16.mxu0 0
      %406 = vmatpush1.bf16.xpose.msra.mxu0 0
      %407 = vmatprep.subr.bf16.mxu0 0
      %408 = vmatpush1.bf16.xpose.msra.mxu0 0
      %409 = vmatprep.subr.bf16.mxu0 0
      %410 = vmatpush1.bf16.xpose.msra.mxu0 0
      %411 = vmatprep.subr.bf16.mxu0 0
      %412 = vmatpush1.bf16.xpose.msra.mxu0 0
      %413 = vmatprep.subr.bf16.mxu0 0
      %414 = vmatpush1.bf16.xpose.msra.mxu0 0
      %415 = vmatprep.subr.bf16.mxu0 0
      %416 = vmatpush1.bf16.xpose.msra.mxu0 0
      %417 = vmatprep.subr.bf16.mxu0 0
      %418 = vmatpush1.bf16.xpose.msra.mxu0 0
      %419 = vmatprep.subr.bf16.mxu0 0
      %420 = vmatpush1.bf16.xpose.msra.mxu0 0
      %421 = vmatprep.subr.bf16.mxu0 0
      %422 = vmatpush1.bf16.xpose.msra.mxu0 0
      %423 = vmatprep.subr.bf16.mxu0 0
      %424 = vmatpush1.bf16.xpose.msra.mxu0 0
      %425 = vmatprep.subr.bf16.mxu0 0
      %426 = vmatpush1.bf16.xpose.msra.mxu0 0
      %427 = vmatprep.subr.bf16.mxu0 0
      %428 = vmatpush1.bf16.xpose.msra.mxu0 0
      %429 = vmatprep.mubr.bf16.mxu0 0
      %430 = vmatmul.mubr.bf16.gmra.mrb[0].mxu0 %v392
      %v431 = vpop.f32.mrb[0].mxu0
      %v432 = vadd.f32 %v146, %v431
      %v433 = vpop.f32.mrb[0].mxu0
      %v434 = vpop.f32.mrb[0].mxu0
      %v435 = vpop.f32.mrb[0].mxu0
      %436 = vdwg.mxu0
      %v437 = vsel %vm201, %v432, -inf
      %438 = vmax.xlane.f32.xlu0 %v437
      %v439 = vpop.xlane.xlu0 %438
      %v440 = vsub.f32 %v432, %v439
      %v441 = vmul.f32 %v440, 1.442695
      %v442 = vpow.pop %v441
      %v443 = vsel %vm201, %v442, 0.0
      %444 = vadd.xlane.f32.xlu0 %v443
      %v445 = vpop.xlane.xlu0 %444
      %v446 = vrcp.pop %v445
      %v447 = vmul.f32 %v442, %v446
      %v448 = vpack.c.bf16 %v447, %v447
      %449 = vrot.lane.b32.xlu0 %v215, 96
      %v450 = vpop.permute.xlu0 %449
      %v452 = vpack.c.bf16 %v450, %v450
      %v454 = vsel %vm218, %v448, 0
      %v457 = vsel %vm222, %v452, 0
      %459 = vmatprep.subr.bf16.mxu0 0
      %460 = vmatpush1.bf16.msra.mxu0 %v457
      %461 = vmatprep.subr.bf16.mxu0 0
      %462 = vmatpush1.bf16.msra.mxu0 0
      %463 = vmatprep.subr.bf16.mxu0 0
      %464 = vmatpush1.bf16.msra.mxu0 0
      %465 = vmatprep.subr.bf16.mxu0 0
      %466 = vmatpush1.bf16.msra.mxu0 0
      %467 = vmatprep.subr.bf16.mxu0 0
      %468 = vmatpush1.bf16.msra.mxu0 0
      %469 = vmatprep.subr.bf16.mxu0 0
      %470 = vmatpush1.bf16.msra.mxu0 0
      %471 = vmatprep.subr.bf16.mxu0 0
      %472 = vmatpush1.bf16.msra.mxu0 0
      %473 = vmatprep.subr.bf16.mxu0 0
      %474 = vmatpush1.bf16.msra.mxu0 0
      %475 = vmatprep.subr.bf16.mxu0 0
      %476 = vmatpush1.bf16.msra.mxu0 0
      %477 = vmatprep.subr.bf16.mxu0 0
      %478 = vmatpush1.bf16.msra.mxu0 0
      %479 = vmatprep.subr.bf16.mxu0 0
      %480 = vmatpush1.bf16.msra.mxu0 0
      %481 = vmatprep.subr.bf16.mxu0 0
      %482 = vmatpush1.bf16.msra.mxu0 0
      %483 = vmatprep.subr.bf16.mxu0 0
      %484 = vmatpush1.bf16.msra.mxu0 0
      %485 = vmatprep.subr.bf16.mxu0 0
      %486 = vmatpush1.bf16.msra.mxu0 0
      %487 = vmatprep.subr.bf16.mxu0 0
      %488 = vmatpush1.bf16.msra.mxu0 0
      %489 = vmatprep.subr.bf16.mxu0 0
      %490 = vmatpush1.bf16.msra.mxu0 0
      %491 = vmatprep.mubr.bf16.mxu0 0
      %492 = vmatmul.mubr.bf16.gmra.mrb[0].mxu0 %v454
      %v493 = vpop.f32.mrb[0].mxu0
      %v494 = vadd.f32 0.0, %v493
      %v495 = vpop.f32.mrb[0].mxu0
      %v496 = vpop.f32.mrb[0].mxu0
      %v497 = vpop.f32.mrb[0].mxu0
      %498 = vdwg.mxu0
      %500 = vrot.lane.b32.xlu0 %v494, 32
      %v501 = vpop.permute.xlu0 %500
      %vm503 = vcmask 388352
      %504 = vst.msk [vmem:[%s141] sm:$0xf] %vm503, %v501
      %505 = vrot.lane.b32.xlu0 %v149, 80
      %v506 = vpop.permute.xlu0 %505
      %507 = vrot.lane.b32.xlu0 %v150, 16
      %v508 = vpop.permute.xlu0 %507
      %v510 = vsel %vm154, %v506, 0
      %v513 = vsel %vm154, %v508, 0
      %515 = vmatprep.subr.bf16.mxu0 0
      %516 = vmatpush1.bf16.xpose.msra.mxu0 %v513
      %517 = vmatprep.subr.bf16.mxu0 0
      %518 = vmatpush1.bf16.xpose.msra.mxu0 0
      %519 = vmatprep.subr.bf16.mxu0 0
      %520 = vmatpush1.bf16.xpose.msra.mxu0 0
      %521 = vmatprep.subr.bf16.mxu0 0
      %522 = vmatpush1.bf16.xpose.msra.mxu0 0
      %523 = vmatprep.subr.bf16.mxu0 0
      %524 = vmatpush1.bf16.xpose.msra.mxu0 0
      %525 = vmatprep.subr.bf16.mxu0 0
      %526 = vmatpush1.bf16.xpose.msra.mxu0 0
      %527 = vmatprep.subr.bf16.mxu0 0
      %528 = vmatpush1.bf16.xpose.msra.mxu0 0
      %529 = vmatprep.subr.bf16.mxu0 0
      %530 = vmatpush1.bf16.xpose.msra.mxu0 0
      %531 = vmatprep.subr.bf16.mxu0 0
      %532 = vmatpush1.bf16.xpose.msra.mxu0 0
      %533 = vmatprep.subr.bf16.mxu0 0
      %534 = vmatpush1.bf16.xpose.msra.mxu0 0
      %535 = vmatprep.subr.bf16.mxu0 0
      %536 = vmatpush1.bf16.xpose.msra.mxu0 0
      %537 = vmatprep.subr.bf16.mxu0 0
      %538 = vmatpush1.bf16.xpose.msra.mxu0 0
      %539 = vmatprep.subr.bf16.mxu0 0
      %540 = vmatpush1.bf16.xpose.msra.mxu0 0
      %541 = vmatprep.subr.bf16.mxu0 0
      %542 = vmatpush1.bf16.xpose.msra.mxu0 0
      %543 = vmatprep.subr.bf16.mxu0 0
      %544 = vmatpush1.bf16.xpose.msra.mxu0 0
      %545 = vmatprep.subr.bf16.mxu0 0
      %546 = vmatpush1.bf16.xpose.msra.mxu0 0
      %547 = vmatprep.mubr.bf16.mxu0 0
      %548 = vmatmul.mubr.bf16.gmra.mrb[0].mxu0 %v510
      %v549 = vpop.f32.mrb[0].mxu0
      %v550 = vadd.f32 %v147, %v549
      %v551 = vpop.f32.mrb[0].mxu0
      %v552 = vpop.f32.mrb[0].mxu0
      %v553 = vpop.f32.mrb[0].mxu0
      %554 = vdwg.mxu0
      %v555 = vsel %vm201, %v550, -inf
      %556 = vmax.xlane.f32.xlu0 %v555
      %v557 = vpop.xlane.xlu0 %556
      %v558 = vsub.f32 %v550, %v557
      %v559 = vmul.f32 %v558, 1.442695
      %v560 = vpow.pop %v559
      %v561 = vsel %vm201, %v560, 0.0
      %562 = vadd.xlane.f32.xlu0 %v561
      %v563 = vpop.xlane.xlu0 %562
      %v564 = vrcp.pop %v563
      %v565 = vmul.f32 %v560, %v564
      %v566 = vpack.c.bf16 %v565, %v565
      %567 = vrot.lane.b32.xlu0 %v215, 80
      %v568 = vpop.permute.xlu0 %567
      %v570 = vpack.c.bf16 %v568, %v568
      %v572 = vsel %vm218, %v566, 0
      %v575 = vsel %vm222, %v570, 0
      %577 = vmatprep.subr.bf16.mxu0 0
      %578 = vmatpush1.bf16.msra.mxu0 %v575
      %579 = vmatprep.subr.bf16.mxu0 0
      %580 = vmatpush1.bf16.msra.mxu0 0
      %581 = vmatprep.subr.bf16.mxu0 0
      %582 = vmatpush1.bf16.msra.mxu0 0
      %583 = vmatprep.subr.bf16.mxu0 0
      %584 = vmatpush1.bf16.msra.mxu0 0
      %585 = vmatprep.subr.bf16.mxu0 0
      %586 = vmatpush1.bf16.msra.mxu0 0
      %587 = vmatprep.subr.bf16.mxu0 0
      %588 = vmatpush1.bf16.msra.mxu0 0
      %589 = vmatprep.subr.bf16.mxu0 0
      %590 = vmatpush1.bf16.msra.mxu0 0
      %591 = vmatprep.subr.bf16.mxu0 0
      %592 = vmatpush1.bf16.msra.mxu0 0
      %593 = vmatprep.subr.bf16.mxu0 0
      %594 = vmatpush1.bf16.msra.mxu0 0
      %595 = vmatprep.subr.bf16.mxu0 0
      %596 = vmatpush1.bf16.msra.mxu0 0
      %597 = vmatprep.subr.bf16.mxu0 0
      %598 = vmatpush1.bf16.msra.mxu0 0
      %599 = vmatprep.subr.bf16.mxu0 0
      %600 = vmatpush1.bf16.msra.mxu0 0
      %601 = vmatprep.subr.bf16.mxu0 0
      %602 = vmatpush1.bf16.msra.mxu0 0
      %603 = vmatprep.subr.bf16.mxu0 0
      %604 = vmatpush1.bf16.msra.mxu0 0
      %605 = vmatprep.subr.bf16.mxu0 0
      %606 = vmatpush1.bf16.msra.mxu0 0
      %607 = vmatprep.subr.bf16.mxu0 0
      %608 = vmatpush1.bf16.msra.mxu0 0
      %609 = vmatprep.mubr.bf16.mxu0 0
      %610 = vmatmul.mubr.bf16.gmra.mrb[0].mxu0 %v572
      %v611 = vpop.f32.mrb[0].mxu0
      %v612 = vadd.f32 0.0, %v611
      %v613 = vpop.f32.mrb[0].mxu0
      %v614 = vpop.f32.mrb[0].mxu0
      %v615 = vpop.f32.mrb[0].mxu0
      %616 = vdwg.mxu0
      %618 = vrot.lane.b32.xlu0 %v612, 48
      %v619 = vpop.permute.xlu0 %618
      %vm621 = vcmask 519552
      %622 = vst.msk [vmem:[%s141] sm:$0xf] %vm621, %v619
      %p623 = scmp.lt.s32.totalorder %s13, 1
      %s624 = scalar_select %p623, %s13, 1
      %s625 = smul.addr %s624, 4
      %s626 = scalar_lea.vmem %s2, %s625
      // Predicated region
      $region29: #{_lambda_.39} parent=27 // pred_check
        %p627 = pneg %p78
      $region30: #{_lambda_.39} parent=27 // pred_check_branch
        %629 = sbr.rel (%p627) target = $region32
      $region31: #{_lambda_.39} parent=27 // pred_region
        _
      $region32: #{_lambda_.39} parent=27 // pred_fallthru
        _
    $region28: #{_lambda_.39} parent=5 // pred_fallthru
      _
    %p630 = scmp.le.s32.totalorder 2, %s8
    // Predicated region
    $region33: #{_lambda_.39} parent=5 // pred_check
      %p631 = pneg %p630
    $region34: #{_lambda_.39} parent=5 // pred_check_branch
      %633 = sbr.rel (%p631) target = $region36
    $region35: #{_lambda_.39} parent=5 // pred_region
      %s634 = ssub.s32 %s8, 2
      // Predicated region
      $region37: #{_lambda_.39} parent=35 // pred_check
        %p635 = pneg %p84
      $region38: #{_lambda_.39} parent=35 // pred_check_branch
        %637 = sbr.rel (%p635) target = $region40
      $region39: #{_lambda_.39} parent=35 // pred_region
        %p638 = scmp.lt.s32.totalorder %s14, 1
        %s639 = scalar_select %p638, %s14, 1
        %s640 = smul.addr %s639, 4
        %s641 = scalar_lea.vmem %s2, %s640
      $region40: #{_lambda_.39} parent=35 // pred_fallthru
        _
    $region36: #{_lambda_.39} parent=5 // pred_fallthru
      _
  $region6: #{_lambda_.39} parent=0 // loop_footer
    %s12 = sadd.s32 1, %s8
  $region7: #{_lambda_.39} parent=0 // loop_footer_branch
    %7 = sbr.rel target = $region3
  $region8: #{_lambda_.39} parent=0 // loop_exit
    _

// kernel: _lambda_.42
$region0: #{_lambda_.42}
  #allocation0 [shape = 'u32[]', space=smem, size = 0x4, offset = 0x4, fixed_abs, tag = 'smem constant byte address 0x4 - core index']
  #allocation1 [shape = 'u32[144,128]{1,0:T(1,128)}', space=vmem, size = 0x12000, scoped, tag = 'internal scratch']
  %s0 = inlined_call_operand.vmem [shape: f32[8,256], index: 0, kind: input, shape index: {}]
  %s1 = inlined_call_operand.vmem [shape: bf16[256,64], index: 1, kind: input, shape index: {}]
  %s2 = inlined_call_operand.vmem [shape: f32[1,64], index: 2, kind: input, shape index: {}]
  %s3 = inlined_call_operand.vmem [shape: f32[8,64], index: 3, kind: output, shape index: {}]
  %s4 = sld [smem:[#allocation0]]
  $region22: #{_lambda_.42} parent=0
    _
  %s6 = ssub.s32 1, %s4
  %s7 = scalar_select 0, %s6, %s4
  // Predicated region
  $region2: #{_lambda_.42} parent=0 // pred_check
    _
  $region3: #{_lambda_.42} parent=0 // pred_check_branch
    %9 = sbr.rel (0) target = $region5
  $region4: #{_lambda_.42} parent=0 // pred_region
    _
  $region5: #{_lambda_.42} parent=0 // pred_fallthru
    _
  // Predicated region
  $region6: #{_lambda_.42} parent=0 // pred_check
    _
  $region7: #{_lambda_.42} parent=0 // pred_check_branch
    %11 = sbr.rel (0) target = $region9
  $region8: #{_lambda_.42} parent=0 // pred_region
    _
  $region9: #{_lambda_.42} parent=0 // pred_fallthru
    _
  // Predicated region
  $region10: #{_lambda_.42} parent=0 // pred_check
    _
  $region11: #{_lambda_.42} parent=0 // pred_check_branch
    %13 = sbr.rel (0) target = $region13
  $region12: #{_lambda_.42} parent=0 // pred_region
    _
  $region13: #{_lambda_.42} parent=0 // pred_fallthru
    _
  %v15 = vld [vmem:[%s0] sm:$0xff]
  %v16 = vld [vmem:[%s0 + $0x8] sm:$0xff]
  %v17 = vpack.c.bf16 %v15, %v15
  %v18 = vpack.c.bf16 %v16, %v16
  %v19 = vld [vmem:[%s1] sm:$0xf]
  %v20 = vld [vmem:[%s1 + $0x4] sm:$0xf]
  %v21 = vld [vmem:[%s1 + $0x8] sm:$0xf]
  %v22 = vld [vmem:[%s1 + $0xc] sm:$0xf]
  %v23 = vld [vmem:[%s1 + $0x10] sm:$0xf]
  %v24 = vld [vmem:[%s1 + $0x14] sm:$0xf]
  %v25 = vld [vmem:[%s1 + $0x18] sm:$0xf]
  %v26 = vld [vmem:[%s1 + $0x1c] sm:$0xf]
  %v27 = vld [vmem:[%s1 + $0x20] sm:$0xf]
  %v28 = vld [vmem:[%s1 + $0x24] sm:$0xf]
  %v29 = vld [vmem:[%s1 + $0x28] sm:$0xf]
  %v30 = vld [vmem:[%s1 + $0x2c] sm:$0xf]
  %v31 = vld [vmem:[%s1 + $0x30] sm:$0xf]
  %v32 = vld [vmem:[%s1 + $0x34] sm:$0xf]
  %v33 = vld [vmem:[%s1 + $0x38] sm:$0xf]
  %v34 = vld [vmem:[%s1 + $0x3c] sm:$0xf]
  %v35 = vld [vmem:[%s1 + $0x40] sm:$0xf]
  %v36 = vld [vmem:[%s1 + $0x44] sm:$0xf]
  %v37 = vld [vmem:[%s1 + $0x48] sm:$0xf]
  %v38 = vld [vmem:[%s1 + $0x4c] sm:$0xf]
  %v39 = vld [vmem:[%s1 + $0x50] sm:$0xf]
  %v40 = vld [vmem:[%s1 + $0x54] sm:$0xf]
  %v41 = vld [vmem:[%s1 + $0x58] sm:$0xf]
  %v42 = vld [vmem:[%s1 + $0x5c] sm:$0xf]
  %v43 = vld [vmem:[%s1 + $0x60] sm:$0xf]
  %v44 = vld [vmem:[%s1 + $0x64] sm:$0xf]
  %v45 = vld [vmem:[%s1 + $0x68] sm:$0xf]
  %v46 = vld [vmem:[%s1 + $0x6c] sm:$0xf]
  %v47 = vld [vmem:[%s1 + $0x70] sm:$0xf]
  %v48 = vld [vmem:[%s1 + $0x74] sm:$0xf]
  %v49 = vld [vmem:[%s1 + $0x78] sm:$0xf]
  %v50 = vld [vmem:[%s1 + $0x7c] sm:$0xf]
  %v51 = vld [vmem:[%s2] sm:$0x1]
  %v53 = vlaneseq
  %v54 = vshrl.u32 %v53, 7
  %v55 = vsub.s32 0, %v54
  %v56 = vrot.slane %v51, %v55
  %v90 = vunpack.c.l.b16 %v19
  %v91 = vunpack.c.l.b16 %v20
  %v92 = vunpack.c.l.b16 %v21
  %v93 = vunpack.c.l.b16 %v22
  %v94 = vunpack.c.l.b16 %v23
  %v95 = vunpack.c.l.b16 %v24
  %v96 = vunpack.c.l.b16 %v25
  %v97 = vunpack.c.l.b16 %v26
  %v98 = vunpack.c.l.b16 %v27
  %v99 = vunpack.c.l.b16 %v28
  %v100 = vunpack.c.l.b16 %v29
  %v101 = vunpack.c.l.b16 %v30
  %v102 = vunpack.c.l.b16 %v31
  %v103 = vunpack.c.l.b16 %v32
  %v104 = vunpack.c.l.b16 %v33
  %v105 = vunpack.c.l.b16 %v34
  %v106 = vunpack.c.l.b16 %v35
  %v107 = vunpack.c.l.b16 %v36
  %v108 = vunpack.c.l.b16 %v37
  %v109 = vunpack.c.l.b16 %v38
  %v110 = vunpack.c.l.b16 %v39
  %v111 = vunpack.c.l.b16 %v40
  %v112 = vunpack.c.l.b16 %v41
  %v113 = vunpack.c.l.b16 %v42
  %v114 = vunpack.c.l.b16 %v43
  %v115 = vunpack.c.l.b16 %v44
  %v116 = vunpack.c.l.b16 %v45
  %v117 = vunpack.c.l.b16 %v46
  %v118 = vunpack.c.l.b16 %v47
  %v119 = vunpack.c.l.b16 %v48
  %v120 = vunpack.c.l.b16 %v49
  %v121 = vunpack.c.l.b16 %v50
  %v122 = vpack.c.b16 %v91, %v90
  %v123 = vpack.c.b16 %v93, %v92
  %v124 = vpack.c.b16 %v95, %v94
  %v125 = vpack.c.b16 %v97, %v96
  %v126 = vpack.c.b16 %v99, %v98
  %v127 = vpack.c.b16 %v101, %v100
  %v128 = vpack.c.b16 %v103, %v102
  %v129 = vpack.c.b16 %v105, %v104
  %v130 = vpack.c.b16 %v107, %v106
  %v131 = vpack.c.b16 %v109, %v108
  %v132 = vpack.c.b16 %v111, %v110
  %v133 = vpack.c.b16 %v113, %v112
  %v134 = vpack.c.b16 %v115, %v114
  %v135 = vpack.c.b16 %v117, %v116
  %v136 = vpack.c.b16 %v119, %v118
  %v137 = vpack.c.b16 %v121, %v120
  %154 = vmatprep.subr.bf16.mxu0 0
  %155 = vmatpush1.bf16.msra.mxu0 %v122
  %156 = vmatprep.subr.bf16.mxu0 0
  %157 = vmatpush1.bf16.msra.mxu0 %v123
  %158 = vmatprep.subr.bf16.mxu0 0
  %159 = vmatpush1.bf16.msra.mxu0 %v124
  %160 = vmatprep.subr.bf16.mxu0 0
  %161 = vmatpush1.bf16.msra.mxu0 %v125
  %162 = vmatprep.subr.bf16.mxu0 0
  %163 = vmatpush1.bf16.msra.mxu0 %v126
  %164 = vmatprep.subr.bf16.mxu0 0
  %165 = vmatpush1.bf16.msra.mxu0 %v127
  %166 = vmatprep.subr.bf16.mxu0 0
  %167 = vmatpush1.bf16.msra.mxu0 %v128
  %168 = vmatprep.subr.bf16.mxu0 0
  %169 = vmatpush1.bf16.msra.mxu0 %v129
  %170 = vmatprep.subr.bf16.mxu0 0
  %171 = vmatpush1.bf16.msra.mxu0 %v130
  %172 = vmatprep.subr.bf16.mxu0 0
  %173 = vmatpush1.bf16.msra.mxu0 %v131
  %174 = vmatprep.subr.bf16.mxu0 0
  %175 = vmatpush1.bf16.msra.mxu0 %v132
  %176 = vmatprep.subr.bf16.mxu0 0
  %177 = vmatpush1.bf16.msra.mxu0 %v133
  %178 = vmatprep.subr.bf16.mxu0 0
  %179 = vmatpush1.bf16.msra.mxu0 %v134
  %180 = vmatprep.subr.bf16.mxu0 0
  %181 = vmatpush1.bf16.msra.mxu0 %v135
  %182 = vmatprep.subr.bf16.mxu0 0
  %183 = vmatpush1.bf16.msra.mxu0 %v136
  %184 = vmatprep.subr.bf16.mxu0 0
  %185 = vmatpush1.bf16.msra.mxu0 %v137
  %186 = vmatprep.mubr.bf16.mxu0 %v18
  %187 = vmatmul.mubr.bf16.gmra.mrb[0].mxu0 %v17
  %v188 = vpop.f32.mrb[0].mxu0
  %v189 = vadd.f32 %v56, %v188
  %v190 = vpop.f32.mrb[0].mxu0
  %v191 = vpop.f32.mrb[0].mxu0
  %v192 = vpop.f32.mrb[0].mxu0
  %193 = vdwg.mxu0
  %vm194 = vcmask 523264
  %195 = vst.msk [vmem:[%s3] sm:$0xff] %vm194, %v189
  // Predicated region
  $region14: #{_lambda_.42} parent=0 // pred_check
    _
  $region15: #{_lambda_.42} parent=0 // pred_check_branch
    %197 = sbr.rel (0) target = $region17
  $region16: #{_lambda_.42} parent=0 // pred_region
    _
  $region17: #{_lambda_.42} parent=0 // pred_fallthru
    _
  // Predicated region
  $region18: #{_lambda_.42} parent=0 // pred_check
    _
  $region19: #{_lambda_.42} parent=0 // pred_check_branch
    %199 = sbr.rel (0) target = $region21
  $region20: #{_lambda_.42} parent=0 // pred_region
    _
  $region21: #{_lambda_.42} parent=0 // pred_fallthru
    _

// kernel: _lambda_.48
$region0: #{_lambda_.48}
  #allocation0 [shape = 'u32[]', space=smem, size = 0x4, offset = 0x4, fixed_abs, tag = 'smem constant byte address 0x4 - core index']
  #allocation1 [shape = 'u32[144,128]{1,0:T(1,128)}', space=vmem, size = 0x12000, scoped, tag = 'internal scratch']
  %s0 = inlined_call_operand.vmem [shape: f32[8,64], index: 0, kind: input, shape index: {}]
  %s1 = inlined_call_operand.vmem [shape: f32[1,64], index: 1, kind: input, shape index: {}]
  %s2 = inlined_call_operand.vmem [shape: f32[1,64], index: 2, kind: input, shape index: {}]
  %s3 = inlined_call_operand.vmem [shape: f32[8,64], index: 3, kind: output, shape index: {}]
  %s4 = sld [smem:[#allocation0]]
  $region22: #{_lambda_.48} parent=0
    _
  %s6 = ssub.s32 1, %s4
  %s7 = scalar_select 0, %s6, %s4
  // Predicated region
  $region2: #{_lambda_.48} parent=0 // pred_check
    _
  $region3: #{_lambda_.48} parent=0 // pred_check_branch
    %9 = sbr.rel (0) target = $region5
  $region4: #{_lambda_.48} parent=0 // pred_region
    _
  $region5: #{_lambda_.48} parent=0 // pred_fallthru
    _
  // Predicated region
  $region6: #{_lambda_.48} parent=0 // pred_check
    _
  $region7: #{_lambda_.48} parent=0 // pred_check_branch
    %11 = sbr.rel (0) target = $region9
  $region8: #{_lambda_.48} parent=0 // pred_region
    _
  $region9: #{_lambda_.48} parent=0 // pred_fallthru
    _
  // Predicated region
  $region10: #{_lambda_.48} parent=0 // pred_check
    _
  $region11: #{_lambda_.48} parent=0 // pred_check_branch
    %13 = sbr.rel (0) target = $region13
  $region12: #{_lambda_.48} parent=0 // pred_region
    _
  $region13: #{_lambda_.48} parent=0 // pred_fallthru
    _
  %v14 = vld [vmem:[%s0] sm:$0xff]
  %vm15 = vcmask 523264
  %v16 = vsel %vm15, %v14, 0.0
  %17 = vadd.xlane.f32.xlu0 %v16
  %v18 = vpop.xlane.xlu0 %17
  %v19 = vrcp.pop 64.0
  %v20 = vmul.f32 %v18, %v19
  %v21 = vsub.f32 %v14, %v20
  %v22 = vmul.f32 %v21, %v21
  %v23 = vsel %vm15, %v22, 0.0
  %24 = vadd.xlane.f32.xlu0 %v23
  %v25 = vpop.xlane.xlu0 %24
  %v26 = vmul.f32 %v25, %v19
  %v27 = vadd.f32 %v26, 1e-05
  %v28 = vrsqrt.pop %v27
  %v29 = vmul.f32 %v21, %v28
  %v30 = vld [vmem:[%s1] sm:$0x1]
  %v32 = vlaneseq
  %v33 = vshrl.u32 %v32, 7
  %v34 = vsub.s32 0, %v33
  %v35 = vrot.slane %v30, %v34
  %v37 = vmul.f32 %v29, %v35
  %v38 = vld [vmem:[%s2] sm:$0x1]
  %v40 = vlaneseq
  %v41 = vshrl.u32 %v40, 7
  %v42 = vsub.s32 0, %v41
  %v43 = vrot.slane %v38, %v42
  %v45 = vadd.f32 %v37, %v43
  %46 = vst.msk [vmem:[%s3] sm:$0xff] %vm15, %v45
  // Predicated region
  $region14: #{_lambda_.48} parent=0 // pred_check
    _
  $region15: #{_lambda_.48} parent=0 // pred_check_branch
    %48 = sbr.rel (0) target = $region17
  $region16: #{_lambda_.48} parent=0 // pred_region
    _
  $region17: #{_lambda_.48} parent=0 // pred_fallthru
    _
  // Predicated region
  $region18: #{_lambda_.48} parent=0 // pred_check
    _
  $region19: #{_lambda_.48} parent=0 // pred_check_branch
    %50 = sbr.rel (0) target = $region21
  $region20: #{_lambda_.48} parent=0 // pred_region
    _
  $region21: #{_lambda_.48} parent=0 // pred_fallthru
    _

// kernel: _lambda_.41
$region0: #{_lambda_.41}
  #allocation0 [shape = 'u32[]', space=smem, size = 0x4, offset = 0x4, fixed_abs, tag = 'smem constant byte address 0x4 - core index']
  #allocation1 [shape = 'u32[144,128]{1,0:T(1,128)}', space=vmem, size = 0x12000, scoped, tag = 'internal scratch']
  %s0 = inlined_call_operand.vmem [shape: f32[8,64], index: 0, kind: input, shape index: {}]
  %s1 = inlined_call_operand.vmem [shape: f32[1,64], index: 1, kind: input, shape index: {}]
  %s2 = inlined_call_operand.vmem [shape: f32[1,64], index: 2, kind: input, shape index: {}]
  %s3 = inlined_call_operand.vmem [shape: bf16[64,256], index: 3, kind: input, shape index: {}]
  %s4 = inlined_call_operand.vmem [shape: f32[1,256], index: 4, kind: input, shape index: {}]
  %s5 = inlined_call_operand.vmem [shape: f32[8,256], index: 5, kind: output, shape index: {}]
  %s6 = sld [smem:[#allocation0]]
  $region30: #{_lambda_.41} parent=0
    _
  %s8 = ssub.s32 1, %s6
  %s9 = scalar_select 0, %s8, %s6
  // Predicated region
  $region2: #{_lambda_.41} parent=0 // pred_check
    _
  $region3: #{_lambda_.41} parent=0 // pred_check_branch
    %11 = sbr.rel (0) target = $region5
  $region4: #{_lambda_.41} parent=0 // pred_region
    _
  $region5: #{_lambda_.41} parent=0 // pred_fallthru
    _
  // Predicated region
  $region6: #{_lambda_.41} parent=0 // pred_check
    _
  $region7: #{_lambda_.41} parent=0 // pred_check_branch
    %13 = sbr.rel (0) target = $region9
  $region8: #{_lambda_.41} parent=0 // pred_region
    _
  $region9: #{_lambda_.41} parent=0 // pred_fallthru
    _
  // Predicated region
  $region10: #{_lambda_.41} parent=0 // pred_check
    _
  $region11: #{_lambda_.41} parent=0 // pred_check_branch
    %15 = sbr.rel (0) target = $region13
  $region12: #{_lambda_.41} parent=0 // pred_region
    _
  $region13: #{_lambda_.41} parent=0 // pred_fallthru
    _
  // Predicated region
  $region14: #{_lambda_.41} parent=0 // pred_check
    _
  $region15: #{_lambda_.41} parent=0 // pred_check_branch
    %17 = sbr.rel (0) target = $region17
  $region16: #{_lambda_.41} parent=0 // pred_region
    _
  $region17: #{_lambda_.41} parent=0 // pred_fallthru
    _
  // Predicated region
  $region18: #{_lambda_.41} parent=0 // pred_check
    _
  $region19: #{_lambda_.41} parent=0 // pred_check_branch
    %19 = sbr.rel (0) target = $region21
  $region20: #{_lambda_.41} parent=0 // pred_region
    _
  $region21: #{_lambda_.41} parent=0 // pred_fallthru
    _
  %v21 = vld [vmem:[%s0] sm:$0xff]
  %vm22 = vcmask 523264
  %v23 = vsel %vm22, %v21, 0.0
  %24 = vadd.xlane.f32.xlu0 %v23
  %v25 = vpop.xlane.xlu0 %24
  %v26 = vrcp.pop 64.0
  %v27 = vmul.f32 %v25, %v26
  %v28 = vsub.f32 %v21, %v27
  %v29 = vmul.f32 %v28, %v28
  %v30 = vsel %vm22, %v29, 0.0
  %31 = vadd.xlane.f32.xlu0 %v30
  %v32 = vpop.xlane.xlu0 %31
  %v33 = vmul.f32 %v32, %v26
  %v34 = vadd.f32 %v33, 1e-05
  %v35 = vrsqrt.pop %v34
  %v36 = vmul.f32 %v28, %v35
  %v37 = vld [vmem:[%s1] sm:$0x1]
  %v39 = vlaneseq
  %v40 = vshrl.u32 %v39, 7
  %v41 = vsub.s32 0, %v40
  %v42 = vrot.slane %v37, %v41
  %v44 = vmul.f32 %v36, %v42
  %v45 = vld [vmem:[%s2] sm:$0x1]
  %v47 = vlaneseq
  %v48 = vshrl.u32 %v47, 7
  %v49 = vsub.s32 0, %v48
  %v50 = vrot.slane %v45, %v49
  %v52 = vadd.f32 %v44, %v50
  %v53 = vpack.c.bf16 %v52, %v52
  %v54 = vld [vmem:[%s3] sm:$0xff]
  %v55 = vld [vmem:[%s3 + $0x8] sm:$0xff]
  %v56 = vld [vmem:[%s3 + $0x10] sm:$0xff]
  %v57 = vld [vmem:[%s3 + $0x18] sm:$0xff]
  %v58 = vld [vmem:[%s3 + $0x20] sm:$0xff]
  %v59 = vld [vmem:[%s3 + $0x28] sm:$0xff]
  %v60 = vld [vmem:[%s3 + $0x30] sm:$0xff]
  %v61 = vld [vmem:[%s3 + $0x38] sm:$0xff]
  %v62 = vld [vmem:[%s4] sm:$0x3]
  %v64 = vlaneseq
  %v65 = vshrl.u32 %v64, 7
  %v66 = vsub.s32 0, %v65
  %v67 = vrot.slane %v62, %v66
  %v68 = vlaneseq
  %v69 = vshrl.u32 %v68, 7
  %v70 = vsub.s32 1, %v69
  %v71 = vrot.slane %v62, %v70
  %v82 = vunpack.c.l.b16 %v54
  %v83 = vunpack.c.h.b16 %v54
  %v84 = vunpack.c.l.b16 %v55
  %v85 = vunpack.c.h.b16 %v55
  %v86 = vunpack.c.l.b16 %v56
  %v87 = vunpack.c.h.b16 %v56
  %v88 = vunpack.c.l.b16 %v57
  %v89 = vunpack.c.h.b16 %v57
  %v90 = vunpack.c.l.b16 %v58
  %v91 = vunpack.c.h.b16 %v58
  %v92 = vunpack.c.l.b16 %v59
  %v93 = vunpack.c.h.b16 %v59
  %v94 = vunpack.c.l.b16 %v60
  %v95 = vunpack.c.h.b16 %v60
  %v96 = vunpack.c.l.b16 %v61
  %v97 = vunpack.c.h.b16 %v61
  %v98 = vpack.c.b16 %v84, %v82
  %v99 = vpack.c.b16 %v85, %v83
  %v100 = vpack.c.b16 %v88, %v86
  %v101 = vpack.c.b16 %v89, %v87
  %v102 = vpack.c.b16 %v92, %v90
  %v103 = vpack.c.b16 %v93, %v91
  %v104 = vpack.c.b16 %v96, %v94
  %v105 = vpack.c.b16 %v97, %v95
  %v115 = vsel %vm22, %v53, 0
  %117 = vmatprep.subr.bf16.mxu0 %v99
  %118 = vmatpush1.bf16.msra.mxu0 %v98
  %119 = vmatprep.subr.bf16.mxu0 %v101
  %120 = vmatpush1.bf16.msra.mxu0 %v100
  %121 = vmatprep.subr.bf16.mxu0 %v103
  %122 = vmatpush1.bf16.msra.mxu0 %v102
  %123 = vmatprep.subr.bf16.mxu0 %v105
  %124 = vmatpush1.bf16.msra.mxu0 %v104
  %125 = vmatprep.subr.bf16.mxu0 0
  %126 = vmatpush1.bf16.msra.mxu0 0
  %127 = vmatprep.subr.bf16.mxu0 0
  %128 = vmatpush1.bf16.msra.mxu0 0
  %129 = vmatprep.subr.bf16.mxu0 0
  %130 = vmatpush1.bf16.msra.mxu0 0
  %131 = vmatprep.subr.bf16.mxu0 0
  %132 = vmatpush1.bf16.msra.mxu0 0
  %133 = vmatprep.subr.bf16.mxu0 0
  %134 = vmatpush1.bf16.msra.mxu0 0
  %135 = vmatprep.subr.bf16.mxu0 0
  %136 = vmatpush1.bf16.msra.mxu0 0
  %137 = vmatprep.subr.bf16.mxu0 0
  %138 = vmatpush1.bf16.msra.mxu0 0
  %139 = vmatprep.subr.bf16.mxu0 0
  %140 = vmatpush1.bf16.msra.mxu0 0
  %141 = vmatprep.subr.bf16.mxu0 0
  %142 = vmatpush1.bf16.msra.mxu0 0
  %143 = vmatprep.subr.bf16.mxu0 0
  %144 = vmatpush1.bf16.msra.mxu0 0
  %145 = vmatprep.subr.bf16.mxu0 0
  %146 = vmatpush1.bf16.msra.mxu0 0
  %147 = vmatprep.subr.bf16.mxu0 0
  %148 = vmatpush1.bf16.msra.mxu0 0
  %149 = vmatprep.mubr.bf16.mxu0 0
  %150 = vmatmul.mubr.bf16.gmra.mrb[0].mxu0 %v115
  %v151 = vpop.f32.mrb[0].mxu0
  %v152 = vadd.f32 %v67, %v151
  %v153 = vpop.f32.mrb[0].mxu0
  %v154 = vadd.f32 %v71, %v153
  %v155 = vpop.f32.mrb[0].mxu0
  %v156 = vpop.f32.mrb[0].mxu0
  %157 = vdwg.mxu0
  %v158 = vmul.f32 %v152, 0.5
  %v159 = vmul.f32 %v154, 0.5
  %v160 = vmul.f32 %v152, 0.70710677
  %v161 = vmul.f32 %v154, 0.70710677
  %vm162 = vcmp.ge.f32.partialorder %v160, 0.0
  %vm163 = vcmp.ge.f32.partialorder %v161, 0.0
  %v164 = vsel %vm162, 1.0, -1.0
  %v165 = vsel %vm163, 1.0, -1.0
  %v166 = vand.u32 2147483647, %v160
  %v167 = vand.u32 2147483647, %v161
  %v168 = vmul.f32 %v166, 0.3275911
  %v169 = vmul.f32 %v167, 0.3275911
  %v170 = vadd.f32 %v168, 1.0
  %v171 = vadd.f32 %v169, 1.0
  %v172 = vrcp.pop %v170
  %v173 = vmul.f32 1.0, %v172
  %v174 = vrcp.pop %v171
  %v175 = vmul.f32 1.0, %v174
  %v176 = vmul.f32 %v173, 1.0614054
  %v177 = vmul.f32 %v175, 1.0614054
  %v178 = vadd.f32 %v176, -1.4531521
  %v179 = vadd.f32 %v177, -1.4531521
  %v180 = vmul.f32 %v178, %v173
  %v181 = vmul.f32 %v179, %v175
  %v182 = vadd.f32 %v180, 1.4214138
  %v183 = vadd.f32 %v181, 1.4214138
  %v184 = vmul.f32 %v182, %v173
  %v185 = vmul.f32 %v183, %v175
  %v186 = vadd.f32 %v184, -0.28449672
  %v187 = vadd.f32 %v185, -0.28449672
  %v188 = vmul.f32 %v186, %v173
  %v189 = vmul.f32 %v187, %v175
  %v190 = vadd.f32 %v188, 0.2548296
  %v191 = vadd.f32 %v189, 0.2548296
  %v192 = vmul.f32 %v190, %v173
  %v193 = vmul.f32 %v191, %v175
  %v194 = vsub.f32 0.0, %v166
  %v195 = vsub.f32 0.0, %v167
  %v196 = vmul.f32 %v194, %v166
  %v197 = vmul.f32 %v195, %v167
  %v198 = vmul.f32 %v196, 1.442695
  %v199 = vpow.pop %v198
  %v200 = vmul.f32 %v197, 1.442695
  %v201 = vpow.pop %v200
  %v202 = vmul.f32 %v192, %v199
  %v203 = vmul.f32 %v193, %v201
  %v204 = vsub.f32 1.0, %v202
  %v205 = vsub.f32 1.0, %v203
  %v206 = vmul.f32 %v164, %v204
  %v207 = vmul.f32 %v165, %v205
  %v208 = vadd.f32 %v206, 1.0
  %v209 = vadd.f32 %v207, 1.0
  %v210 = vmul.f32 %v158, %v208
  %v211 = vmul.f32 %v159, %v209
  %212 = vst [vmem:[%s5] sm:$0xff] %v210
  %213 = vst [vmem:[%s5 + $0x8] sm:$0xff] %v211
  // Predicated region
  $region22: #{_lambda_.41} parent=0 // pred_check
    _
  $region23: #{_lambda_.41} parent=0 // pred_check_branch
    %215 = sbr.rel (0) target = $region25
  $region24: #{_lambda_.41} parent=0 // pred_region
    _
  $region25: #{_lambda_.41} parent=0 // pred_fallthru
    _
  // Predicated region
  $region26: #{_lambda_.41} parent=0 // pred_check
    _
  $region27: #{_lambda_.41} parent=0 // pred_check_branch
    %217 = sbr.rel (0) target = $region29
  $region28: #{_lambda_.41} parent=0 // pred_region
    _
  $region29: #{_lambda_.41} parent=0 // pred_fallthru
    _

// kernel: _lambda_.49
$region0: #{_lambda_.49}
  #allocation0 [shape = 'u32[]', space=smem, size = 0x4, offset = 0x4, fixed_abs, tag = 'smem constant byte address 0x4 - core index']
  #allocation1 [shape = 'u32[144,128]{1,0:T(1,128)}', space=vmem, size = 0x12000, scoped, tag = 'internal scratch']
  %s0 = inlined_call_operand.vmem [shape: f32[2,64], index: 0, kind: input, shape index: {}]
  %s1 = inlined_call_operand.vmem [shape: bf16[64,10], index: 1, kind: input, shape index: {}]
  %s2 = inlined_call_operand.vmem [shape: f32[1,10], index: 2, kind: input, shape index: {}]
  %s3 = inlined_call_operand.hbm [shape: f32[2,10], index: 3, kind: output, shape index: {}]
  %s4 = sld [smem:[#allocation0]]
  $region22: #{_lambda_.49} parent=0
    _
  %s6 = ssub.s32 1, %s4
  %s7 = scalar_select 0, %s6, %s4
  $region1: #{_lambda_.49} parent=0
    #allocation2 [shape = 'u8[1024]{0}', space=vmem, size = 0x400, scoped, tag = 'output window, operand 0, single buffered']
    #allocation3 [shape = 's32[1]{0}', space=sflag, size = 0x4, scoped, tag = 'scoped memory for _lambda_.49']
    %8 = vsyncpa [#allocation3], 0
    // Predicated region
    $region2: #{_lambda_.49} parent=1 // pred_check
      _
    $region3: #{_lambda_.49} parent=1 // pred_check_branch
      %10 = sbr.rel (0) target = $region5
    $region4: #{_lambda_.49} parent=1 // pred_region
      _
    $region5: #{_lambda_.49} parent=1 // pred_fallthru
      _
    // Predicated region
    $region6: #{_lambda_.49} parent=1 // pred_check
      _
    $region7: #{_lambda_.49} parent=1 // pred_check_branch
      %12 = sbr.rel (0) target = $region9
    $region8: #{_lambda_.49} parent=1 // pred_region
      _
    $region9: #{_lambda_.49} parent=1 // pred_fallthru
      _
    // Predicated region
    $region10: #{_lambda_.49} parent=1 // pred_check
      _
    $region11: #{_lambda_.49} parent=1 // pred_check_branch
      %14 = sbr.rel (0) target = $region13
    $region12: #{_lambda_.49} parent=1 // pred_region
      _
    $region13: #{_lambda_.49} parent=1 // pred_fallthru
      _
    %v16 = vld [vmem:[%s0] sm:$0x3]
    %v17 = vpack.c.bf16 %v16, %v16
    %v18 = vld [vmem:[%s1] sm:$0xf]
    %v19 = vld [vmem:[%s1 + $0x4] sm:$0xf]
    %v20 = vld [vmem:[%s1 + $0x8] sm:$0xf]
    %v21 = vld [vmem:[%s1 + $0xc] sm:$0xf]
    %v22 = vld [vmem:[%s1 + $0x10] sm:$0xf]
    %v23 = vld [vmem:[%s1 + $0x14] sm:$0xf]
    %v24 = vld [vmem:[%s1 + $0x18] sm:$0xf]
    %v25 = vld [vmem:[%s1 + $0x1c] sm:$0xf]
    %v26 = vld [vmem:[%s2] sm:$0x1]
    %v28 = vlaneseq
    %v29 = vshrl.u32 %v28, 7
    %v30 = vsub.s32 0, %v29
    %v31 = vrot.slane %v26, %v30
    %v41 = vunpack.c.l.b16 %v18
    %v42 = vunpack.c.l.b16 %v19
    %v43 = vunpack.c.l.b16 %v20
    %v44 = vunpack.c.l.b16 %v21
    %v45 = vunpack.c.l.b16 %v22
    %v46 = vunpack.c.l.b16 %v23
    %v47 = vunpack.c.l.b16 %v24
    %v48 = vunpack.c.l.b16 %v25
    %v49 = vpack.c.b16 %v42, %v41
    %v50 = vpack.c.b16 %v44, %v43
    %v51 = vpack.c.b16 %v46, %v45
    %v52 = vpack.c.b16 %v48, %v47
    %vm57 = vcmask 523264
    %v59 = vsel %vm57, %v17, 0
    %61 = vmatprep.subr.bf16.mxu0 0
    %62 = vmatpush1.bf16.msra.mxu0 %v49
    %63 = vmatprep.subr.bf16.mxu0 0
    %64 = vmatpush1.bf16.msra.mxu0 %v50
    %65 = vmatprep.subr.bf16.mxu0 0
    %66 = vmatpush1.bf16.msra.mxu0 %v51
    %67 = vmatprep.subr.bf16.mxu0 0
    %68 = vmatpush1.bf16.msra.mxu0 %v52
    %69 = vmatprep.subr.bf16.mxu0 0
    %70 = vmatpush1.bf16.msra.mxu0 0
    %71 = vmatprep.subr.bf16.mxu0 0
    %72 = vmatpush1.bf16.msra.mxu0 0
    %73 = vmatprep.subr.bf16.mxu0 0
    %74 = vmatpush1.bf16.msra.mxu0 0
    %75 = vmatprep.subr.bf16.mxu0 0
    %76 = vmatpush1.bf16.msra.mxu0 0
    %77 = vmatprep.subr.bf16.mxu0 0
    %78 = vmatpush1.bf16.msra.mxu0 0
    %79 = vmatprep.subr.bf16.mxu0 0
    %80 = vmatpush1.bf16.msra.mxu0 0
    %81 = vmatprep.subr.bf16.mxu0 0
    %82 = vmatpush1.bf16.msra.mxu0 0
    %83 = vmatprep.subr.bf16.mxu0 0
    %84 = vmatpush1.bf16.msra.mxu0 0
    %85 = vmatprep.subr.bf16.mxu0 0
    %86 = vmatpush1.bf16.msra.mxu0 0
    %87 = vmatprep.subr.bf16.mxu0 0
    %88 = vmatpush1.bf16.msra.mxu0 0
    %89 = vmatprep.subr.bf16.mxu0 0
    %90 = vmatpush1.bf16.msra.mxu0 0
    %91 = vmatprep.subr.bf16.mxu0 0
    %92 = vmatpush1.bf16.msra.mxu0 0
    %93 = vmatprep.mubr.bf16.mxu0 0
    %94 = vmatmul.mubr.bf16.gmra.mrb[0].mxu0 %v59
    %v95 = vpop.f32.mrb[0].mxu0
    %v96 = vadd.f32 %v31, %v95
    %v97 = vpop.f32.mrb[0].mxu0
    %v98 = vpop.f32.mrb[0].mxu0
    %v99 = vpop.f32.mrb[0].mxu0
    %100 = vdwg.mxu0
    %vm101 = vcmask 74752
    %102 = vst.msk [vmem:[#allocation2] sm:$0x3] %vm101, %v96
    // Predicated region
    $region14: #{_lambda_.49} parent=1 // pred_check
      _
    $region15: #{_lambda_.49} parent=1 // pred_check_branch
      %104 = sbr.rel (0) target = $region17
    $region16: #{_lambda_.49} parent=1 // pred_region
      %s106 = ssub.s32 32, 32
      %107 = vsyncadd [#allocation3], %s106
      %s109 = sshll.u32 [#allocation2], 4
      %s110 = int_to_ptr.vmem [resolvable:$true] %s109
      %112 = dma.vmem_to_hbm [thread:$0]  %s110, 32, %s3, [#allocation3]
    $region17: #{_lambda_.49} parent=1 // pred_fallthru
      _
    // Predicated region
    $region18: #{_lambda_.49} parent=1 // pred_check
      _
    $region19: #{_lambda_.49} parent=1 // pred_check_branch
      %114 = sbr.rel (0) target = $region21
    $region20: #{_lambda_.49} parent=1 // pred_region
      %115 = dma.done [#allocation3], 32
    $region21: #{_lambda_.49} parent=1 // pred_fallthru
      _
    %116 = vsyncpa [#allocation3], 1

</llo_original>
